<compile_context>
chip_gen: v7x
topology: tpu7x:2x2x1
jax: 0.10.0
libtpu: 0.0.40
codegen_flags: <defaults>
</compile_context>

<pallas_src>
import jax
import jax.numpy as jnp
from jax.experimental import pallas as pl
from jax.experimental.pallas import tpu as pltpu

IN_DIM = 28 * 28          # 784
K_PAD = 1024              # 4 * 256: full MXU K passes on v6e / v7x
H1, H2, H3, OUT = 1024, 512, 256, 1


def _round_up(n, m):
    return ((n + m - 1) // m) * m


def _disc_kernel(x_ref,
                 w1_ref, b1_ref,
                 w2_ref, b2_ref,
                 w3_ref, b3_ref,
                 w4_ref, b4_ref,
                 out_ref,
                 xpad_ref):
    # Build the lane-aligned bf16 input tile in VMEM: cast f32 -> bf16 and
    # zero-pad K from 784 to 1024.  (Zero every step: with a megacore batch
    # split the second core never sees program_id == 0, so a one-time init
    # would leave its pad columns uninitialized.)
    xpad_ref[...] = jnp.zeros_like(xpad_ref)
    xpad_ref[:, :IN_DIM] = x_ref[...].astype(jnp.bfloat16)

    # Layer 1: (TB, 1024) bf16 @ (1024, 1024) bf16 -> f32 acc, +b (f32), ReLU
    h = jnp.dot(xpad_ref[...], w1_ref[...], preferred_element_type=jnp.float32)
    h = jnp.maximum(h + b1_ref[...], 0.0).astype(jnp.bfloat16)

    # Layer 2: (TB, 1024) @ (1024, 512)
    h = jnp.dot(h, w2_ref[...], preferred_element_type=jnp.float32)
    h = jnp.maximum(h + b2_ref[...], 0.0).astype(jnp.bfloat16)

    # Layer 3: (TB, 512) @ (512, 256)  (keep f32 for the final reduction)
    h = jnp.dot(h, w3_ref[...], preferred_element_type=jnp.float32)
    h = jnp.maximum(h + b3_ref[...], 0.0)

    # Layer 4: Linear(256, 1) as a lane reduction instead of an N=1 MXU matmul.
    #   logits = sum(h * w4_row, axis=-1) + b4
    logits = jnp.sum(h * w4_ref[...], axis=-1, keepdims=True) + b4_ref[...]

    # Sigmoid: exp and reciprocal both run on the EUP (free slot).
    out_ref[...] = pl.reciprocal(1.0 + jnp.exp(-logits), approx=True).astype(out_ref.dtype)


def prepare_params(params, dtype=jnp.bfloat16):
    """One-time conversion of PyTorch-convention params into kernel form:
    bf16 matmul weights (layer-1 K padded 784->1024), f32 biases, and the
    layer-4 weight stored as an f32 (1, 256) row."""
    (w1, b1), (w2, b2), (w3, b3), (w4, b4) = params
    w1p = jnp.pad(w1, ((0, K_PAD - IN_DIM), (0, 0))).astype(dtype)
    return (w1p, b1.astype(jnp.float32),
            w2.astype(dtype), b2.astype(jnp.float32),
            w3.astype(dtype), b3.astype(jnp.float32),
            w4.T.astype(jnp.float32),           # (256,1) -> (1,256), tiny, keep f32
            b4.astype(jnp.float32))             # (1,1)


def discriminator_forward(x, kparams, *, max_batch_tile=512):
    """x: (B, 1, 28, 28) float32 (NCHW, like PyTorch). Returns (B, 1) float32."""
    B = x.shape[0]
    w1, b1, w2, b2, w3, b3, w4r, b4 = kparams

    # Batch tile: fill the MXU M dimension when the batch is big enough,
    # otherwise round up to a bf16 sublane-pair multiple (16).
    TB = min(max_batch_tile, _round_up(max(B, 1), 16))
    num_tiles = pl.cdiv(B, TB)
    B_pad = num_tiles * TB

    # Free metadata reshape (same as torch x.view(B, 784)); stays f32 — the
    # bf16 cast + K pad happen inside the kernel.  Only pad the batch dim when
    # it is ragged w.r.t. the tile.
    x2d = x.reshape(B, IN_DIM)
    if B_pad != B:
        x2d = jnp.pad(x2d, ((0, B_pad - B), (0, 0)))

    const = lambda shape: pl.BlockSpec(shape, lambda i: (0, 0))

    flops = 2 * B_pad * (K_PAD * H1 + H1 * H2 + H2 * H3 + H3 * OUT)
    bytes_accessed = (B_pad * IN_DIM * 4                     # x (f32)
                      + (w1.size + w2.size + w3.size) * 2    # bf16 weights
                      + (b1.size + b2.size + b3.size + w4r.size + b4.size) * 4
                      + B_pad * OUT * 4)                     # output

    out = pl.pallas_call(
        _disc_kernel,
        out_shape=jax.ShapeDtypeStruct((B_pad, OUT), jnp.float32),
        grid_spec=pltpu.PrefetchScalarGridSpec(
            num_scalar_prefetch=0,
            grid=(num_tiles,),
            in_specs=[
                pl.BlockSpec((TB, IN_DIM), lambda i: (i, 0)),  # x tile moves with grid
                const((K_PAD, H1)), const((1, H1)),            # weights/biases resident
                const((H1, H2)), const((1, H2)),
                const((H2, H3)), const((1, H3)),
                const((1, H3)), const((1, OUT)),
            ],
            out_specs=pl.BlockSpec((TB, OUT), lambda i: (i, 0)),
            scratch_shapes=[pltpu.VMEM((TB, K_PAD), jnp.bfloat16)],  # padded bf16 x tile
        ),
        compiler_params=pltpu.CompilerParams(
            # Megacore split over batch tiles only pays off with >= 2 tiles;
            # otherwise it just duplicates the weight DMA into both cores.
            dimension_semantics=("parallel",) if num_tiles >= 2 else ("arbitrary",),
            vmem_limit_bytes=48 << 20,          # < 64 MiB physical VMEM on v7x
        ),
        cost_estimate=pl.CostEstimate(
            flops=flops,
            transcendentals=B_pad,
            bytes_accessed=bytes_accessed,
        ),
    )(x2d, w1, b1, w2, b2, w3, b3, w4r, b4)

    return out[:B]


def init_params(key):
    """Deterministic init mimicking nn.Linear's uniform(-1/sqrt(fan_in), +), f32,
    (in_features, out_features) layout."""
    dims = [(IN_DIM, H1), (H1, H2), (H2, H3), (H3, OUT)]
    params = []
    for (fan_in, fan_out) in dims:
        key, kw, kb = jax.random.split(key, 3)
        bound = 1.0 / jnp.sqrt(fan_in)
        w = jax.random.uniform(kw, (fan_in, fan_out), jnp.float32, -bound, bound)
        b = jax.random.uniform(kb, (1, fan_out), jnp.float32, -bound, bound)
        params.append((w, b))
    return params


def reference_forward(x, params):
    """Pure-JAX f32 reference for sanity checking."""
    h = x.reshape(x.shape[0], IN_DIM)
    for i, (w, b) in enumerate(params):
        h = h @ w + b
        if i < 3:
            h = jnp.maximum(h, 0.0)
    return jax.nn.sigmoid(h)


if __name__ == "__main__":
    key = jax.random.PRNGKey(0)
    kx, kp = jax.random.split(key)

    B = 4
    x = jax.random.normal(kx, (B, 1, 28, 28), jnp.float32)   # NCHW like PyTorch
    params = init_params(kp)
    kparams = prepare_params(params)                          # one-time bf16 / padded form

    out = discriminator_forward(x, kparams)
    out = jax.block_until_ready(out)

    ref = reference_forward(x, params)
    assert out.shape == (B, 1), out.shape
    # bf16 weights/activations vs. f32 reference: loose but meaningful tolerance.
    assert jnp.allclose(out, ref, atol=2e-2, rtol=2e-2), (out, ref)

    print("KERNEL_OK")
</pallas_src>

<mosaic_0001>
module attributes {stable_mosaic.version = 11 : i64} {
  func.func @_disc_kernel(%arg0: i32, %arg1: memref<16x784xf32, #tpu.memory_space<vmem>>, %arg2: memref<1024x1024xbf16, #tpu.memory_space<vmem>>, %arg3: memref<1x1024xf32, #tpu.memory_space<vmem>>, %arg4: memref<1024x512xbf16, #tpu.memory_space<vmem>>, %arg5: memref<1x512xf32, #tpu.memory_space<vmem>>, %arg6: memref<512x256xbf16, #tpu.memory_space<vmem>>, %arg7: memref<1x256xf32, #tpu.memory_space<vmem>>, %arg8: memref<1x256xf32, #tpu.memory_space<vmem>>, %arg9: memref<1x1xf32, #tpu.memory_space<vmem>>, %arg10: memref<16x1xf32, #tpu.memory_space<vmem>>, %arg11: memref<16x1024xbf16, #tpu.memory_space<vmem>>) attributes {dimension_semantics = [#tpu.dimension_semantics<arbitrary>], iteration_bounds = array<i64: 1>, scalar_prefetch = 0 : i64, scratch_operands = 1 : i64, tpu.core_type = #tpu.core_type<tc>, window_params = [{transform_indices = @transform_0, window_bounds = array<i64: 16, 784>}, {pipeline_mode = #tpu.pipeline_mode<synchronous>, transform_indices = @transform_1, window_bounds = array<i64: 1024, 1024>}, {pipeline_mode = #tpu.pipeline_mode<synchronous>, transform_indices = @transform_2, window_bounds = array<i64: 1, 1024>}, {pipeline_mode = #tpu.pipeline_mode<synchronous>, transform_indices = @transform_3, window_bounds = array<i64: 1024, 512>}, {pipeline_mode = #tpu.pipeline_mode<synchronous>, transform_indices = @transform_4, window_bounds = array<i64: 1, 512>}, {pipeline_mode = #tpu.pipeline_mode<synchronous>, transform_indices = @transform_5, window_bounds = array<i64: 512, 256>}, {pipeline_mode = #tpu.pipeline_mode<synchronous>, transform_indices = @transform_6, window_bounds = array<i64: 1, 256>}, {pipeline_mode = #tpu.pipeline_mode<synchronous>, transform_indices = @transform_7, window_bounds = array<i64: 1, 256>}, {pipeline_mode = #tpu.pipeline_mode<synchronous>, transform_indices = @transform_8, window_bounds = array<i64: 1, 1>}, {transform_indices = @transform_9, window_bounds = array<i64: 16, 1>}]} {
    %cst = arith.constant 0.000000e+00 : bf16
    %0 = vector.broadcast %cst : bf16 to vector<16x1024xbf16>
    %c0 = arith.constant 0 : index
    %c0_0 = arith.constant 0 : index
    %1 = vector.load %arg11[%c0, %c0_0] : memref<16x1024xbf16, #tpu.memory_space<vmem>>, vector<16x1024xbf16>
    tpu.vector_store %arg11[%c0, %c0_0], %0 {strides = array<i32>} : memref<16x1024xbf16, #tpu.memory_space<vmem>>, vector<16x1024xbf16>,
    %c0_1 = arith.constant 0 : index
    %c0_2 = arith.constant 0 : index
    %2 = vector.load %arg1[%c0_1, %c0_2] : memref<16x784xf32, #tpu.memory_space<vmem>>, vector<16x784xf32>
    %3 = arith.truncf %2 : vector<16x784xf32> to vector<16x784xbf16>
    %c0_3 = arith.constant 0 : index
    %c0_4 = arith.constant 0 : index
    %4 = vector.load %arg11[%c0_3, %c0_4] : memref<16x1024xbf16, #tpu.memory_space<vmem>>, vector<16x784xbf16>
    tpu.vector_store %arg11[%c0_3, %c0_4], %3 {strides = array<i32>} : memref<16x1024xbf16, #tpu.memory_space<vmem>>, vector<16x784xbf16>,
    %c0_5 = arith.constant 0 : index
    %c0_6 = arith.constant 0 : index
    %5 = vector.load %arg11[%c0_5, %c0_6] : memref<16x1024xbf16, #tpu.memory_space<vmem>>, vector<16x1024xbf16>
    %c0_7 = arith.constant 0 : index
    %c0_8 = arith.constant 0 : index
    %6 = vector.load %arg2[%c0_7, %c0_8] : memref<1024x1024xbf16, #tpu.memory_space<vmem>>, vector<1024x1024xbf16>
    %cst_9 = arith.constant dense<0.000000e+00> : vector<16x1024xf32>
    %7 = tpu.matmul %5, %6, %cst_9 {dimension_numbers = #tpu.dot_dimension_numbers<[1], [0], [0], [1], [0, 0, 1, 1], [], []>} : vector<16x1024xbf16>, vector<1024x1024xbf16>, vector<16x1024xf32> -> vector<16x1024xf32>
    %c0_10 = arith.constant 0 : index
    %c0_11 = arith.constant 0 : index
    %8 = vector.load %arg3[%c0_10, %c0_11] : memref<1x1024xf32, #tpu.memory_space<vmem>>, vector<1x1024xf32>
    %9 = vector.broadcast %8 : vector<1x1024xf32> to vector<16x1024xf32>
    %10 = arith.addf %7, %9 : vector<16x1024xf32>
    %cst_12 = arith.constant 0.000000e+00 : f32
    %11 = vector.broadcast %cst_12 : f32 to vector<16x1024xf32>
    %12 = arith.maximumf %10, %11 : vector<16x1024xf32>
    %13 = arith.truncf %12 : vector<16x1024xf32> to vector<16x1024xbf16>
    %c0_13 = arith.constant 0 : index
    %c0_14 = arith.constant 0 : index
    %14 = vector.load %arg4[%c0_13, %c0_14] : memref<1024x512xbf16, #tpu.memory_space<vmem>>, vector<1024x512xbf16>
    %cst_15 = arith.constant dense<0.000000e+00> : vector<16x512xf32>
    %15 = tpu.matmul %13, %14, %cst_15 {dimension_numbers = #tpu.dot_dimension_numbers<[1], [0], [0], [1], [0, 0, 1, 1], [], []>} : vector<16x1024xbf16>, vector<1024x512xbf16>, vector<16x512xf32> -> vector<16x512xf32>
    %c0_16 = arith.constant 0 : index
    %c0_17 = arith.constant 0 : index
    %16 = vector.load %arg5[%c0_16, %c0_17] : memref<1x512xf32, #tpu.memory_space<vmem>>, vector<1x512xf32>
    %17 = vector.broadcast %16 : vector<1x512xf32> to vector<16x512xf32>
    %18 = arith.addf %15, %17 : vector<16x512xf32>
    %cst_18 = arith.constant 0.000000e+00 : f32
    %19 = vector.broadcast %cst_18 : f32 to vector<16x512xf32>
    %20 = arith.maximumf %18, %19 : vector<16x512xf32>
    %21 = arith.truncf %20 : vector<16x512xf32> to vector<16x512xbf16>
    %c0_19 = arith.constant 0 : index
    %c0_20 = arith.constant 0 : index
    %22 = vector.load %arg6[%c0_19, %c0_20] : memref<512x256xbf16, #tpu.memory_space<vmem>>, vector<512x256xbf16>
    %cst_21 = arith.constant dense<0.000000e+00> : vector<16x256xf32>
    %23 = tpu.matmul %21, %22, %cst_21 {dimension_numbers = #tpu.dot_dimension_numbers<[1], [0], [0], [1], [0, 0, 1, 1], [], []>} : vector<16x512xbf16>, vector<512x256xbf16>, vector<16x256xf32> -> vector<16x256xf32>
    %c0_22 = arith.constant 0 : index
    %c0_23 = arith.constant 0 : index
    %24 = vector.load %arg7[%c0_22, %c0_23] : memref<1x256xf32, #tpu.memory_space<vmem>>, vector<1x256xf32>
    %25 = vector.broadcast %24 : vector<1x256xf32> to vector<16x256xf32>
    %26 = arith.addf %23, %25 : vector<16x256xf32>
    %cst_24 = arith.constant 0.000000e+00 : f32
    %27 = vector.broadcast %cst_24 : f32 to vector<16x256xf32>
    %28 = arith.maximumf %26, %27 : vector<16x256xf32>
    %c0_25 = arith.constant 0 : index
    %c0_26 = arith.constant 0 : index
    %29 = vector.load %arg8[%c0_25, %c0_26] : memref<1x256xf32, #tpu.memory_space<vmem>>, vector<1x256xf32>
    %30 = vector.broadcast %29 : vector<1x256xf32> to vector<16x256xf32>
    %31 = arith.mulf %28, %30 : vector<16x256xf32>
    %cst_27 = arith.constant dense<0.000000e+00> : vector<16xf32>
    %32 = vector.multi_reduction <add>, %31, %cst_27 [1] : vector<16x256xf32> to vector<16xf32>
    %33 = vector.shape_cast %32 : vector<16xf32> to vector<16x1xf32>
    %c0_28 = arith.constant 0 : index
    %c0_29 = arith.constant 0 : index
    %34 = vector.load %arg9[%c0_28, %c0_29] : memref<1x1xf32, #tpu.memory_space<vmem>>, vector<1x1xf32>
    %35 = vector.broadcast %34 : vector<1x1xf32> to vector<16x1xf32>
    %36 = arith.addf %33, %35 : vector<16x1xf32>
    %cst_30 = arith.constant 0.000000e+00 : f32
    %37 = vector.broadcast %cst_30 : f32 to vector<16x1xf32>
    %38 = arith.subf %37, %36 : vector<16x1xf32>
    %39 = math.exp %38 : vector<16x1xf32>
    %cst_31 = arith.constant 1.000000e+00 : f32
    %40 = vector.broadcast %cst_31 : f32 to vector<16x1xf32>
    %41 = arith.addf %40, %39 : vector<16x1xf32>
    %42 = tpu.reciprocal %41 {approx = true} : vector<16x1xf32> -> vector<16x1xf32>
    %c0_32 = arith.constant 0 : index
    %c0_33 = arith.constant 0 : index
    %43 = vector.load %arg10[%c0_32, %c0_33] : memref<16x1xf32, #tpu.memory_space<vmem>>, vector<16x1xf32>
    tpu.vector_store %arg10[%c0_32, %c0_33], %42 {strides = array<i32>} : memref<16x1xf32, #tpu.memory_space<vmem>>, vector<16x1xf32>,
    return
  }
  func.func @transform_0(%arg0: i32) -> (i32, i32) {
    %c0_i32 = arith.constant 0 : i32
    %c0_i32_0 = arith.constant 0 : i32
    return %arg0, %c0_i32 : i32, i32
  }
  func.func @transform_1(%arg0: i32) -> (i32, i32) {
    %c0_i32 = arith.constant 0 : i32
    %c0_i32_0 = arith.constant 0 : i32
    %c0_i32_1 = arith.constant 0 : i32
    return %c0_i32, %c0_i32_0 : i32, i32
  }
  func.func @transform_2(%arg0: i32) -> (i32, i32) {
    %c0_i32 = arith.constant 0 : i32
    %c0_i32_0 = arith.constant 0 : i32
    %c0_i32_1 = arith.constant 0 : i32
    return %c0_i32, %c0_i32_0 : i32, i32
  }
  func.func @transform_3(%arg0: i32) -> (i32, i32) {
    %c0_i32 = arith.constant 0 : i32
    %c0_i32_0 = arith.constant 0 : i32
    %c0_i32_1 = arith.constant 0 : i32
    return %c0_i32, %c0_i32_0 : i32, i32
  }
  func.func @transform_4(%arg0: i32) -> (i32, i32) {
    %c0_i32 = arith.constant 0 : i32
    %c0_i32_0 = arith.constant 0 : i32
    %c0_i32_1 = arith.constant 0 : i32
    return %c0_i32, %c0_i32_0 : i32, i32
  }
  func.func @transform_5(%arg0: i32) -> (i32, i32) {
    %c0_i32 = arith.constant 0 : i32
    %c0_i32_0 = arith.constant 0 : i32
    %c0_i32_1 = arith.constant 0 : i32
    return %c0_i32, %c0_i32_0 : i32, i32
  }
  func.func @transform_6(%arg0: i32) -> (i32, i32) {
    %c0_i32 = arith.constant 0 : i32
    %c0_i32_0 = arith.constant 0 : i32
    %c0_i32_1 = arith.constant 0 : i32
    return %c0_i32, %c0_i32_0 : i32, i32
  }
  func.func @transform_7(%arg0: i32) -> (i32, i32) {
    %c0_i32 = arith.constant 0 : i32
    %c0_i32_0 = arith.constant 0 : i32
    %c0_i32_1 = arith.constant 0 : i32
    return %c0_i32, %c0_i32_0 : i32, i32
  }
  func.func @transform_8(%arg0: i32) -> (i32, i32) {
    %c0_i32 = arith.constant 0 : i32
    %c0_i32_0 = arith.constant 0 : i32
    %c0_i32_1 = arith.constant 0 : i32
    return %c0_i32, %c0_i32_0 : i32, i32
  }
  func.func @transform_9(%arg0: i32) -> (i32, i32) {
    %c0_i32 = arith.constant 0 : i32
    %c0_i32_0 = arith.constant 0 : i32
    return %arg0, %c0_i32 : i32, i32
  }
}

</mosaic_0001>

<llo_original>
// kernel: tpu_custom_call.1
$region0: #{tpu_custom_call.1}
  #allocation0 [shape = 'u32[]', space=smem, size = 0x4, offset = 0x4, fixed_abs, tag = 'smem constant byte address 0x4 - core index']
  #allocation1 [shape = 'u32[144,128]{1,0:T(1,128)}', space=vmem, size = 0x12000, scoped, tag = 'internal scratch']
  #allocation2 [shape = 'bf16[16,1024]{1,0:T(16,128)(2,1)}', space=vmem, size = 0x8000, scoped, tag = 'scratch operand']
  #allocation3 [shape = 'f32[1,1]{1,0:T(1,128)S(1)}', space=vmem, size = 0x200, scoped, tag = 'scoped memory for tpu_custom_call.1']
  %s0 = inlined_call_operand.hbm [shape: f32[16,784], index: 0, kind: input, shape index: {}]
  %s1 = inlined_call_operand.hbm [shape: bf16[1024,1024], index: 1, kind: input, shape index: {}]
  %s2 = inlined_call_operand.hbm [shape: f32[1,1024], index: 2, kind: input, shape index: {}]
  %s3 = inlined_call_operand.hbm [shape: bf16[1024,512], index: 3, kind: input, shape index: {}]
  %s4 = inlined_call_operand.hbm [shape: f32[1,512], index: 4, kind: input, shape index: {}]
  %s5 = inlined_call_operand.hbm [shape: bf16[512,256], index: 5, kind: input, shape index: {}]
  %s6 = inlined_call_operand.hbm [shape: f32[1,256], index: 6, kind: input, shape index: {}]
  %s7 = inlined_call_operand.hbm [shape: f32[1,256], index: 7, kind: input, shape index: {}]
  %s8 = inlined_call_operand.<no memory space> [shape: f32[1,1], index: 8, kind: input, shape index: {}]
  %s9 = inlined_call_operand.vmem [shape: f32[16,1], index: 9, kind: output, shape index: {}]
  %s10 = sld [smem:[#allocation0]]
  $region78: #{tpu_custom_call.1} parent=0
    _
  %s12 = ssub.s32 1, %s10
  %s13 = scalar_select 0, %s12, %s10
  %v14 = vstv %s8
  %15 = vst [vmem:[#allocation3] sm:$0x1] %v14
  $region1: #{tpu_custom_call.1} parent=0
    #allocation4 [shape = 'u8[57344]{0}', space=vmem, size = 0xe000, scoped, tag = 'input window, operand 0, single buffered']
    #allocation5 [shape = 's32[1]{0}', space=sflag, size = 0x4, scoped, tag = 'scoped memory for tpu_custom_call.1']
    #allocation6 [shape = 'u8[2097152]{0}', space=vmem, size = 0x200000, scoped, tag = 'input window, operand 1, single buffered']
    #allocation7 [shape = 's32[1]{0}', space=sflag, size = 0x4, scoped, tag = 'scoped memory for tpu_custom_call.1']
    #allocation8 [shape = 'u8[4096]{0}', space=vmem, size = 0x1000, scoped, tag = 'input window, operand 2, single buffered']
    #allocation9 [shape = 'u8[1048576]{0}', space=vmem, size = 0x100000, scoped, tag = 'input window, operand 3, single buffered']
    #allocation10 [shape = 's32[1]{0}', space=sflag, size = 0x4, scoped, tag = 'scoped memory for tpu_custom_call.1']
    #allocation11 [shape = 'u8[2048]{0}', space=vmem, size = 0x800, scoped, tag = 'input window, operand 4, single buffered']
    #allocation12 [shape = 'u8[262144]{0}', space=vmem, size = 0x40000, scoped, tag = 'input window, operand 5, single buffered']
    #allocation13 [shape = 's32[1]{0}', space=sflag, size = 0x4, scoped, tag = 'scoped memory for tpu_custom_call.1']
    #allocation14 [shape = 'u8[1024]{0}', space=vmem, size = 0x400, scoped, tag = 'input window, operand 6, single buffered']
    #allocation15 [shape = 'u8[1024]{0}', space=vmem, size = 0x400, scoped, tag = 'input window, operand 7, single buffered']
    #allocation16 [shape = 's32[1]{0}', space=sflag, size = 0x4, scoped, tag = 'scoped memory for tpu_custom_call.1']
    %16 = vsyncpa [#allocation5], 0
    %17 = vsyncpa [#allocation7], 0
    %18 = vsyncpa [#allocation10], 0
    %19 = vsyncpa [#allocation13], 0
    %20 = vsyncpa [#allocation16], 0
    // Predicated region
    $region2: #{tpu_custom_call.1} parent=1 // pred_check
      _
    $region3: #{tpu_custom_call.1} parent=1 // pred_check_branch
      %22 = sbr.rel (0) target = $region5
    $region4: #{tpu_custom_call.1} parent=1 // pred_region
      %s24 = ssub.s32 1792, 1792
      %25 = vsyncadd [#allocation5], %s24
      %s26 = sshll.u32 [#allocation4], 4
      %s27 = int_to_ptr.vmem [resolvable:$true] %s26
      %32 = dma.hbm_to_vmem [thread:$0]  %s0, 1792, %s27, [#allocation5], 896, 896, 56
    $region5: #{tpu_custom_call.1} parent=1 // pred_fallthru
      _
    // Predicated region
    $region6: #{tpu_custom_call.1} parent=1 // pred_check
      _
    $region7: #{tpu_custom_call.1} parent=1 // pred_check_branch
      %34 = sbr.rel (0) target = $region9
    $region8: #{tpu_custom_call.1} parent=1 // pred_region
      %s36 = ssub.s32 65536, 65536
      %37 = vsyncadd [#allocation7], %s36
      %s38 = sshll.u32 [#allocation6], 4
      %s39 = int_to_ptr.vmem [resolvable:$true] %s38
      %44 = dma.hbm_to_vmem [thread:$0]  %s1, 65536, %s39, [#allocation7], 512, 512, 32
    $region9: #{tpu_custom_call.1} parent=1 // pred_fallthru
      _
    // Predicated region
    $region10: #{tpu_custom_call.1} parent=1 // pred_check
      _
    $region11: #{tpu_custom_call.1} parent=1 // pred_check_branch
      %46 = sbr.rel (0) target = $region13
    $region12: #{tpu_custom_call.1} parent=1 // pred_region
      %s48 = ssub.s32 128, 128
      %49 = vsyncadd [#allocation7], %s48
      %s51 = sshll.u32 [#allocation8], 4
      %s52 = int_to_ptr.vmem [resolvable:$true] %s51
      %54 = dma.hbm_to_vmem [thread:$0]  %s2, 128, %s52, [#allocation7]
    $region13: #{tpu_custom_call.1} parent=1 // pred_fallthru
      _
    // Predicated region
    $region14: #{tpu_custom_call.1} parent=1 // pred_check
      _
    $region15: #{tpu_custom_call.1} parent=1 // pred_check_branch
      %56 = sbr.rel (0) target = $region17
    $region16: #{tpu_custom_call.1} parent=1 // pred_region
      %s58 = ssub.s32 32768, 32768
      %59 = vsyncadd [#allocation10], %s58
      %s60 = sshll.u32 [#allocation9], 4
      %s61 = int_to_ptr.vmem [resolvable:$true] %s60
      %66 = dma.hbm_to_vmem [thread:$0]  %s3, 32768, %s61, [#allocation10], 256, 256, 16
    $region17: #{tpu_custom_call.1} parent=1 // pred_fallthru
      _
    // Predicated region
    $region18: #{tpu_custom_call.1} parent=1 // pred_check
      _
    $region19: #{tpu_custom_call.1} parent=1 // pred_check_branch
      %68 = sbr.rel (0) target = $region21
    $region20: #{tpu_custom_call.1} parent=1 // pred_region
      %s70 = ssub.s32 64, 64
      %71 = vsyncadd [#allocation10], %s70
      %s73 = sshll.u32 [#allocation11], 4
      %s74 = int_to_ptr.vmem [resolvable:$true] %s73
      %76 = dma.hbm_to_vmem [thread:$0]  %s4, 64, %s74, [#allocation10]
    $region21: #{tpu_custom_call.1} parent=1 // pred_fallthru
      _
    // Predicated region
    $region22: #{tpu_custom_call.1} parent=1 // pred_check
      _
    $region23: #{tpu_custom_call.1} parent=1 // pred_check_branch
      %78 = sbr.rel (0) target = $region25
    $region24: #{tpu_custom_call.1} parent=1 // pred_region
      %s80 = ssub.s32 8192, 8192
      %81 = vsyncadd [#allocation13], %s80
      %s82 = sshll.u32 [#allocation12], 4
      %s83 = int_to_ptr.vmem [resolvable:$true] %s82
      %88 = dma.hbm_to_vmem [thread:$0]  %s5, 8192, %s83, [#allocation13], 128, 128, 8
    $region25: #{tpu_custom_call.1} parent=1 // pred_fallthru
      _
    // Predicated region
    $region26: #{tpu_custom_call.1} parent=1 // pred_check
      _
    $region27: #{tpu_custom_call.1} parent=1 // pred_check_branch
      %90 = sbr.rel (0) target = $region29
    $region28: #{tpu_custom_call.1} parent=1 // pred_region
      %s92 = ssub.s32 32, 32
      %93 = vsyncadd [#allocation13], %s92
      %s95 = sshll.u32 [#allocation14], 4
      %s96 = int_to_ptr.vmem [resolvable:$true] %s95
      %98 = dma.hbm_to_vmem [thread:$0]  %s6, 32, %s96, [#allocation13]
    $region29: #{tpu_custom_call.1} parent=1 // pred_fallthru
      _
    // Predicated region
    $region30: #{tpu_custom_call.1} parent=1 // pred_check
      _
    $region31: #{tpu_custom_call.1} parent=1 // pred_check_branch
      %100 = sbr.rel (0) target = $region33
    $region32: #{tpu_custom_call.1} parent=1 // pred_region
      %s102 = ssub.s32 32, 32
      %103 = vsyncadd [#allocation16], %s102
      %s105 = sshll.u32 [#allocation15], 4
      %s106 = int_to_ptr.vmem [resolvable:$true] %s105
      %108 = dma.hbm_to_vmem [thread:$0]  %s7, 32, %s106, [#allocation16]
    $region33: #{tpu_custom_call.1} parent=1 // pred_fallthru
      _
    // Predicated region
    $region34: #{tpu_custom_call.1} parent=1 // pred_check
      _
    $region35: #{tpu_custom_call.1} parent=1 // pred_check_branch
      %110 = sbr.rel (0) target = $region37
    $region36: #{tpu_custom_call.1} parent=1 // pred_region
      _
    $region37: #{tpu_custom_call.1} parent=1 // pred_fallthru
      _
    // Predicated region
    $region38: #{tpu_custom_call.1} parent=1 // pred_check
      _
    $region39: #{tpu_custom_call.1} parent=1 // pred_check_branch
      %112 = sbr.rel (0) target = $region41
    $region40: #{tpu_custom_call.1} parent=1 // pred_region
      %113 = dma.done [#allocation5], 1792
    $region41: #{tpu_custom_call.1} parent=1 // pred_fallthru
      _
    // Predicated region
    $region42: #{tpu_custom_call.1} parent=1 // pred_check
      _
    $region43: #{tpu_custom_call.1} parent=1 // pred_check_branch
      %115 = sbr.rel (0) target = $region45
    $region44: #{tpu_custom_call.1} parent=1 // pred_region
      %116 = dma.done [#allocation7], 65536
    $region45: #{tpu_custom_call.1} parent=1 // pred_fallthru
      _
    // Predicated region
    $region46: #{tpu_custom_call.1} parent=1 // pred_check
      _
    $region47: #{tpu_custom_call.1} parent=1 // pred_check_branch
      %118 = sbr.rel (0) target = $region49
    $region48: #{tpu_custom_call.1} parent=1 // pred_region
      %119 = dma.done [#allocation7], 128
    $region49: #{tpu_custom_call.1} parent=1 // pred_fallthru
      _
    // Predicated region
    $region50: #{tpu_custom_call.1} parent=1 // pred_check
      _
    $region51: #{tpu_custom_call.1} parent=1 // pred_check_branch
      %121 = sbr.rel (0) target = $region53
    $region52: #{tpu_custom_call.1} parent=1 // pred_region
      %122 = dma.done [#allocation10], 32768
    $region53: #{tpu_custom_call.1} parent=1 // pred_fallthru
      _
    // Predicated region
    $region54: #{tpu_custom_call.1} parent=1 // pred_check
      _
    $region55: #{tpu_custom_call.1} parent=1 // pred_check_branch
      %124 = sbr.rel (0) target = $region57
    $region56: #{tpu_custom_call.1} parent=1 // pred_region
      %125 = dma.done [#allocation10], 64
    $region57: #{tpu_custom_call.1} parent=1 // pred_fallthru
      _
    // Predicated region
    $region58: #{tpu_custom_call.1} parent=1 // pred_check
      _
    $region59: #{tpu_custom_call.1} parent=1 // pred_check_branch
      %127 = sbr.rel (0) target = $region61
    $region60: #{tpu_custom_call.1} parent=1 // pred_region
      %128 = dma.done [#allocation13], 8192
    $region61: #{tpu_custom_call.1} parent=1 // pred_fallthru
      _
    // Predicated region
    $region62: #{tpu_custom_call.1} parent=1 // pred_check
      _
    $region63: #{tpu_custom_call.1} parent=1 // pred_check_branch
      %130 = sbr.rel (0) target = $region65
    $region64: #{tpu_custom_call.1} parent=1 // pred_region
      %131 = dma.done [#allocation13], 32
    $region65: #{tpu_custom_call.1} parent=1 // pred_fallthru
      _
    // Predicated region
    $region66: #{tpu_custom_call.1} parent=1 // pred_check
      _
    $region67: #{tpu_custom_call.1} parent=1 // pred_check_branch
      %133 = sbr.rel (0) target = $region69
    $region68: #{tpu_custom_call.1} parent=1 // pred_region
      %134 = dma.done [#allocation16], 32
    $region69: #{tpu_custom_call.1} parent=1 // pred_fallthru
      _
    %136 = vst [vmem:[#allocation2] sm:$0xff] 0
    %137 = vst [vmem:[#allocation2 + $0x8] sm:$0xff] 0
    %138 = vst [vmem:[#allocation2 + $0x10] sm:$0xff] 0
    %139 = vst [vmem:[#allocation2 + $0x18] sm:$0xff] 0
    %140 = vst [vmem:[#allocation2 + $0x20] sm:$0xff] 0
    %141 = vst [vmem:[#allocation2 + $0x28] sm:$0xff] 0
    %142 = vst [vmem:[#allocation2 + $0x30] sm:$0xff] 0
    %143 = vst [vmem:[#allocation2 + $0x38] sm:$0xff] 0
    %v144 = vld [vmem:[#allocation4] sm:$0xff]
    %v145 = vld [vmem:[#allocation4 + $0x8] sm:$0xff]
    %v146 = vld [vmem:[#allocation4 + $0x10] sm:$0xff]
    %v147 = vld [vmem:[#allocation4 + $0x18] sm:$0xff]
    %v148 = vld [vmem:[#allocation4 + $0x20] sm:$0xff]
    %v149 = vld [vmem:[#allocation4 + $0x28] sm:$0xff]
    %v150 = vld [vmem:[#allocation4 + $0x30] sm:$0xff]
    %v151 = vld [vmem:[#allocation4 + $0x38] sm:$0xff]
    %v152 = vld [vmem:[#allocation4 + $0x40] sm:$0xff]
    %v153 = vld [vmem:[#allocation4 + $0x48] sm:$0xff]
    %v154 = vld [vmem:[#allocation4 + $0x50] sm:$0xff]
    %v155 = vld [vmem:[#allocation4 + $0x58] sm:$0xff]
    %v156 = vld [vmem:[#allocation4 + $0x60] sm:$0xff]
    %v157 = vld [vmem:[#allocation4 + $0x68] sm:$0xff]
    %v158 = vpack.c.bf16 %v151, %v144
    %v159 = vpack.c.bf16 %v152, %v145
    %v160 = vpack.c.bf16 %v153, %v146
    %v161 = vpack.c.bf16 %v154, %v147
    %v162 = vpack.c.bf16 %v155, %v148
    %v163 = vpack.c.bf16 %v156, %v149
    %v164 = vpack.c.bf16 %v157, %v150
    %165 = vst [vmem:[#allocation2] sm:$0xff] %v158
    %166 = vst [vmem:[#allocation2 + $0x8] sm:$0xff] %v159
    %167 = vst [vmem:[#allocation2 + $0x10] sm:$0xff] %v160
    %168 = vst [vmem:[#allocation2 + $0x18] sm:$0xff] %v161
    %169 = vst [vmem:[#allocation2 + $0x20] sm:$0xff] %v162
    %170 = vst [vmem:[#allocation2 + $0x28] sm:$0xff] %v163
    %vm171 = vcmask 130048
    %172 = vst.msk [vmem:[#allocation2 + $0x30] sm:$0xff] %vm171, %v164
    %v173 = vld [vmem:[#allocation2] sm:$0xff]
    %v174 = vld [vmem:[#allocation2 + $0x8] sm:$0xff]
    %v175 = vld [vmem:[#allocation2 + $0x10] sm:$0xff]
    %v176 = vld [vmem:[#allocation2 + $0x18] sm:$0xff]
    %v177 = vld [vmem:[#allocation2 + $0x20] sm:$0xff]
    %v178 = vld [vmem:[#allocation2 + $0x28] sm:$0xff]
    %v179 = vld [vmem:[#allocation2 + $0x30] sm:$0xff]
    %v180 = vld [vmem:[#allocation2 + $0x38] sm:$0xff]
    %v181 = vld [vmem:[#allocation6] sm:$0xff]
    %v182 = vld [vmem:[#allocation6 + $0x8] sm:$0xff]
    %v183 = vld [vmem:[#allocation6 + $0x10] sm:$0xff]
    %v184 = vld [vmem:[#allocation6 + $0x18] sm:$0xff]
    %v185 = vld [vmem:[#allocation6 + $0x20] sm:$0xff]
    %v186 = vld [vmem:[#allocation6 + $0x28] sm:$0xff]
    %v187 = vld [vmem:[#allocation6 + $0x30] sm:$0xff]
    %v188 = vld [vmem:[#allocation6 + $0x38] sm:$0xff]
    %v189 = vld [vmem:[#allocation6 + $0x40] sm:$0xff]
    %v190 = vld [vmem:[#allocation6 + $0x48] sm:$0xff]
    %v191 = vld [vmem:[#allocation6 + $0x50] sm:$0xff]
    %v192 = vld [vmem:[#allocation6 + $0x58] sm:$0xff]
    %v193 = vld [vmem:[#allocation6 + $0x60] sm:$0xff]
    %v194 = vld [vmem:[#allocation6 + $0x68] sm:$0xff]
    %v195 = vld [vmem:[#allocation6 + $0x70] sm:$0xff]
    %v196 = vld [vmem:[#allocation6 + $0x78] sm:$0xff]
    %v197 = vld [vmem:[#allocation6 + $0x80] sm:$0xff]
    %v198 = vld [vmem:[#allocation6 + $0x88] sm:$0xff]
    %v199 = vld [vmem:[#allocation6 + $0x90] sm:$0xff]
    %v200 = vld [vmem:[#allocation6 + $0x98] sm:$0xff]
    %v201 = vld [vmem:[#allocation6 + $0xa0] sm:$0xff]
    %v202 = vld [vmem:[#allocation6 + $0xa8] sm:$0xff]
    %v203 = vld [vmem:[#allocation6 + $0xb0] sm:$0xff]
    %v204 = vld [vmem:[#allocation6 + $0xb8] sm:$0xff]
    %v205 = vld [vmem:[#allocation6 + $0xc0] sm:$0xff]
    %v206 = vld [vmem:[#allocation6 + $0xc8] sm:$0xff]
    %v207 = vld [vmem:[#allocation6 + $0xd0] sm:$0xff]
    %v208 = vld [vmem:[#allocation6 + $0xd8] sm:$0xff]
    %v209 = vld [vmem:[#allocation6 + $0xe0] sm:$0xff]
    %v210 = vld [vmem:[#allocation6 + $0xe8] sm:$0xff]
    %v211 = vld [vmem:[#allocation6 + $0xf0] sm:$0xff]
    %v212 = vld [vmem:[#allocation6 + $0xf8] sm:$0xff]
    %v213 = vld [vmem:[#allocation6 + $0x100] sm:$0xff]
    %v214 = vld [vmem:[#allocation6 + $0x108] sm:$0xff]
    %v215 = vld [vmem:[#allocation6 + $0x110] sm:$0xff]
    %v216 = vld [vmem:[#allocation6 + $0x118] sm:$0xff]
    %v217 = vld [vmem:[#allocation6 + $0x120] sm:$0xff]
    %v218 = vld [vmem:[#allocation6 + $0x128] sm:$0xff]
    %v219 = vld [vmem:[#allocation6 + $0x130] sm:$0xff]
    %v220 = vld [vmem:[#allocation6 + $0x138] sm:$0xff]
    %v221 = vld [vmem:[#allocation6 + $0x140] sm:$0xff]
    %v222 = vld [vmem:[#allocation6 + $0x148] sm:$0xff]
    %v223 = vld [vmem:[#allocation6 + $0x150] sm:$0xff]
    %v224 = vld [vmem:[#allocation6 + $0x158] sm:$0xff]
    %v225 = vld [vmem:[#allocation6 + $0x160] sm:$0xff]
    %v226 = vld [vmem:[#allocation6 + $0x168] sm:$0xff]
    %v227 = vld [vmem:[#allocation6 + $0x170] sm:$0xff]
    %v228 = vld [vmem:[#allocation6 + $0x178] sm:$0xff]
    %v229 = vld [vmem:[#allocation6 + $0x180] sm:$0xff]
    %v230 = vld [vmem:[#allocation6 + $0x188] sm:$0xff]
    %v231 = vld [vmem:[#allocation6 + $0x190] sm:$0xff]
    %v232 = vld [vmem:[#allocation6 + $0x198] sm:$0xff]
    %v233 = vld [vmem:[#allocation6 + $0x1a0] sm:$0xff]
    %v234 = vld [vmem:[#allocation6 + $0x1a8] sm:$0xff]
    %v235 = vld [vmem:[#allocation6 + $0x1b0] sm:$0xff]
    %v236 = vld [vmem:[#allocation6 + $0x1b8] sm:$0xff]
    %v237 = vld [vmem:[#allocation6 + $0x1c0] sm:$0xff]
    %v238 = vld [vmem:[#allocation6 + $0x1c8] sm:$0xff]
    %v239 = vld [vmem:[#allocation6 + $0x1d0] sm:$0xff]
    %v240 = vld [vmem:[#allocation6 + $0x1d8] sm:$0xff]
    %v241 = vld [vmem:[#allocation6 + $0x1e0] sm:$0xff]
    %v242 = vld [vmem:[#allocation6 + $0x1e8] sm:$0xff]
    %v243 = vld [vmem:[#allocation6 + $0x1f0] sm:$0xff]
    %v244 = vld [vmem:[#allocation6 + $0x1f8] sm:$0xff]
    %v245 = vld [vmem:[#allocation6 + $0x200] sm:$0xff]
    %v246 = vld [vmem:[#allocation6 + $0x208] sm:$0xff]
    %v247 = vld [vmem:[#allocation6 + $0x210] sm:$0xff]
    %v248 = vld [vmem:[#allocation6 + $0x218] sm:$0xff]
    %v249 = vld [vmem:[#allocation6 + $0x220] sm:$0xff]
    %v250 = vld [vmem:[#allocation6 + $0x228] sm:$0xff]
    %v251 = vld [vmem:[#allocation6 + $0x230] sm:$0xff]
    %v252 = vld [vmem:[#allocation6 + $0x238] sm:$0xff]
    %v253 = vld [vmem:[#allocation6 + $0x240] sm:$0xff]
    %v254 = vld [vmem:[#allocation6 + $0x248] sm:$0xff]
    %v255 = vld [vmem:[#allocation6 + $0x250] sm:$0xff]
    %v256 = vld [vmem:[#allocation6 + $0x258] sm:$0xff]
    %v257 = vld [vmem:[#allocation6 + $0x260] sm:$0xff]
    %v258 = vld [vmem:[#allocation6 + $0x268] sm:$0xff]
    %v259 = vld [vmem:[#allocation6 + $0x270] sm:$0xff]
    %v260 = vld [vmem:[#allocation6 + $0x278] sm:$0xff]
    %v261 = vld [vmem:[#allocation6 + $0x280] sm:$0xff]
    %v262 = vld [vmem:[#allocation6 + $0x288] sm:$0xff]
    %v263 = vld [vmem:[#allocation6 + $0x290] sm:$0xff]
    %v264 = vld [vmem:[#allocation6 + $0x298] sm:$0xff]
    %v265 = vld [vmem:[#allocation6 + $0x2a0] sm:$0xff]
    %v266 = vld [vmem:[#allocation6 + $0x2a8] sm:$0xff]
    %v267 = vld [vmem:[#allocation6 + $0x2b0] sm:$0xff]
    %v268 = vld [vmem:[#allocation6 + $0x2b8] sm:$0xff]
    %v269 = vld [vmem:[#allocation6 + $0x2c0] sm:$0xff]
    %v270 = vld [vmem:[#allocation6 + $0x2c8] sm:$0xff]
    %v271 = vld [vmem:[#allocation6 + $0x2d0] sm:$0xff]
    %v272 = vld [vmem:[#allocation6 + $0x2d8] sm:$0xff]
    %v273 = vld [vmem:[#allocation6 + $0x2e0] sm:$0xff]
    %v274 = vld [vmem:[#allocation6 + $0x2e8] sm:$0xff]
    %v275 = vld [vmem:[#allocation6 + $0x2f0] sm:$0xff]
    %v276 = vld [vmem:[#allocation6 + $0x2f8] sm:$0xff]
    %v277 = vld [vmem:[#allocation6 + $0x300] sm:$0xff]
    %v278 = vld [vmem:[#allocation6 + $0x308] sm:$0xff]
    %v279 = vld [vmem:[#allocation6 + $0x310] sm:$0xff]
    %v280 = vld [vmem:[#allocation6 + $0x318] sm:$0xff]
    %v281 = vld [vmem:[#allocation6 + $0x320] sm:$0xff]
    %v282 = vld [vmem:[#allocation6 + $0x328] sm:$0xff]
    %v283 = vld [vmem:[#allocation6 + $0x330] sm:$0xff]
    %v284 = vld [vmem:[#allocation6 + $0x338] sm:$0xff]
    %v285 = vld [vmem:[#allocation6 + $0x340] sm:$0xff]
    %v286 = vld [vmem:[#allocation6 + $0x348] sm:$0xff]
    %v287 = vld [vmem:[#allocation6 + $0x350] sm:$0xff]
    %v288 = vld [vmem:[#allocation6 + $0x358] sm:$0xff]
    %v289 = vld [vmem:[#allocation6 + $0x360] sm:$0xff]
    %v290 = vld [vmem:[#allocation6 + $0x368] sm:$0xff]
    %v291 = vld [vmem:[#allocation6 + $0x370] sm:$0xff]
    %v292 = vld [vmem:[#allocation6 + $0x378] sm:$0xff]
    %v293 = vld [vmem:[#allocation6 + $0x380] sm:$0xff]
    %v294 = vld [vmem:[#allocation6 + $0x388] sm:$0xff]
    %v295 = vld [vmem:[#allocation6 + $0x390] sm:$0xff]
    %v296 = vld [vmem:[#allocation6 + $0x398] sm:$0xff]
    %v297 = vld [vmem:[#allocation6 + $0x3a0] sm:$0xff]
    %v298 = vld [vmem:[#allocation6 + $0x3a8] sm:$0xff]
    %v299 = vld [vmem:[#allocation6 + $0x3b0] sm:$0xff]
    %v300 = vld [vmem:[#allocation6 + $0x3b8] sm:$0xff]
    %v301 = vld [vmem:[#allocation6 + $0x3c0] sm:$0xff]
    %v302 = vld [vmem:[#allocation6 + $0x3c8] sm:$0xff]
    %v303 = vld [vmem:[#allocation6 + $0x3d0] sm:$0xff]
    %v304 = vld [vmem:[#allocation6 + $0x3d8] sm:$0xff]
    %v305 = vld [vmem:[#allocation6 + $0x3e0] sm:$0xff]
    %v306 = vld [vmem:[#allocation6 + $0x3e8] sm:$0xff]
    %v307 = vld [vmem:[#allocation6 + $0x3f0] sm:$0xff]
    %v308 = vld [vmem:[#allocation6 + $0x3f8] sm:$0xff]
    %v309 = vld [vmem:[#allocation6 + $0x400] sm:$0xff]
    %v310 = vld [vmem:[#allocation6 + $0x408] sm:$0xff]
    %v311 = vld [vmem:[#allocation6 + $0x410] sm:$0xff]
    %v312 = vld [vmem:[#allocation6 + $0x418] sm:$0xff]
    %v313 = vld [vmem:[#allocation6 + $0x420] sm:$0xff]
    %v314 = vld [vmem:[#allocation6 + $0x428] sm:$0xff]
    %v315 = vld [vmem:[#allocation6 + $0x430] sm:$0xff]
    %v316 = vld [vmem:[#allocation6 + $0x438] sm:$0xff]
    %v317 = vld [vmem:[#allocation6 + $0x440] sm:$0xff]
    %v318 = vld [vmem:[#allocation6 + $0x448] sm:$0xff]
    %v319 = vld [vmem:[#allocation6 + $0x450] sm:$0xff]
    %v320 = vld [vmem:[#allocation6 + $0x458] sm:$0xff]
    %v321 = vld [vmem:[#allocation6 + $0x460] sm:$0xff]
    %v322 = vld [vmem:[#allocation6 + $0x468] sm:$0xff]
    %v323 = vld [vmem:[#allocation6 + $0x470] sm:$0xff]
    %v324 = vld [vmem:[#allocation6 + $0x478] sm:$0xff]
    %v325 = vld [vmem:[#allocation6 + $0x480] sm:$0xff]
    %v326 = vld [vmem:[#allocation6 + $0x488] sm:$0xff]
    %v327 = vld [vmem:[#allocation6 + $0x490] sm:$0xff]
    %v328 = vld [vmem:[#allocation6 + $0x498] sm:$0xff]
    %v329 = vld [vmem:[#allocation6 + $0x4a0] sm:$0xff]
    %v330 = vld [vmem:[#allocation6 + $0x4a8] sm:$0xff]
    %v331 = vld [vmem:[#allocation6 + $0x4b0] sm:$0xff]
    %v332 = vld [vmem:[#allocation6 + $0x4b8] sm:$0xff]
    %v333 = vld [vmem:[#allocation6 + $0x4c0] sm:$0xff]
    %v334 = vld [vmem:[#allocation6 + $0x4c8] sm:$0xff]
    %v335 = vld [vmem:[#allocation6 + $0x4d0] sm:$0xff]
    %v336 = vld [vmem:[#allocation6 + $0x4d8] sm:$0xff]
    %v337 = vld [vmem:[#allocation6 + $0x4e0] sm:$0xff]
    %v338 = vld [vmem:[#allocation6 + $0x4e8] sm:$0xff]
    %v339 = vld [vmem:[#allocation6 + $0x4f0] sm:$0xff]
    %v340 = vld [vmem:[#allocation6 + $0x4f8] sm:$0xff]
    %v341 = vld [vmem:[#allocation6 + $0x500] sm:$0xff]
    %v342 = vld [vmem:[#allocation6 + $0x508] sm:$0xff]
    %v343 = vld [vmem:[#allocation6 + $0x510] sm:$0xff]
    %v344 = vld [vmem:[#allocation6 + $0x518] sm:$0xff]
    %v345 = vld [vmem:[#allocation6 + $0x520] sm:$0xff]
    %v346 = vld [vmem:[#allocation6 + $0x528] sm:$0xff]
    %v347 = vld [vmem:[#allocation6 + $0x530] sm:$0xff]
    %v348 = vld [vmem:[#allocation6 + $0x538] sm:$0xff]
    %v349 = vld [vmem:[#allocation6 + $0x540] sm:$0xff]
    %v350 = vld [vmem:[#allocation6 + $0x548] sm:$0xff]
    %v351 = vld [vmem:[#allocation6 + $0x550] sm:$0xff]
    %v352 = vld [vmem:[#allocation6 + $0x558] sm:$0xff]
    %v353 = vld [vmem:[#allocation6 + $0x560] sm:$0xff]
    %v354 = vld [vmem:[#allocation6 + $0x568] sm:$0xff]
    %v355 = vld [vmem:[#allocation6 + $0x570] sm:$0xff]
    %v356 = vld [vmem:[#allocation6 + $0x578] sm:$0xff]
    %v357 = vld [vmem:[#allocation6 + $0x580] sm:$0xff]
    %v358 = vld [vmem:[#allocation6 + $0x588] sm:$0xff]
    %v359 = vld [vmem:[#allocation6 + $0x590] sm:$0xff]
    %v360 = vld [vmem:[#allocation6 + $0x598] sm:$0xff]
    %v361 = vld [vmem:[#allocation6 + $0x5a0] sm:$0xff]
    %v362 = vld [vmem:[#allocation6 + $0x5a8] sm:$0xff]
    %v363 = vld [vmem:[#allocation6 + $0x5b0] sm:$0xff]
    %v364 = vld [vmem:[#allocation6 + $0x5b8] sm:$0xff]
    %v365 = vld [vmem:[#allocation6 + $0x5c0] sm:$0xff]
    %v366 = vld [vmem:[#allocation6 + $0x5c8] sm:$0xff]
    %v367 = vld [vmem:[#allocation6 + $0x5d0] sm:$0xff]
    %v368 = vld [vmem:[#allocation6 + $0x5d8] sm:$0xff]
    %v369 = vld [vmem:[#allocation6 + $0x5e0] sm:$0xff]
    %v370 = vld [vmem:[#allocation6 + $0x5e8] sm:$0xff]
    %v371 = vld [vmem:[#allocation6 + $0x5f0] sm:$0xff]
    %v372 = vld [vmem:[#allocation6 + $0x5f8] sm:$0xff]
    %v373 = vld [vmem:[#allocation6 + $0x600] sm:$0xff]
    %v374 = vld [vmem:[#allocation6 + $0x608] sm:$0xff]
    %v375 = vld [vmem:[#allocation6 + $0x610] sm:$0xff]
    %v376 = vld [vmem:[#allocation6 + $0x618] sm:$0xff]
    %v377 = vld [vmem:[#allocation6 + $0x620] sm:$0xff]
    %v378 = vld [vmem:[#allocation6 + $0x628] sm:$0xff]
    %v379 = vld [vmem:[#allocation6 + $0x630] sm:$0xff]
    %v380 = vld [vmem:[#allocation6 + $0x638] sm:$0xff]
    %v381 = vld [vmem:[#allocation6 + $0x640] sm:$0xff]
    %v382 = vld [vmem:[#allocation6 + $0x648] sm:$0xff]
    %v383 = vld [vmem:[#allocation6 + $0x650] sm:$0xff]
    %v384 = vld [vmem:[#allocation6 + $0x658] sm:$0xff]
    %v385 = vld [vmem:[#allocation6 + $0x660] sm:$0xff]
    %v386 = vld [vmem:[#allocation6 + $0x668] sm:$0xff]
    %v387 = vld [vmem:[#allocation6 + $0x670] sm:$0xff]
    %v388 = vld [vmem:[#allocation6 + $0x678] sm:$0xff]
    %v389 = vld [vmem:[#allocation6 + $0x680] sm:$0xff]
    %v390 = vld [vmem:[#allocation6 + $0x688] sm:$0xff]
    %v391 = vld [vmem:[#allocation6 + $0x690] sm:$0xff]
    %v392 = vld [vmem:[#allocation6 + $0x698] sm:$0xff]
    %v393 = vld [vmem:[#allocation6 + $0x6a0] sm:$0xff]
    %v394 = vld [vmem:[#allocation6 + $0x6a8] sm:$0xff]
    %v395 = vld [vmem:[#allocation6 + $0x6b0] sm:$0xff]
    %v396 = vld [vmem:[#allocation6 + $0x6b8] sm:$0xff]
    %v397 = vld [vmem:[#allocation6 + $0x6c0] sm:$0xff]
    %v398 = vld [vmem:[#allocation6 + $0x6c8] sm:$0xff]
    %v399 = vld [vmem:[#allocation6 + $0x6d0] sm:$0xff]
    %v400 = vld [vmem:[#allocation6 + $0x6d8] sm:$0xff]
    %v401 = vld [vmem:[#allocation6 + $0x6e0] sm:$0xff]
    %v402 = vld [vmem:[#allocation6 + $0x6e8] sm:$0xff]
    %v403 = vld [vmem:[#allocation6 + $0x6f0] sm:$0xff]
    %v404 = vld [vmem:[#allocation6 + $0x6f8] sm:$0xff]
    %v405 = vld [vmem:[#allocation6 + $0x700] sm:$0xff]
    %v406 = vld [vmem:[#allocation6 + $0x708] sm:$0xff]
    %v407 = vld [vmem:[#allocation6 + $0x710] sm:$0xff]
    %v408 = vld [vmem:[#allocation6 + $0x718] sm:$0xff]
    %v409 = vld [vmem:[#allocation6 + $0x720] sm:$0xff]
    %v410 = vld [vmem:[#allocation6 + $0x728] sm:$0xff]
    %v411 = vld [vmem:[#allocation6 + $0x730] sm:$0xff]
    %v412 = vld [vmem:[#allocation6 + $0x738] sm:$0xff]
    %v413 = vld [vmem:[#allocation6 + $0x740] sm:$0xff]
    %v414 = vld [vmem:[#allocation6 + $0x748] sm:$0xff]
    %v415 = vld [vmem:[#allocation6 + $0x750] sm:$0xff]
    %v416 = vld [vmem:[#allocation6 + $0x758] sm:$0xff]
    %v417 = vld [vmem:[#allocation6 + $0x760] sm:$0xff]
    %v418 = vld [vmem:[#allocation6 + $0x768] sm:$0xff]
    %v419 = vld [vmem:[#allocation6 + $0x770] sm:$0xff]
    %v420 = vld [vmem:[#allocation6 + $0x778] sm:$0xff]
    %v421 = vld [vmem:[#allocation6 + $0x780] sm:$0xff]
    %v422 = vld [vmem:[#allocation6 + $0x788] sm:$0xff]
    %v423 = vld [vmem:[#allocation6 + $0x790] sm:$0xff]
    %v424 = vld [vmem:[#allocation6 + $0x798] sm:$0xff]
    %v425 = vld [vmem:[#allocation6 + $0x7a0] sm:$0xff]
    %v426 = vld [vmem:[#allocation6 + $0x7a8] sm:$0xff]
    %v427 = vld [vmem:[#allocation6 + $0x7b0] sm:$0xff]
    %v428 = vld [vmem:[#allocation6 + $0x7b8] sm:$0xff]
    %v429 = vld [vmem:[#allocation6 + $0x7c0] sm:$0xff]
    %v430 = vld [vmem:[#allocation6 + $0x7c8] sm:$0xff]
    %v431 = vld [vmem:[#allocation6 + $0x7d0] sm:$0xff]
    %v432 = vld [vmem:[#allocation6 + $0x7d8] sm:$0xff]
    %v433 = vld [vmem:[#allocation6 + $0x7e0] sm:$0xff]
    %v434 = vld [vmem:[#allocation6 + $0x7e8] sm:$0xff]
    %v435 = vld [vmem:[#allocation6 + $0x7f0] sm:$0xff]
    %v436 = vld [vmem:[#allocation6 + $0x7f8] sm:$0xff]
    %v437 = vld [vmem:[#allocation6 + $0x800] sm:$0xff]
    %v438 = vld [vmem:[#allocation6 + $0x808] sm:$0xff]
    %v439 = vld [vmem:[#allocation6 + $0x810] sm:$0xff]
    %v440 = vld [vmem:[#allocation6 + $0x818] sm:$0xff]
    %v441 = vld [vmem:[#allocation6 + $0x820] sm:$0xff]
    %v442 = vld [vmem:[#allocation6 + $0x828] sm:$0xff]
    %v443 = vld [vmem:[#allocation6 + $0x830] sm:$0xff]
    %v444 = vld [vmem:[#allocation6 + $0x838] sm:$0xff]
    %v445 = vld [vmem:[#allocation6 + $0x840] sm:$0xff]
    %v446 = vld [vmem:[#allocation6 + $0x848] sm:$0xff]
    %v447 = vld [vmem:[#allocation6 + $0x850] sm:$0xff]
    %v448 = vld [vmem:[#allocation6 + $0x858] sm:$0xff]
    %v449 = vld [vmem:[#allocation6 + $0x860] sm:$0xff]
    %v450 = vld [vmem:[#allocation6 + $0x868] sm:$0xff]
    %v451 = vld [vmem:[#allocation6 + $0x870] sm:$0xff]
    %v452 = vld [vmem:[#allocation6 + $0x878] sm:$0xff]
    %v453 = vld [vmem:[#allocation6 + $0x880] sm:$0xff]
    %v454 = vld [vmem:[#allocation6 + $0x888] sm:$0xff]
    %v455 = vld [vmem:[#allocation6 + $0x890] sm:$0xff]
    %v456 = vld [vmem:[#allocation6 + $0x898] sm:$0xff]
    %v457 = vld [vmem:[#allocation6 + $0x8a0] sm:$0xff]
    %v458 = vld [vmem:[#allocation6 + $0x8a8] sm:$0xff]
    %v459 = vld [vmem:[#allocation6 + $0x8b0] sm:$0xff]
    %v460 = vld [vmem:[#allocation6 + $0x8b8] sm:$0xff]
    %v461 = vld [vmem:[#allocation6 + $0x8c0] sm:$0xff]
    %v462 = vld [vmem:[#allocation6 + $0x8c8] sm:$0xff]
    %v463 = vld [vmem:[#allocation6 + $0x8d0] sm:$0xff]
    %v464 = vld [vmem:[#allocation6 + $0x8d8] sm:$0xff]
    %v465 = vld [vmem:[#allocation6 + $0x8e0] sm:$0xff]
    %v466 = vld [vmem:[#allocation6 + $0x8e8] sm:$0xff]
    %v467 = vld [vmem:[#allocation6 + $0x8f0] sm:$0xff]
    %v468 = vld [vmem:[#allocation6 + $0x8f8] sm:$0xff]
    %v469 = vld [vmem:[#allocation6 + $0x900] sm:$0xff]
    %v470 = vld [vmem:[#allocation6 + $0x908] sm:$0xff]
    %v471 = vld [vmem:[#allocation6 + $0x910] sm:$0xff]
    %v472 = vld [vmem:[#allocation6 + $0x918] sm:$0xff]
    %v473 = vld [vmem:[#allocation6 + $0x920] sm:$0xff]
    %v474 = vld [vmem:[#allocation6 + $0x928] sm:$0xff]
    %v475 = vld [vmem:[#allocation6 + $0x930] sm:$0xff]
    %v476 = vld [vmem:[#allocation6 + $0x938] sm:$0xff]
    %v477 = vld [vmem:[#allocation6 + $0x940] sm:$0xff]
    %v478 = vld [vmem:[#allocation6 + $0x948] sm:$0xff]
    %v479 = vld [vmem:[#allocation6 + $0x950] sm:$0xff]
    %v480 = vld [vmem:[#allocation6 + $0x958] sm:$0xff]
    %v481 = vld [vmem:[#allocation6 + $0x960] sm:$0xff]
    %v482 = vld [vmem:[#allocation6 + $0x968] sm:$0xff]
    %v483 = vld [vmem:[#allocation6 + $0x970] sm:$0xff]
    %v484 = vld [vmem:[#allocation6 + $0x978] sm:$0xff]
    %v485 = vld [vmem:[#allocation6 + $0x980] sm:$0xff]
    %v486 = vld [vmem:[#allocation6 + $0x988] sm:$0xff]
    %v487 = vld [vmem:[#allocation6 + $0x990] sm:$0xff]
    %v488 = vld [vmem:[#allocation6 + $0x998] sm:$0xff]
    %v489 = vld [vmem:[#allocation6 + $0x9a0] sm:$0xff]
    %v490 = vld [vmem:[#allocation6 + $0x9a8] sm:$0xff]
    %v491 = vld [vmem:[#allocation6 + $0x9b0] sm:$0xff]
    %v492 = vld [vmem:[#allocation6 + $0x9b8] sm:$0xff]
    %v493 = vld [vmem:[#allocation6 + $0x9c0] sm:$0xff]
    %v494 = vld [vmem:[#allocation6 + $0x9c8] sm:$0xff]
    %v495 = vld [vmem:[#allocation6 + $0x9d0] sm:$0xff]
    %v496 = vld [vmem:[#allocation6 + $0x9d8] sm:$0xff]
    %v497 = vld [vmem:[#allocation6 + $0x9e0] sm:$0xff]
    %v498 = vld [vmem:[#allocation6 + $0x9e8] sm:$0xff]
    %v499 = vld [vmem:[#allocation6 + $0x9f0] sm:$0xff]
    %v500 = vld [vmem:[#allocation6 + $0x9f8] sm:$0xff]
    %v501 = vld [vmem:[#allocation6 + $0xa00] sm:$0xff]
    %v502 = vld [vmem:[#allocation6 + $0xa08] sm:$0xff]
    %v503 = vld [vmem:[#allocation6 + $0xa10] sm:$0xff]
    %v504 = vld [vmem:[#allocation6 + $0xa18] sm:$0xff]
    %v505 = vld [vmem:[#allocation6 + $0xa20] sm:$0xff]
    %v506 = vld [vmem:[#allocation6 + $0xa28] sm:$0xff]
    %v507 = vld [vmem:[#allocation6 + $0xa30] sm:$0xff]
    %v508 = vld [vmem:[#allocation6 + $0xa38] sm:$0xff]
    %v509 = vld [vmem:[#allocation6 + $0xa40] sm:$0xff]
    %v510 = vld [vmem:[#allocation6 + $0xa48] sm:$0xff]
    %v511 = vld [vmem:[#allocation6 + $0xa50] sm:$0xff]
    %v512 = vld [vmem:[#allocation6 + $0xa58] sm:$0xff]
    %v513 = vld [vmem:[#allocation6 + $0xa60] sm:$0xff]
    %v514 = vld [vmem:[#allocation6 + $0xa68] sm:$0xff]
    %v515 = vld [vmem:[#allocation6 + $0xa70] sm:$0xff]
    %v516 = vld [vmem:[#allocation6 + $0xa78] sm:$0xff]
    %v517 = vld [vmem:[#allocation6 + $0xa80] sm:$0xff]
    %v518 = vld [vmem:[#allocation6 + $0xa88] sm:$0xff]
    %v519 = vld [vmem:[#allocation6 + $0xa90] sm:$0xff]
    %v520 = vld [vmem:[#allocation6 + $0xa98] sm:$0xff]
    %v521 = vld [vmem:[#allocation6 + $0xaa0] sm:$0xff]
    %v522 = vld [vmem:[#allocation6 + $0xaa8] sm:$0xff]
    %v523 = vld [vmem:[#allocation6 + $0xab0] sm:$0xff]
    %v524 = vld [vmem:[#allocation6 + $0xab8] sm:$0xff]
    %v525 = vld [vmem:[#allocation6 + $0xac0] sm:$0xff]
    %v526 = vld [vmem:[#allocation6 + $0xac8] sm:$0xff]
    %v527 = vld [vmem:[#allocation6 + $0xad0] sm:$0xff]
    %v528 = vld [vmem:[#allocation6 + $0xad8] sm:$0xff]
    %v529 = vld [vmem:[#allocation6 + $0xae0] sm:$0xff]
    %v530 = vld [vmem:[#allocation6 + $0xae8] sm:$0xff]
    %v531 = vld [vmem:[#allocation6 + $0xaf0] sm:$0xff]
    %v532 = vld [vmem:[#allocation6 + $0xaf8] sm:$0xff]
    %v533 = vld [vmem:[#allocation6 + $0xb00] sm:$0xff]
    %v534 = vld [vmem:[#allocation6 + $0xb08] sm:$0xff]
    %v535 = vld [vmem:[#allocation6 + $0xb10] sm:$0xff]
    %v536 = vld [vmem:[#allocation6 + $0xb18] sm:$0xff]
    %v537 = vld [vmem:[#allocation6 + $0xb20] sm:$0xff]
    %v538 = vld [vmem:[#allocation6 + $0xb28] sm:$0xff]
    %v539 = vld [vmem:[#allocation6 + $0xb30] sm:$0xff]
    %v540 = vld [vmem:[#allocation6 + $0xb38] sm:$0xff]
    %v541 = vld [vmem:[#allocation6 + $0xb40] sm:$0xff]
    %v542 = vld [vmem:[#allocation6 + $0xb48] sm:$0xff]
    %v543 = vld [vmem:[#allocation6 + $0xb50] sm:$0xff]
    %v544 = vld [vmem:[#allocation6 + $0xb58] sm:$0xff]
    %v545 = vld [vmem:[#allocation6 + $0xb60] sm:$0xff]
    %v546 = vld [vmem:[#allocation6 + $0xb68] sm:$0xff]
    %v547 = vld [vmem:[#allocation6 + $0xb70] sm:$0xff]
    %v548 = vld [vmem:[#allocation6 + $0xb78] sm:$0xff]
    %v549 = vld [vmem:[#allocation6 + $0xb80] sm:$0xff]
    %v550 = vld [vmem:[#allocation6 + $0xb88] sm:$0xff]
    %v551 = vld [vmem:[#allocation6 + $0xb90] sm:$0xff]
    %v552 = vld [vmem:[#allocation6 + $0xb98] sm:$0xff]
    %v553 = vld [vmem:[#allocation6 + $0xba0] sm:$0xff]
    %v554 = vld [vmem:[#allocation6 + $0xba8] sm:$0xff]
    %v555 = vld [vmem:[#allocation6 + $0xbb0] sm:$0xff]
    %v556 = vld [vmem:[#allocation6 + $0xbb8] sm:$0xff]
    %v557 = vld [vmem:[#allocation6 + $0xbc0] sm:$0xff]
    %v558 = vld [vmem:[#allocation6 + $0xbc8] sm:$0xff]
    %v559 = vld [vmem:[#allocation6 + $0xbd0] sm:$0xff]
    %v560 = vld [vmem:[#allocation6 + $0xbd8] sm:$0xff]
    %v561 = vld [vmem:[#allocation6 + $0xbe0] sm:$0xff]
    %v562 = vld [vmem:[#allocation6 + $0xbe8] sm:$0xff]
    %v563 = vld [vmem:[#allocation6 + $0xbf0] sm:$0xff]
    %v564 = vld [vmem:[#allocation6 + $0xbf8] sm:$0xff]
    %v565 = vld [vmem:[#allocation6 + $0xc00] sm:$0xff]
    %v566 = vld [vmem:[#allocation6 + $0xc08] sm:$0xff]
    %v567 = vld [vmem:[#allocation6 + $0xc10] sm:$0xff]
    %v568 = vld [vmem:[#allocation6 + $0xc18] sm:$0xff]
    %v569 = vld [vmem:[#allocation6 + $0xc20] sm:$0xff]
    %v570 = vld [vmem:[#allocation6 + $0xc28] sm:$0xff]
    %v571 = vld [vmem:[#allocation6 + $0xc30] sm:$0xff]
    %v572 = vld [vmem:[#allocation6 + $0xc38] sm:$0xff]
    %v573 = vld [vmem:[#allocation6 + $0xc40] sm:$0xff]
    %v574 = vld [vmem:[#allocation6 + $0xc48] sm:$0xff]
    %v575 = vld [vmem:[#allocation6 + $0xc50] sm:$0xff]
    %v576 = vld [vmem:[#allocation6 + $0xc58] sm:$0xff]
    %v577 = vld [vmem:[#allocation6 + $0xc60] sm:$0xff]
    %v578 = vld [vmem:[#allocation6 + $0xc68] sm:$0xff]
    %v579 = vld [vmem:[#allocation6 + $0xc70] sm:$0xff]
    %v580 = vld [vmem:[#allocation6 + $0xc78] sm:$0xff]
    %v581 = vld [vmem:[#allocation6 + $0xc80] sm:$0xff]
    %v582 = vld [vmem:[#allocation6 + $0xc88] sm:$0xff]
    %v583 = vld [vmem:[#allocation6 + $0xc90] sm:$0xff]
    %v584 = vld [vmem:[#allocation6 + $0xc98] sm:$0xff]
    %v585 = vld [vmem:[#allocation6 + $0xca0] sm:$0xff]
    %v586 = vld [vmem:[#allocation6 + $0xca8] sm:$0xff]
    %v587 = vld [vmem:[#allocation6 + $0xcb0] sm:$0xff]
    %v588 = vld [vmem:[#allocation6 + $0xcb8] sm:$0xff]
    %v589 = vld [vmem:[#allocation6 + $0xcc0] sm:$0xff]
    %v590 = vld [vmem:[#allocation6 + $0xcc8] sm:$0xff]
    %v591 = vld [vmem:[#allocation6 + $0xcd0] sm:$0xff]
    %v592 = vld [vmem:[#allocation6 + $0xcd8] sm:$0xff]
    %v593 = vld [vmem:[#allocation6 + $0xce0] sm:$0xff]
    %v594 = vld [vmem:[#allocation6 + $0xce8] sm:$0xff]
    %v595 = vld [vmem:[#allocation6 + $0xcf0] sm:$0xff]
    %v596 = vld [vmem:[#allocation6 + $0xcf8] sm:$0xff]
    %v597 = vld [vmem:[#allocation6 + $0xd00] sm:$0xff]
    %v598 = vld [vmem:[#allocation6 + $0xd08] sm:$0xff]
    %v599 = vld [vmem:[#allocation6 + $0xd10] sm:$0xff]
    %v600 = vld [vmem:[#allocation6 + $0xd18] sm:$0xff]
    %v601 = vld [vmem:[#allocation6 + $0xd20] sm:$0xff]
    %v602 = vld [vmem:[#allocation6 + $0xd28] sm:$0xff]
    %v603 = vld [vmem:[#allocation6 + $0xd30] sm:$0xff]
    %v604 = vld [vmem:[#allocation6 + $0xd38] sm:$0xff]
    %v605 = vld [vmem:[#allocation6 + $0xd40] sm:$0xff]
    %v606 = vld [vmem:[#allocation6 + $0xd48] sm:$0xff]
    %v607 = vld [vmem:[#allocation6 + $0xd50] sm:$0xff]
    %v608 = vld [vmem:[#allocation6 + $0xd58] sm:$0xff]
    %v609 = vld [vmem:[#allocation6 + $0xd60] sm:$0xff]
    %v610 = vld [vmem:[#allocation6 + $0xd68] sm:$0xff]
    %v611 = vld [vmem:[#allocation6 + $0xd70] sm:$0xff]
    %v612 = vld [vmem:[#allocation6 + $0xd78] sm:$0xff]
    %v613 = vld [vmem:[#allocation6 + $0xd80] sm:$0xff]
    %v614 = vld [vmem:[#allocation6 + $0xd88] sm:$0xff]
    %v615 = vld [vmem:[#allocation6 + $0xd90] sm:$0xff]
    %v616 = vld [vmem:[#allocation6 + $0xd98] sm:$0xff]
    %v617 = vld [vmem:[#allocation6 + $0xda0] sm:$0xff]
    %v618 = vld [vmem:[#allocation6 + $0xda8] sm:$0xff]
    %v619 = vld [vmem:[#allocation6 + $0xdb0] sm:$0xff]
    %v620 = vld [vmem:[#allocation6 + $0xdb8] sm:$0xff]
    %v621 = vld [vmem:[#allocation6 + $0xdc0] sm:$0xff]
    %v622 = vld [vmem:[#allocation6 + $0xdc8] sm:$0xff]
    %v623 = vld [vmem:[#allocation6 + $0xdd0] sm:$0xff]
    %v624 = vld [vmem:[#allocation6 + $0xdd8] sm:$0xff]
    %v625 = vld [vmem:[#allocation6 + $0xde0] sm:$0xff]
    %v626 = vld [vmem:[#allocation6 + $0xde8] sm:$0xff]
    %v627 = vld [vmem:[#allocation6 + $0xdf0] sm:$0xff]
    %v628 = vld [vmem:[#allocation6 + $0xdf8] sm:$0xff]
    %v629 = vld [vmem:[#allocation6 + $0xe00] sm:$0xff]
    %v630 = vld [vmem:[#allocation6 + $0xe08] sm:$0xff]
    %v631 = vld [vmem:[#allocation6 + $0xe10] sm:$0xff]
    %v632 = vld [vmem:[#allocation6 + $0xe18] sm:$0xff]
    %v633 = vld [vmem:[#allocation6 + $0xe20] sm:$0xff]
    %v634 = vld [vmem:[#allocation6 + $0xe28] sm:$0xff]
    %v635 = vld [vmem:[#allocation6 + $0xe30] sm:$0xff]
    %v636 = vld [vmem:[#allocation6 + $0xe38] sm:$0xff]
    %v637 = vld [vmem:[#allocation6 + $0xe40] sm:$0xff]
    %v638 = vld [vmem:[#allocation6 + $0xe48] sm:$0xff]
    %v639 = vld [vmem:[#allocation6 + $0xe50] sm:$0xff]
    %v640 = vld [vmem:[#allocation6 + $0xe58] sm:$0xff]
    %v641 = vld [vmem:[#allocation6 + $0xe60] sm:$0xff]
    %v642 = vld [vmem:[#allocation6 + $0xe68] sm:$0xff]
    %v643 = vld [vmem:[#allocation6 + $0xe70] sm:$0xff]
    %v644 = vld [vmem:[#allocation6 + $0xe78] sm:$0xff]
    %v645 = vld [vmem:[#allocation6 + $0xe80] sm:$0xff]
    %v646 = vld [vmem:[#allocation6 + $0xe88] sm:$0xff]
    %v647 = vld [vmem:[#allocation6 + $0xe90] sm:$0xff]
    %v648 = vld [vmem:[#allocation6 + $0xe98] sm:$0xff]
    %v649 = vld [vmem:[#allocation6 + $0xea0] sm:$0xff]
    %v650 = vld [vmem:[#allocation6 + $0xea8] sm:$0xff]
    %v651 = vld [vmem:[#allocation6 + $0xeb0] sm:$0xff]
    %v652 = vld [vmem:[#allocation6 + $0xeb8] sm:$0xff]
    %v653 = vld [vmem:[#allocation6 + $0xec0] sm:$0xff]
    %v654 = vld [vmem:[#allocation6 + $0xec8] sm:$0xff]
    %v655 = vld [vmem:[#allocation6 + $0xed0] sm:$0xff]
    %v656 = vld [vmem:[#allocation6 + $0xed8] sm:$0xff]
    %v657 = vld [vmem:[#allocation6 + $0xee0] sm:$0xff]
    %v658 = vld [vmem:[#allocation6 + $0xee8] sm:$0xff]
    %v659 = vld [vmem:[#allocation6 + $0xef0] sm:$0xff]
    %v660 = vld [vmem:[#allocation6 + $0xef8] sm:$0xff]
    %v661 = vld [vmem:[#allocation6 + $0xf00] sm:$0xff]
    %v662 = vld [vmem:[#allocation6 + $0xf08] sm:$0xff]
    %v663 = vld [vmem:[#allocation6 + $0xf10] sm:$0xff]
    %v664 = vld [vmem:[#allocation6 + $0xf18] sm:$0xff]
    %v665 = vld [vmem:[#allocation6 + $0xf20] sm:$0xff]
    %v666 = vld [vmem:[#allocation6 + $0xf28] sm:$0xff]
    %v667 = vld [vmem:[#allocation6 + $0xf30] sm:$0xff]
    %v668 = vld [vmem:[#allocation6 + $0xf38] sm:$0xff]
    %v669 = vld [vmem:[#allocation6 + $0xf40] sm:$0xff]
    %v670 = vld [vmem:[#allocation6 + $0xf48] sm:$0xff]
    %v671 = vld [vmem:[#allocation6 + $0xf50] sm:$0xff]
    %v672 = vld [vmem:[#allocation6 + $0xf58] sm:$0xff]
    %v673 = vld [vmem:[#allocation6 + $0xf60] sm:$0xff]
    %v674 = vld [vmem:[#allocation6 + $0xf68] sm:$0xff]
    %v675 = vld [vmem:[#allocation6 + $0xf70] sm:$0xff]
    %v676 = vld [vmem:[#allocation6 + $0xf78] sm:$0xff]
    %v677 = vld [vmem:[#allocation6 + $0xf80] sm:$0xff]
    %v678 = vld [vmem:[#allocation6 + $0xf88] sm:$0xff]
    %v679 = vld [vmem:[#allocation6 + $0xf90] sm:$0xff]
    %v680 = vld [vmem:[#allocation6 + $0xf98] sm:$0xff]
    %v681 = vld [vmem:[#allocation6 + $0xfa0] sm:$0xff]
    %v682 = vld [vmem:[#allocation6 + $0xfa8] sm:$0xff]
    %v683 = vld [vmem:[#allocation6 + $0xfb0] sm:$0xff]
    %v684 = vld [vmem:[#allocation6 + $0xfb8] sm:$0xff]
    %v685 = vld [vmem:[#allocation6 + $0xfc0] sm:$0xff]
    %v686 = vld [vmem:[#allocation6 + $0xfc8] sm:$0xff]
    %v687 = vld [vmem:[#allocation6 + $0xfd0] sm:$0xff]
    %v688 = vld [vmem:[#allocation6 + $0xfd8] sm:$0xff]
    %v689 = vld [vmem:[#allocation6 + $0xfe0] sm:$0xff]
    %v690 = vld [vmem:[#allocation6 + $0xfe8] sm:$0xff]
    %v691 = vld [vmem:[#allocation6 + $0xff0] sm:$0xff]
    %v692 = vld [vmem:[#allocation6 + $0xff8] sm:$0xff]
    %v693 = vld [vmem:[#allocation8] sm:$0xff]
    %v695 = vlaneseq
    %v696 = vshrl.u32 %v695, 7
    %v697 = vsub.s32 0, %v696
    %v698 = vrot.slane %v693, %v697
    %v699 = vlaneseq
    %v700 = vshrl.u32 %v699, 7
    %v701 = vsub.s32 1, %v700
    %v702 = vrot.slane %v693, %v701
    %v703 = vlaneseq
    %v704 = vshrl.u32 %v703, 7
    %v705 = vsub.s32 2, %v704
    %v706 = vrot.slane %v693, %v705
    %v707 = vlaneseq
    %v708 = vshrl.u32 %v707, 7
    %v709 = vsub.s32 3, %v708
    %v710 = vrot.slane %v693, %v709
    %v711 = vlaneseq
    %v712 = vshrl.u32 %v711, 7
    %v713 = vsub.s32 4, %v712
    %v714 = vrot.slane %v693, %v713
    %v715 = vlaneseq
    %v716 = vshrl.u32 %v715, 7
    %v717 = vsub.s32 5, %v716
    %v718 = vrot.slane %v693, %v717
    %v719 = vlaneseq
    %v720 = vshrl.u32 %v719, 7
    %v721 = vsub.s32 6, %v720
    %v722 = vrot.slane %v693, %v721
    %v723 = vlaneseq
    %v724 = vshrl.u32 %v723, 7
    %v725 = vsub.s32 7, %v724
    %v726 = vrot.slane %v693, %v725
    %v1247 = vunpack.c.l.b16 %v181
    %v1248 = vunpack.c.h.b16 %v181
    %v1249 = vunpack.c.l.b16 %v182
    %v1250 = vunpack.c.h.b16 %v182
    %v1251 = vunpack.c.l.b16 %v183
    %v1252 = vunpack.c.h.b16 %v183
    %v1253 = vunpack.c.l.b16 %v184
    %v1254 = vunpack.c.h.b16 %v184
    %v1255 = vunpack.c.l.b16 %v185
    %v1256 = vunpack.c.h.b16 %v185
    %v1257 = vunpack.c.l.b16 %v186
    %v1258 = vunpack.c.h.b16 %v186
    %v1259 = vunpack.c.l.b16 %v187
    %v1260 = vunpack.c.h.b16 %v187
    %v1261 = vunpack.c.l.b16 %v188
    %v1262 = vunpack.c.h.b16 %v188
    %v1263 = vunpack.c.l.b16 %v189
    %v1264 = vunpack.c.h.b16 %v189
    %v1265 = vunpack.c.l.b16 %v190
    %v1266 = vunpack.c.h.b16 %v190
    %v1267 = vunpack.c.l.b16 %v191
    %v1268 = vunpack.c.h.b16 %v191
    %v1269 = vunpack.c.l.b16 %v192
    %v1270 = vunpack.c.h.b16 %v192
    %v1271 = vunpack.c.l.b16 %v193
    %v1272 = vunpack.c.h.b16 %v193
    %v1273 = vunpack.c.l.b16 %v194
    %v1274 = vunpack.c.h.b16 %v194
    %v1275 = vunpack.c.l.b16 %v195
    %v1276 = vunpack.c.h.b16 %v195
    %v1277 = vunpack.c.l.b16 %v196
    %v1278 = vunpack.c.h.b16 %v196
    %v1279 = vunpack.c.l.b16 %v197
    %v1280 = vunpack.c.h.b16 %v197
    %v1281 = vunpack.c.l.b16 %v198
    %v1282 = vunpack.c.h.b16 %v198
    %v1283 = vunpack.c.l.b16 %v199
    %v1284 = vunpack.c.h.b16 %v199
    %v1285 = vunpack.c.l.b16 %v200
    %v1286 = vunpack.c.h.b16 %v200
    %v1287 = vunpack.c.l.b16 %v201
    %v1288 = vunpack.c.h.b16 %v201
    %v1289 = vunpack.c.l.b16 %v202
    %v1290 = vunpack.c.h.b16 %v202
    %v1291 = vunpack.c.l.b16 %v203
    %v1292 = vunpack.c.h.b16 %v203
    %v1293 = vunpack.c.l.b16 %v204
    %v1294 = vunpack.c.h.b16 %v204
    %v1295 = vunpack.c.l.b16 %v205
    %v1296 = vunpack.c.h.b16 %v205
    %v1297 = vunpack.c.l.b16 %v206
    %v1298 = vunpack.c.h.b16 %v206
    %v1299 = vunpack.c.l.b16 %v207
    %v1300 = vunpack.c.h.b16 %v207
    %v1301 = vunpack.c.l.b16 %v208
    %v1302 = vunpack.c.h.b16 %v208
    %v1303 = vunpack.c.l.b16 %v209
    %v1304 = vunpack.c.h.b16 %v209
    %v1305 = vunpack.c.l.b16 %v210
    %v1306 = vunpack.c.h.b16 %v210
    %v1307 = vunpack.c.l.b16 %v211
    %v1308 = vunpack.c.h.b16 %v211
    %v1309 = vunpack.c.l.b16 %v212
    %v1310 = vunpack.c.h.b16 %v212
    %v1311 = vunpack.c.l.b16 %v213
    %v1312 = vunpack.c.h.b16 %v213
    %v1313 = vunpack.c.l.b16 %v214
    %v1314 = vunpack.c.h.b16 %v214
    %v1315 = vunpack.c.l.b16 %v215
    %v1316 = vunpack.c.h.b16 %v215
    %v1317 = vunpack.c.l.b16 %v216
    %v1318 = vunpack.c.h.b16 %v216
    %v1319 = vunpack.c.l.b16 %v217
    %v1320 = vunpack.c.h.b16 %v217
    %v1321 = vunpack.c.l.b16 %v218
    %v1322 = vunpack.c.h.b16 %v218
    %v1323 = vunpack.c.l.b16 %v219
    %v1324 = vunpack.c.h.b16 %v219
    %v1325 = vunpack.c.l.b16 %v220
    %v1326 = vunpack.c.h.b16 %v220
    %v1327 = vunpack.c.l.b16 %v221
    %v1328 = vunpack.c.h.b16 %v221
    %v1329 = vunpack.c.l.b16 %v222
    %v1330 = vunpack.c.h.b16 %v222
    %v1331 = vunpack.c.l.b16 %v223
    %v1332 = vunpack.c.h.b16 %v223
    %v1333 = vunpack.c.l.b16 %v224
    %v1334 = vunpack.c.h.b16 %v224
    %v1335 = vunpack.c.l.b16 %v225
    %v1336 = vunpack.c.h.b16 %v225
    %v1337 = vunpack.c.l.b16 %v226
    %v1338 = vunpack.c.h.b16 %v226
    %v1339 = vunpack.c.l.b16 %v227
    %v1340 = vunpack.c.h.b16 %v227
    %v1341 = vunpack.c.l.b16 %v228
    %v1342 = vunpack.c.h.b16 %v228
    %v1343 = vunpack.c.l.b16 %v229
    %v1344 = vunpack.c.h.b16 %v229
    %v1345 = vunpack.c.l.b16 %v230
    %v1346 = vunpack.c.h.b16 %v230
    %v1347 = vunpack.c.l.b16 %v231
    %v1348 = vunpack.c.h.b16 %v231
    %v1349 = vunpack.c.l.b16 %v232
    %v1350 = vunpack.c.h.b16 %v232
    %v1351 = vunpack.c.l.b16 %v233
    %v1352 = vunpack.c.h.b16 %v233
    %v1353 = vunpack.c.l.b16 %v234
    %v1354 = vunpack.c.h.b16 %v234
    %v1355 = vunpack.c.l.b16 %v235
    %v1356 = vunpack.c.h.b16 %v235
    %v1357 = vunpack.c.l.b16 %v236
    %v1358 = vunpack.c.h.b16 %v236
    %v1359 = vunpack.c.l.b16 %v237
    %v1360 = vunpack.c.h.b16 %v237
    %v1361 = vunpack.c.l.b16 %v238
    %v1362 = vunpack.c.h.b16 %v238
    %v1363 = vunpack.c.l.b16 %v239
    %v1364 = vunpack.c.h.b16 %v239
    %v1365 = vunpack.c.l.b16 %v240
    %v1366 = vunpack.c.h.b16 %v240
    %v1367 = vunpack.c.l.b16 %v241
    %v1368 = vunpack.c.h.b16 %v241
    %v1369 = vunpack.c.l.b16 %v242
    %v1370 = vunpack.c.h.b16 %v242
    %v1371 = vunpack.c.l.b16 %v243
    %v1372 = vunpack.c.h.b16 %v243
    %v1373 = vunpack.c.l.b16 %v244
    %v1374 = vunpack.c.h.b16 %v244
    %v1375 = vunpack.c.l.b16 %v245
    %v1376 = vunpack.c.h.b16 %v245
    %v1377 = vunpack.c.l.b16 %v246
    %v1378 = vunpack.c.h.b16 %v246
    %v1379 = vunpack.c.l.b16 %v247
    %v1380 = vunpack.c.h.b16 %v247
    %v1381 = vunpack.c.l.b16 %v248
    %v1382 = vunpack.c.h.b16 %v248
    %v1383 = vunpack.c.l.b16 %v249
    %v1384 = vunpack.c.h.b16 %v249
    %v1385 = vunpack.c.l.b16 %v250
    %v1386 = vunpack.c.h.b16 %v250
    %v1387 = vunpack.c.l.b16 %v251
    %v1388 = vunpack.c.h.b16 %v251
    %v1389 = vunpack.c.l.b16 %v252
    %v1390 = vunpack.c.h.b16 %v252
    %v1391 = vunpack.c.l.b16 %v253
    %v1392 = vunpack.c.h.b16 %v253
    %v1393 = vunpack.c.l.b16 %v254
    %v1394 = vunpack.c.h.b16 %v254
    %v1395 = vunpack.c.l.b16 %v255
    %v1396 = vunpack.c.h.b16 %v255
    %v1397 = vunpack.c.l.b16 %v256
    %v1398 = vunpack.c.h.b16 %v256
    %v1399 = vunpack.c.l.b16 %v257
    %v1400 = vunpack.c.h.b16 %v257
    %v1401 = vunpack.c.l.b16 %v258
    %v1402 = vunpack.c.h.b16 %v258
    %v1403 = vunpack.c.l.b16 %v259
    %v1404 = vunpack.c.h.b16 %v259
    %v1405 = vunpack.c.l.b16 %v260
    %v1406 = vunpack.c.h.b16 %v260
    %v1407 = vunpack.c.l.b16 %v261
    %v1408 = vunpack.c.h.b16 %v261
    %v1409 = vunpack.c.l.b16 %v262
    %v1410 = vunpack.c.h.b16 %v262
    %v1411 = vunpack.c.l.b16 %v263
    %v1412 = vunpack.c.h.b16 %v263
    %v1413 = vunpack.c.l.b16 %v264
    %v1414 = vunpack.c.h.b16 %v264
    %v1415 = vunpack.c.l.b16 %v265
    %v1416 = vunpack.c.h.b16 %v265
    %v1417 = vunpack.c.l.b16 %v266
    %v1418 = vunpack.c.h.b16 %v266
    %v1419 = vunpack.c.l.b16 %v267
    %v1420 = vunpack.c.h.b16 %v267
    %v1421 = vunpack.c.l.b16 %v268
    %v1422 = vunpack.c.h.b16 %v268
    %v1423 = vunpack.c.l.b16 %v269
    %v1424 = vunpack.c.h.b16 %v269
    %v1425 = vunpack.c.l.b16 %v270
    %v1426 = vunpack.c.h.b16 %v270
    %v1427 = vunpack.c.l.b16 %v271
    %v1428 = vunpack.c.h.b16 %v271
    %v1429 = vunpack.c.l.b16 %v272
    %v1430 = vunpack.c.h.b16 %v272
    %v1431 = vunpack.c.l.b16 %v273
    %v1432 = vunpack.c.h.b16 %v273
    %v1433 = vunpack.c.l.b16 %v274
    %v1434 = vunpack.c.h.b16 %v274
    %v1435 = vunpack.c.l.b16 %v275
    %v1436 = vunpack.c.h.b16 %v275
    %v1437 = vunpack.c.l.b16 %v276
    %v1438 = vunpack.c.h.b16 %v276
    %v1439 = vunpack.c.l.b16 %v277
    %v1440 = vunpack.c.h.b16 %v277
    %v1441 = vunpack.c.l.b16 %v278
    %v1442 = vunpack.c.h.b16 %v278
    %v1443 = vunpack.c.l.b16 %v279
    %v1444 = vunpack.c.h.b16 %v279
    %v1445 = vunpack.c.l.b16 %v280
    %v1446 = vunpack.c.h.b16 %v280
    %v1447 = vunpack.c.l.b16 %v281
    %v1448 = vunpack.c.h.b16 %v281
    %v1449 = vunpack.c.l.b16 %v282
    %v1450 = vunpack.c.h.b16 %v282
    %v1451 = vunpack.c.l.b16 %v283
    %v1452 = vunpack.c.h.b16 %v283
    %v1453 = vunpack.c.l.b16 %v284
    %v1454 = vunpack.c.h.b16 %v284
    %v1455 = vunpack.c.l.b16 %v285
    %v1456 = vunpack.c.h.b16 %v285
    %v1457 = vunpack.c.l.b16 %v286
    %v1458 = vunpack.c.h.b16 %v286
    %v1459 = vunpack.c.l.b16 %v287
    %v1460 = vunpack.c.h.b16 %v287
    %v1461 = vunpack.c.l.b16 %v288
    %v1462 = vunpack.c.h.b16 %v288
    %v1463 = vunpack.c.l.b16 %v289
    %v1464 = vunpack.c.h.b16 %v289
    %v1465 = vunpack.c.l.b16 %v290
    %v1466 = vunpack.c.h.b16 %v290
    %v1467 = vunpack.c.l.b16 %v291
    %v1468 = vunpack.c.h.b16 %v291
    %v1469 = vunpack.c.l.b16 %v292
    %v1470 = vunpack.c.h.b16 %v292
    %v1471 = vunpack.c.l.b16 %v293
    %v1472 = vunpack.c.h.b16 %v293
    %v1473 = vunpack.c.l.b16 %v294
    %v1474 = vunpack.c.h.b16 %v294
    %v1475 = vunpack.c.l.b16 %v295
    %v1476 = vunpack.c.h.b16 %v295
    %v1477 = vunpack.c.l.b16 %v296
    %v1478 = vunpack.c.h.b16 %v296
    %v1479 = vunpack.c.l.b16 %v297
    %v1480 = vunpack.c.h.b16 %v297
    %v1481 = vunpack.c.l.b16 %v298
    %v1482 = vunpack.c.h.b16 %v298
    %v1483 = vunpack.c.l.b16 %v299
    %v1484 = vunpack.c.h.b16 %v299
    %v1485 = vunpack.c.l.b16 %v300
    %v1486 = vunpack.c.h.b16 %v300
    %v1487 = vunpack.c.l.b16 %v301
    %v1488 = vunpack.c.h.b16 %v301
    %v1489 = vunpack.c.l.b16 %v302
    %v1490 = vunpack.c.h.b16 %v302
    %v1491 = vunpack.c.l.b16 %v303
    %v1492 = vunpack.c.h.b16 %v303
    %v1493 = vunpack.c.l.b16 %v304
    %v1494 = vunpack.c.h.b16 %v304
    %v1495 = vunpack.c.l.b16 %v305
    %v1496 = vunpack.c.h.b16 %v305
    %v1497 = vunpack.c.l.b16 %v306
    %v1498 = vunpack.c.h.b16 %v306
    %v1499 = vunpack.c.l.b16 %v307
    %v1500 = vunpack.c.h.b16 %v307
    %v1501 = vunpack.c.l.b16 %v308
    %v1502 = vunpack.c.h.b16 %v308
    %v1503 = vunpack.c.l.b16 %v309
    %v1504 = vunpack.c.h.b16 %v309
    %v1505 = vunpack.c.l.b16 %v310
    %v1506 = vunpack.c.h.b16 %v310
    %v1507 = vunpack.c.l.b16 %v311
    %v1508 = vunpack.c.h.b16 %v311
    %v1509 = vunpack.c.l.b16 %v312
    %v1510 = vunpack.c.h.b16 %v312
    %v1511 = vunpack.c.l.b16 %v313
    %v1512 = vunpack.c.h.b16 %v313
    %v1513 = vunpack.c.l.b16 %v314
    %v1514 = vunpack.c.h.b16 %v314
    %v1515 = vunpack.c.l.b16 %v315
    %v1516 = vunpack.c.h.b16 %v315
    %v1517 = vunpack.c.l.b16 %v316
    %v1518 = vunpack.c.h.b16 %v316
    %v1519 = vunpack.c.l.b16 %v317
    %v1520 = vunpack.c.h.b16 %v317
    %v1521 = vunpack.c.l.b16 %v318
    %v1522 = vunpack.c.h.b16 %v318
    %v1523 = vunpack.c.l.b16 %v319
    %v1524 = vunpack.c.h.b16 %v319
    %v1525 = vunpack.c.l.b16 %v320
    %v1526 = vunpack.c.h.b16 %v320
    %v1527 = vunpack.c.l.b16 %v321
    %v1528 = vunpack.c.h.b16 %v321
    %v1529 = vunpack.c.l.b16 %v322
    %v1530 = vunpack.c.h.b16 %v322
    %v1531 = vunpack.c.l.b16 %v323
    %v1532 = vunpack.c.h.b16 %v323
    %v1533 = vunpack.c.l.b16 %v324
    %v1534 = vunpack.c.h.b16 %v324
    %v1535 = vunpack.c.l.b16 %v325
    %v1536 = vunpack.c.h.b16 %v325
    %v1537 = vunpack.c.l.b16 %v326
    %v1538 = vunpack.c.h.b16 %v326
    %v1539 = vunpack.c.l.b16 %v327
    %v1540 = vunpack.c.h.b16 %v327
    %v1541 = vunpack.c.l.b16 %v328
    %v1542 = vunpack.c.h.b16 %v328
    %v1543 = vunpack.c.l.b16 %v329
    %v1544 = vunpack.c.h.b16 %v329
    %v1545 = vunpack.c.l.b16 %v330
    %v1546 = vunpack.c.h.b16 %v330
    %v1547 = vunpack.c.l.b16 %v331
    %v1548 = vunpack.c.h.b16 %v331
    %v1549 = vunpack.c.l.b16 %v332
    %v1550 = vunpack.c.h.b16 %v332
    %v1551 = vunpack.c.l.b16 %v333
    %v1552 = vunpack.c.h.b16 %v333
    %v1553 = vunpack.c.l.b16 %v334
    %v1554 = vunpack.c.h.b16 %v334
    %v1555 = vunpack.c.l.b16 %v335
    %v1556 = vunpack.c.h.b16 %v335
    %v1557 = vunpack.c.l.b16 %v336
    %v1558 = vunpack.c.h.b16 %v336
    %v1559 = vunpack.c.l.b16 %v337
    %v1560 = vunpack.c.h.b16 %v337
    %v1561 = vunpack.c.l.b16 %v338
    %v1562 = vunpack.c.h.b16 %v338
    %v1563 = vunpack.c.l.b16 %v339
    %v1564 = vunpack.c.h.b16 %v339
    %v1565 = vunpack.c.l.b16 %v340
    %v1566 = vunpack.c.h.b16 %v340
    %v1567 = vunpack.c.l.b16 %v341
    %v1568 = vunpack.c.h.b16 %v341
    %v1569 = vunpack.c.l.b16 %v342
    %v1570 = vunpack.c.h.b16 %v342
    %v1571 = vunpack.c.l.b16 %v343
    %v1572 = vunpack.c.h.b16 %v343
    %v1573 = vunpack.c.l.b16 %v344
    %v1574 = vunpack.c.h.b16 %v344
    %v1575 = vunpack.c.l.b16 %v345
    %v1576 = vunpack.c.h.b16 %v345
    %v1577 = vunpack.c.l.b16 %v346
    %v1578 = vunpack.c.h.b16 %v346
    %v1579 = vunpack.c.l.b16 %v347
    %v1580 = vunpack.c.h.b16 %v347
    %v1581 = vunpack.c.l.b16 %v348
    %v1582 = vunpack.c.h.b16 %v348
    %v1583 = vunpack.c.l.b16 %v349
    %v1584 = vunpack.c.h.b16 %v349
    %v1585 = vunpack.c.l.b16 %v350
    %v1586 = vunpack.c.h.b16 %v350
    %v1587 = vunpack.c.l.b16 %v351
    %v1588 = vunpack.c.h.b16 %v351
    %v1589 = vunpack.c.l.b16 %v352
    %v1590 = vunpack.c.h.b16 %v352
    %v1591 = vunpack.c.l.b16 %v353
    %v1592 = vunpack.c.h.b16 %v353
    %v1593 = vunpack.c.l.b16 %v354
    %v1594 = vunpack.c.h.b16 %v354
    %v1595 = vunpack.c.l.b16 %v355
    %v1596 = vunpack.c.h.b16 %v355
    %v1597 = vunpack.c.l.b16 %v356
    %v1598 = vunpack.c.h.b16 %v356
    %v1599 = vunpack.c.l.b16 %v357
    %v1600 = vunpack.c.h.b16 %v357
    %v1601 = vunpack.c.l.b16 %v358
    %v1602 = vunpack.c.h.b16 %v358
    %v1603 = vunpack.c.l.b16 %v359
    %v1604 = vunpack.c.h.b16 %v359
    %v1605 = vunpack.c.l.b16 %v360
    %v1606 = vunpack.c.h.b16 %v360
    %v1607 = vunpack.c.l.b16 %v361
    %v1608 = vunpack.c.h.b16 %v361
    %v1609 = vunpack.c.l.b16 %v362
    %v1610 = vunpack.c.h.b16 %v362
    %v1611 = vunpack.c.l.b16 %v363
    %v1612 = vunpack.c.h.b16 %v363
    %v1613 = vunpack.c.l.b16 %v364
    %v1614 = vunpack.c.h.b16 %v364
    %v1615 = vunpack.c.l.b16 %v365
    %v1616 = vunpack.c.h.b16 %v365
    %v1617 = vunpack.c.l.b16 %v366
    %v1618 = vunpack.c.h.b16 %v366
    %v1619 = vunpack.c.l.b16 %v367
    %v1620 = vunpack.c.h.b16 %v367
    %v1621 = vunpack.c.l.b16 %v368
    %v1622 = vunpack.c.h.b16 %v368
    %v1623 = vunpack.c.l.b16 %v369
    %v1624 = vunpack.c.h.b16 %v369
    %v1625 = vunpack.c.l.b16 %v370
    %v1626 = vunpack.c.h.b16 %v370
    %v1627 = vunpack.c.l.b16 %v371
    %v1628 = vunpack.c.h.b16 %v371
    %v1629 = vunpack.c.l.b16 %v372
    %v1630 = vunpack.c.h.b16 %v372
    %v1631 = vunpack.c.l.b16 %v373
    %v1632 = vunpack.c.h.b16 %v373
    %v1633 = vunpack.c.l.b16 %v374
    %v1634 = vunpack.c.h.b16 %v374
    %v1635 = vunpack.c.l.b16 %v375
    %v1636 = vunpack.c.h.b16 %v375
    %v1637 = vunpack.c.l.b16 %v376
    %v1638 = vunpack.c.h.b16 %v376
    %v1639 = vunpack.c.l.b16 %v377
    %v1640 = vunpack.c.h.b16 %v377
    %v1641 = vunpack.c.l.b16 %v378
    %v1642 = vunpack.c.h.b16 %v378
    %v1643 = vunpack.c.l.b16 %v379
    %v1644 = vunpack.c.h.b16 %v379
    %v1645 = vunpack.c.l.b16 %v380
    %v1646 = vunpack.c.h.b16 %v380
    %v1647 = vunpack.c.l.b16 %v381
    %v1648 = vunpack.c.h.b16 %v381
    %v1649 = vunpack.c.l.b16 %v382
    %v1650 = vunpack.c.h.b16 %v382
    %v1651 = vunpack.c.l.b16 %v383
    %v1652 = vunpack.c.h.b16 %v383
    %v1653 = vunpack.c.l.b16 %v384
    %v1654 = vunpack.c.h.b16 %v384
    %v1655 = vunpack.c.l.b16 %v385
    %v1656 = vunpack.c.h.b16 %v385
    %v1657 = vunpack.c.l.b16 %v386
    %v1658 = vunpack.c.h.b16 %v386
    %v1659 = vunpack.c.l.b16 %v387
    %v1660 = vunpack.c.h.b16 %v387
    %v1661 = vunpack.c.l.b16 %v388
    %v1662 = vunpack.c.h.b16 %v388
    %v1663 = vunpack.c.l.b16 %v389
    %v1664 = vunpack.c.h.b16 %v389
    %v1665 = vunpack.c.l.b16 %v390
    %v1666 = vunpack.c.h.b16 %v390
    %v1667 = vunpack.c.l.b16 %v391
    %v1668 = vunpack.c.h.b16 %v391
    %v1669 = vunpack.c.l.b16 %v392
    %v1670 = vunpack.c.h.b16 %v392
    %v1671 = vunpack.c.l.b16 %v393
    %v1672 = vunpack.c.h.b16 %v393
    %v1673 = vunpack.c.l.b16 %v394
    %v1674 = vunpack.c.h.b16 %v394
    %v1675 = vunpack.c.l.b16 %v395
    %v1676 = vunpack.c.h.b16 %v395
    %v1677 = vunpack.c.l.b16 %v396
    %v1678 = vunpack.c.h.b16 %v396
    %v1679 = vunpack.c.l.b16 %v397
    %v1680 = vunpack.c.h.b16 %v397
    %v1681 = vunpack.c.l.b16 %v398
    %v1682 = vunpack.c.h.b16 %v398
    %v1683 = vunpack.c.l.b16 %v399
    %v1684 = vunpack.c.h.b16 %v399
    %v1685 = vunpack.c.l.b16 %v400
    %v1686 = vunpack.c.h.b16 %v400
    %v1687 = vunpack.c.l.b16 %v401
    %v1688 = vunpack.c.h.b16 %v401
    %v1689 = vunpack.c.l.b16 %v402
    %v1690 = vunpack.c.h.b16 %v402
    %v1691 = vunpack.c.l.b16 %v403
    %v1692 = vunpack.c.h.b16 %v403
    %v1693 = vunpack.c.l.b16 %v404
    %v1694 = vunpack.c.h.b16 %v404
    %v1695 = vunpack.c.l.b16 %v405
    %v1696 = vunpack.c.h.b16 %v405
    %v1697 = vunpack.c.l.b16 %v406
    %v1698 = vunpack.c.h.b16 %v406
    %v1699 = vunpack.c.l.b16 %v407
    %v1700 = vunpack.c.h.b16 %v407
    %v1701 = vunpack.c.l.b16 %v408
    %v1702 = vunpack.c.h.b16 %v408
    %v1703 = vunpack.c.l.b16 %v409
    %v1704 = vunpack.c.h.b16 %v409
    %v1705 = vunpack.c.l.b16 %v410
    %v1706 = vunpack.c.h.b16 %v410
    %v1707 = vunpack.c.l.b16 %v411
    %v1708 = vunpack.c.h.b16 %v411
    %v1709 = vunpack.c.l.b16 %v412
    %v1710 = vunpack.c.h.b16 %v412
    %v1711 = vunpack.c.l.b16 %v413
    %v1712 = vunpack.c.h.b16 %v413
    %v1713 = vunpack.c.l.b16 %v414
    %v1714 = vunpack.c.h.b16 %v414
    %v1715 = vunpack.c.l.b16 %v415
    %v1716 = vunpack.c.h.b16 %v415
    %v1717 = vunpack.c.l.b16 %v416
    %v1718 = vunpack.c.h.b16 %v416
    %v1719 = vunpack.c.l.b16 %v417
    %v1720 = vunpack.c.h.b16 %v417
    %v1721 = vunpack.c.l.b16 %v418
    %v1722 = vunpack.c.h.b16 %v418
    %v1723 = vunpack.c.l.b16 %v419
    %v1724 = vunpack.c.h.b16 %v419
    %v1725 = vunpack.c.l.b16 %v420
    %v1726 = vunpack.c.h.b16 %v420
    %v1727 = vunpack.c.l.b16 %v421
    %v1728 = vunpack.c.h.b16 %v421
    %v1729 = vunpack.c.l.b16 %v422
    %v1730 = vunpack.c.h.b16 %v422
    %v1731 = vunpack.c.l.b16 %v423
    %v1732 = vunpack.c.h.b16 %v423
    %v1733 = vunpack.c.l.b16 %v424
    %v1734 = vunpack.c.h.b16 %v424
    %v1735 = vunpack.c.l.b16 %v425
    %v1736 = vunpack.c.h.b16 %v425
    %v1737 = vunpack.c.l.b16 %v426
    %v1738 = vunpack.c.h.b16 %v426
    %v1739 = vunpack.c.l.b16 %v427
    %v1740 = vunpack.c.h.b16 %v427
    %v1741 = vunpack.c.l.b16 %v428
    %v1742 = vunpack.c.h.b16 %v428
    %v1743 = vunpack.c.l.b16 %v429
    %v1744 = vunpack.c.h.b16 %v429
    %v1745 = vunpack.c.l.b16 %v430
    %v1746 = vunpack.c.h.b16 %v430
    %v1747 = vunpack.c.l.b16 %v431
    %v1748 = vunpack.c.h.b16 %v431
    %v1749 = vunpack.c.l.b16 %v432
    %v1750 = vunpack.c.h.b16 %v432
    %v1751 = vunpack.c.l.b16 %v433
    %v1752 = vunpack.c.h.b16 %v433
    %v1753 = vunpack.c.l.b16 %v434
    %v1754 = vunpack.c.h.b16 %v434
    %v1755 = vunpack.c.l.b16 %v435
    %v1756 = vunpack.c.h.b16 %v435
    %v1757 = vunpack.c.l.b16 %v436
    %v1758 = vunpack.c.h.b16 %v436
    %v1759 = vunpack.c.l.b16 %v437
    %v1760 = vunpack.c.h.b16 %v437
    %v1761 = vunpack.c.l.b16 %v438
    %v1762 = vunpack.c.h.b16 %v438
    %v1763 = vunpack.c.l.b16 %v439
    %v1764 = vunpack.c.h.b16 %v439
    %v1765 = vunpack.c.l.b16 %v440
    %v1766 = vunpack.c.h.b16 %v440
    %v1767 = vunpack.c.l.b16 %v441
    %v1768 = vunpack.c.h.b16 %v441
    %v1769 = vunpack.c.l.b16 %v442
    %v1770 = vunpack.c.h.b16 %v442
    %v1771 = vunpack.c.l.b16 %v443
    %v1772 = vunpack.c.h.b16 %v443
    %v1773 = vunpack.c.l.b16 %v444
    %v1774 = vunpack.c.h.b16 %v444
    %v1775 = vunpack.c.l.b16 %v445
    %v1776 = vunpack.c.h.b16 %v445
    %v1777 = vunpack.c.l.b16 %v446
    %v1778 = vunpack.c.h.b16 %v446
    %v1779 = vunpack.c.l.b16 %v447
    %v1780 = vunpack.c.h.b16 %v447
    %v1781 = vunpack.c.l.b16 %v448
    %v1782 = vunpack.c.h.b16 %v448
    %v1783 = vunpack.c.l.b16 %v449
    %v1784 = vunpack.c.h.b16 %v449
    %v1785 = vunpack.c.l.b16 %v450
    %v1786 = vunpack.c.h.b16 %v450
    %v1787 = vunpack.c.l.b16 %v451
    %v1788 = vunpack.c.h.b16 %v451
    %v1789 = vunpack.c.l.b16 %v452
    %v1790 = vunpack.c.h.b16 %v452
    %v1791 = vunpack.c.l.b16 %v453
    %v1792 = vunpack.c.h.b16 %v453
    %v1793 = vunpack.c.l.b16 %v454
    %v1794 = vunpack.c.h.b16 %v454
    %v1795 = vunpack.c.l.b16 %v455
    %v1796 = vunpack.c.h.b16 %v455
    %v1797 = vunpack.c.l.b16 %v456
    %v1798 = vunpack.c.h.b16 %v456
    %v1799 = vunpack.c.l.b16 %v457
    %v1800 = vunpack.c.h.b16 %v457
    %v1801 = vunpack.c.l.b16 %v458
    %v1802 = vunpack.c.h.b16 %v458
    %v1803 = vunpack.c.l.b16 %v459
    %v1804 = vunpack.c.h.b16 %v459
    %v1805 = vunpack.c.l.b16 %v460
    %v1806 = vunpack.c.h.b16 %v460
    %v1807 = vunpack.c.l.b16 %v461
    %v1808 = vunpack.c.h.b16 %v461
    %v1809 = vunpack.c.l.b16 %v462
    %v1810 = vunpack.c.h.b16 %v462
    %v1811 = vunpack.c.l.b16 %v463
    %v1812 = vunpack.c.h.b16 %v463
    %v1813 = vunpack.c.l.b16 %v464
    %v1814 = vunpack.c.h.b16 %v464
    %v1815 = vunpack.c.l.b16 %v465
    %v1816 = vunpack.c.h.b16 %v465
    %v1817 = vunpack.c.l.b16 %v466
    %v1818 = vunpack.c.h.b16 %v466
    %v1819 = vunpack.c.l.b16 %v467
    %v1820 = vunpack.c.h.b16 %v467
    %v1821 = vunpack.c.l.b16 %v468
    %v1822 = vunpack.c.h.b16 %v468
    %v1823 = vunpack.c.l.b16 %v469
    %v1824 = vunpack.c.h.b16 %v469
    %v1825 = vunpack.c.l.b16 %v470
    %v1826 = vunpack.c.h.b16 %v470
    %v1827 = vunpack.c.l.b16 %v471
    %v1828 = vunpack.c.h.b16 %v471
    %v1829 = vunpack.c.l.b16 %v472
    %v1830 = vunpack.c.h.b16 %v472
    %v1831 = vunpack.c.l.b16 %v473
    %v1832 = vunpack.c.h.b16 %v473
    %v1833 = vunpack.c.l.b16 %v474
    %v1834 = vunpack.c.h.b16 %v474
    %v1835 = vunpack.c.l.b16 %v475
    %v1836 = vunpack.c.h.b16 %v475
    %v1837 = vunpack.c.l.b16 %v476
    %v1838 = vunpack.c.h.b16 %v476
    %v1839 = vunpack.c.l.b16 %v477
    %v1840 = vunpack.c.h.b16 %v477
    %v1841 = vunpack.c.l.b16 %v478
    %v1842 = vunpack.c.h.b16 %v478
    %v1843 = vunpack.c.l.b16 %v479
    %v1844 = vunpack.c.h.b16 %v479
    %v1845 = vunpack.c.l.b16 %v480
    %v1846 = vunpack.c.h.b16 %v480
    %v1847 = vunpack.c.l.b16 %v481
    %v1848 = vunpack.c.h.b16 %v481
    %v1849 = vunpack.c.l.b16 %v482
    %v1850 = vunpack.c.h.b16 %v482
    %v1851 = vunpack.c.l.b16 %v483
    %v1852 = vunpack.c.h.b16 %v483
    %v1853 = vunpack.c.l.b16 %v484
    %v1854 = vunpack.c.h.b16 %v484
    %v1855 = vunpack.c.l.b16 %v485
    %v1856 = vunpack.c.h.b16 %v485
    %v1857 = vunpack.c.l.b16 %v486
    %v1858 = vunpack.c.h.b16 %v486
    %v1859 = vunpack.c.l.b16 %v487
    %v1860 = vunpack.c.h.b16 %v487
    %v1861 = vunpack.c.l.b16 %v488
    %v1862 = vunpack.c.h.b16 %v488
    %v1863 = vunpack.c.l.b16 %v489
    %v1864 = vunpack.c.h.b16 %v489
    %v1865 = vunpack.c.l.b16 %v490
    %v1866 = vunpack.c.h.b16 %v490
    %v1867 = vunpack.c.l.b16 %v491
    %v1868 = vunpack.c.h.b16 %v491
    %v1869 = vunpack.c.l.b16 %v492
    %v1870 = vunpack.c.h.b16 %v492
    %v1871 = vunpack.c.l.b16 %v493
    %v1872 = vunpack.c.h.b16 %v493
    %v1873 = vunpack.c.l.b16 %v494
    %v1874 = vunpack.c.h.b16 %v494
    %v1875 = vunpack.c.l.b16 %v495
    %v1876 = vunpack.c.h.b16 %v495
    %v1877 = vunpack.c.l.b16 %v496
    %v1878 = vunpack.c.h.b16 %v496
    %v1879 = vunpack.c.l.b16 %v497
    %v1880 = vunpack.c.h.b16 %v497
    %v1881 = vunpack.c.l.b16 %v498
    %v1882 = vunpack.c.h.b16 %v498
    %v1883 = vunpack.c.l.b16 %v499
    %v1884 = vunpack.c.h.b16 %v499
    %v1885 = vunpack.c.l.b16 %v500
    %v1886 = vunpack.c.h.b16 %v500
    %v1887 = vunpack.c.l.b16 %v501
    %v1888 = vunpack.c.h.b16 %v501
    %v1889 = vunpack.c.l.b16 %v502
    %v1890 = vunpack.c.h.b16 %v502
    %v1891 = vunpack.c.l.b16 %v503
    %v1892 = vunpack.c.h.b16 %v503
    %v1893 = vunpack.c.l.b16 %v504
    %v1894 = vunpack.c.h.b16 %v504
    %v1895 = vunpack.c.l.b16 %v505
    %v1896 = vunpack.c.h.b16 %v505
    %v1897 = vunpack.c.l.b16 %v506
    %v1898 = vunpack.c.h.b16 %v506
    %v1899 = vunpack.c.l.b16 %v507
    %v1900 = vunpack.c.h.b16 %v507
    %v1901 = vunpack.c.l.b16 %v508
    %v1902 = vunpack.c.h.b16 %v508
    %v1903 = vunpack.c.l.b16 %v509
    %v1904 = vunpack.c.h.b16 %v509
    %v1905 = vunpack.c.l.b16 %v510
    %v1906 = vunpack.c.h.b16 %v510
    %v1907 = vunpack.c.l.b16 %v511
    %v1908 = vunpack.c.h.b16 %v511
    %v1909 = vunpack.c.l.b16 %v512
    %v1910 = vunpack.c.h.b16 %v512
    %v1911 = vunpack.c.l.b16 %v513
    %v1912 = vunpack.c.h.b16 %v513
    %v1913 = vunpack.c.l.b16 %v514
    %v1914 = vunpack.c.h.b16 %v514
    %v1915 = vunpack.c.l.b16 %v515
    %v1916 = vunpack.c.h.b16 %v515
    %v1917 = vunpack.c.l.b16 %v516
    %v1918 = vunpack.c.h.b16 %v516
    %v1919 = vunpack.c.l.b16 %v517
    %v1920 = vunpack.c.h.b16 %v517
    %v1921 = vunpack.c.l.b16 %v518
    %v1922 = vunpack.c.h.b16 %v518
    %v1923 = vunpack.c.l.b16 %v519
    %v1924 = vunpack.c.h.b16 %v519
    %v1925 = vunpack.c.l.b16 %v520
    %v1926 = vunpack.c.h.b16 %v520
    %v1927 = vunpack.c.l.b16 %v521
    %v1928 = vunpack.c.h.b16 %v521
    %v1929 = vunpack.c.l.b16 %v522
    %v1930 = vunpack.c.h.b16 %v522
    %v1931 = vunpack.c.l.b16 %v523
    %v1932 = vunpack.c.h.b16 %v523
    %v1933 = vunpack.c.l.b16 %v524
    %v1934 = vunpack.c.h.b16 %v524
    %v1935 = vunpack.c.l.b16 %v525
    %v1936 = vunpack.c.h.b16 %v525
    %v1937 = vunpack.c.l.b16 %v526
    %v1938 = vunpack.c.h.b16 %v526
    %v1939 = vunpack.c.l.b16 %v527
    %v1940 = vunpack.c.h.b16 %v527
    %v1941 = vunpack.c.l.b16 %v528
    %v1942 = vunpack.c.h.b16 %v528
    %v1943 = vunpack.c.l.b16 %v529
    %v1944 = vunpack.c.h.b16 %v529
    %v1945 = vunpack.c.l.b16 %v530
    %v1946 = vunpack.c.h.b16 %v530
    %v1947 = vunpack.c.l.b16 %v531
    %v1948 = vunpack.c.h.b16 %v531
    %v1949 = vunpack.c.l.b16 %v532
    %v1950 = vunpack.c.h.b16 %v532
    %v1951 = vunpack.c.l.b16 %v533
    %v1952 = vunpack.c.h.b16 %v533
    %v1953 = vunpack.c.l.b16 %v534
    %v1954 = vunpack.c.h.b16 %v534
    %v1955 = vunpack.c.l.b16 %v535
    %v1956 = vunpack.c.h.b16 %v535
    %v1957 = vunpack.c.l.b16 %v536
    %v1958 = vunpack.c.h.b16 %v536
    %v1959 = vunpack.c.l.b16 %v537
    %v1960 = vunpack.c.h.b16 %v537
    %v1961 = vunpack.c.l.b16 %v538
    %v1962 = vunpack.c.h.b16 %v538
    %v1963 = vunpack.c.l.b16 %v539
    %v1964 = vunpack.c.h.b16 %v539
    %v1965 = vunpack.c.l.b16 %v540
    %v1966 = vunpack.c.h.b16 %v540
    %v1967 = vunpack.c.l.b16 %v541
    %v1968 = vunpack.c.h.b16 %v541
    %v1969 = vunpack.c.l.b16 %v542
    %v1970 = vunpack.c.h.b16 %v542
    %v1971 = vunpack.c.l.b16 %v543
    %v1972 = vunpack.c.h.b16 %v543
    %v1973 = vunpack.c.l.b16 %v544
    %v1974 = vunpack.c.h.b16 %v544
    %v1975 = vunpack.c.l.b16 %v545
    %v1976 = vunpack.c.h.b16 %v545
    %v1977 = vunpack.c.l.b16 %v546
    %v1978 = vunpack.c.h.b16 %v546
    %v1979 = vunpack.c.l.b16 %v547
    %v1980 = vunpack.c.h.b16 %v547
    %v1981 = vunpack.c.l.b16 %v548
    %v1982 = vunpack.c.h.b16 %v548
    %v1983 = vunpack.c.l.b16 %v549
    %v1984 = vunpack.c.h.b16 %v549
    %v1985 = vunpack.c.l.b16 %v550
    %v1986 = vunpack.c.h.b16 %v550
    %v1987 = vunpack.c.l.b16 %v551
    %v1988 = vunpack.c.h.b16 %v551
    %v1989 = vunpack.c.l.b16 %v552
    %v1990 = vunpack.c.h.b16 %v552
    %v1991 = vunpack.c.l.b16 %v553
    %v1992 = vunpack.c.h.b16 %v553
    %v1993 = vunpack.c.l.b16 %v554
    %v1994 = vunpack.c.h.b16 %v554
    %v1995 = vunpack.c.l.b16 %v555
    %v1996 = vunpack.c.h.b16 %v555
    %v1997 = vunpack.c.l.b16 %v556
    %v1998 = vunpack.c.h.b16 %v556
    %v1999 = vunpack.c.l.b16 %v557
    %v2000 = vunpack.c.h.b16 %v557
    %v2001 = vunpack.c.l.b16 %v558
    %v2002 = vunpack.c.h.b16 %v558
    %v2003 = vunpack.c.l.b16 %v559
    %v2004 = vunpack.c.h.b16 %v559
    %v2005 = vunpack.c.l.b16 %v560
    %v2006 = vunpack.c.h.b16 %v560
    %v2007 = vunpack.c.l.b16 %v561
    %v2008 = vunpack.c.h.b16 %v561
    %v2009 = vunpack.c.l.b16 %v562
    %v2010 = vunpack.c.h.b16 %v562
    %v2011 = vunpack.c.l.b16 %v563
    %v2012 = vunpack.c.h.b16 %v563
    %v2013 = vunpack.c.l.b16 %v564
    %v2014 = vunpack.c.h.b16 %v564
    %v2015 = vunpack.c.l.b16 %v565
    %v2016 = vunpack.c.h.b16 %v565
    %v2017 = vunpack.c.l.b16 %v566
    %v2018 = vunpack.c.h.b16 %v566
    %v2019 = vunpack.c.l.b16 %v567
    %v2020 = vunpack.c.h.b16 %v567
    %v2021 = vunpack.c.l.b16 %v568
    %v2022 = vunpack.c.h.b16 %v568
    %v2023 = vunpack.c.l.b16 %v569
    %v2024 = vunpack.c.h.b16 %v569
    %v2025 = vunpack.c.l.b16 %v570
    %v2026 = vunpack.c.h.b16 %v570
    %v2027 = vunpack.c.l.b16 %v571
    %v2028 = vunpack.c.h.b16 %v571
    %v2029 = vunpack.c.l.b16 %v572
    %v2030 = vunpack.c.h.b16 %v572
    %v2031 = vunpack.c.l.b16 %v573
    %v2032 = vunpack.c.h.b16 %v573
    %v2033 = vunpack.c.l.b16 %v574
    %v2034 = vunpack.c.h.b16 %v574
    %v2035 = vunpack.c.l.b16 %v575
    %v2036 = vunpack.c.h.b16 %v575
    %v2037 = vunpack.c.l.b16 %v576
    %v2038 = vunpack.c.h.b16 %v576
    %v2039 = vunpack.c.l.b16 %v577
    %v2040 = vunpack.c.h.b16 %v577
    %v2041 = vunpack.c.l.b16 %v578
    %v2042 = vunpack.c.h.b16 %v578
    %v2043 = vunpack.c.l.b16 %v579
    %v2044 = vunpack.c.h.b16 %v579
    %v2045 = vunpack.c.l.b16 %v580
    %v2046 = vunpack.c.h.b16 %v580
    %v2047 = vunpack.c.l.b16 %v581
    %v2048 = vunpack.c.h.b16 %v581
    %v2049 = vunpack.c.l.b16 %v582
    %v2050 = vunpack.c.h.b16 %v582
    %v2051 = vunpack.c.l.b16 %v583
    %v2052 = vunpack.c.h.b16 %v583
    %v2053 = vunpack.c.l.b16 %v584
    %v2054 = vunpack.c.h.b16 %v584
    %v2055 = vunpack.c.l.b16 %v585
    %v2056 = vunpack.c.h.b16 %v585
    %v2057 = vunpack.c.l.b16 %v586
    %v2058 = vunpack.c.h.b16 %v586
    %v2059 = vunpack.c.l.b16 %v587
    %v2060 = vunpack.c.h.b16 %v587
    %v2061 = vunpack.c.l.b16 %v588
    %v2062 = vunpack.c.h.b16 %v588
    %v2063 = vunpack.c.l.b16 %v589
    %v2064 = vunpack.c.h.b16 %v589
    %v2065 = vunpack.c.l.b16 %v590
    %v2066 = vunpack.c.h.b16 %v590
    %v2067 = vunpack.c.l.b16 %v591
    %v2068 = vunpack.c.h.b16 %v591
    %v2069 = vunpack.c.l.b16 %v592
    %v2070 = vunpack.c.h.b16 %v592
    %v2071 = vunpack.c.l.b16 %v593
    %v2072 = vunpack.c.h.b16 %v593
    %v2073 = vunpack.c.l.b16 %v594
    %v2074 = vunpack.c.h.b16 %v594
    %v2075 = vunpack.c.l.b16 %v595
    %v2076 = vunpack.c.h.b16 %v595
    %v2077 = vunpack.c.l.b16 %v596
    %v2078 = vunpack.c.h.b16 %v596
    %v2079 = vunpack.c.l.b16 %v597
    %v2080 = vunpack.c.h.b16 %v597
    %v2081 = vunpack.c.l.b16 %v598
    %v2082 = vunpack.c.h.b16 %v598
    %v2083 = vunpack.c.l.b16 %v599
    %v2084 = vunpack.c.h.b16 %v599
    %v2085 = vunpack.c.l.b16 %v600
    %v2086 = vunpack.c.h.b16 %v600
    %v2087 = vunpack.c.l.b16 %v601
    %v2088 = vunpack.c.h.b16 %v601
    %v2089 = vunpack.c.l.b16 %v602
    %v2090 = vunpack.c.h.b16 %v602
    %v2091 = vunpack.c.l.b16 %v603
    %v2092 = vunpack.c.h.b16 %v603
    %v2093 = vunpack.c.l.b16 %v604
    %v2094 = vunpack.c.h.b16 %v604
    %v2095 = vunpack.c.l.b16 %v605
    %v2096 = vunpack.c.h.b16 %v605
    %v2097 = vunpack.c.l.b16 %v606
    %v2098 = vunpack.c.h.b16 %v606
    %v2099 = vunpack.c.l.b16 %v607
    %v2100 = vunpack.c.h.b16 %v607
    %v2101 = vunpack.c.l.b16 %v608
    %v2102 = vunpack.c.h.b16 %v608
    %v2103 = vunpack.c.l.b16 %v609
    %v2104 = vunpack.c.h.b16 %v609
    %v2105 = vunpack.c.l.b16 %v610
    %v2106 = vunpack.c.h.b16 %v610
    %v2107 = vunpack.c.l.b16 %v611
    %v2108 = vunpack.c.h.b16 %v611
    %v2109 = vunpack.c.l.b16 %v612
    %v2110 = vunpack.c.h.b16 %v612
    %v2111 = vunpack.c.l.b16 %v613
    %v2112 = vunpack.c.h.b16 %v613
    %v2113 = vunpack.c.l.b16 %v614
    %v2114 = vunpack.c.h.b16 %v614
    %v2115 = vunpack.c.l.b16 %v615
    %v2116 = vunpack.c.h.b16 %v615
    %v2117 = vunpack.c.l.b16 %v616
    %v2118 = vunpack.c.h.b16 %v616
    %v2119 = vunpack.c.l.b16 %v617
    %v2120 = vunpack.c.h.b16 %v617
    %v2121 = vunpack.c.l.b16 %v618
    %v2122 = vunpack.c.h.b16 %v618
    %v2123 = vunpack.c.l.b16 %v619
    %v2124 = vunpack.c.h.b16 %v619
    %v2125 = vunpack.c.l.b16 %v620
    %v2126 = vunpack.c.h.b16 %v620
    %v2127 = vunpack.c.l.b16 %v621
    %v2128 = vunpack.c.h.b16 %v621
    %v2129 = vunpack.c.l.b16 %v622
    %v2130 = vunpack.c.h.b16 %v622
    %v2131 = vunpack.c.l.b16 %v623
    %v2132 = vunpack.c.h.b16 %v623
    %v2133 = vunpack.c.l.b16 %v624
    %v2134 = vunpack.c.h.b16 %v624
    %v2135 = vunpack.c.l.b16 %v625
    %v2136 = vunpack.c.h.b16 %v625
    %v2137 = vunpack.c.l.b16 %v626
    %v2138 = vunpack.c.h.b16 %v626
    %v2139 = vunpack.c.l.b16 %v627
    %v2140 = vunpack.c.h.b16 %v627
    %v2141 = vunpack.c.l.b16 %v628
    %v2142 = vunpack.c.h.b16 %v628
    %v2143 = vunpack.c.l.b16 %v629
    %v2144 = vunpack.c.h.b16 %v629
    %v2145 = vunpack.c.l.b16 %v630
    %v2146 = vunpack.c.h.b16 %v630
    %v2147 = vunpack.c.l.b16 %v631
    %v2148 = vunpack.c.h.b16 %v631
    %v2149 = vunpack.c.l.b16 %v632
    %v2150 = vunpack.c.h.b16 %v632
    %v2151 = vunpack.c.l.b16 %v633
    %v2152 = vunpack.c.h.b16 %v633
    %v2153 = vunpack.c.l.b16 %v634
    %v2154 = vunpack.c.h.b16 %v634
    %v2155 = vunpack.c.l.b16 %v635
    %v2156 = vunpack.c.h.b16 %v635
    %v2157 = vunpack.c.l.b16 %v636
    %v2158 = vunpack.c.h.b16 %v636
    %v2159 = vunpack.c.l.b16 %v637
    %v2160 = vunpack.c.h.b16 %v637
    %v2161 = vunpack.c.l.b16 %v638
    %v2162 = vunpack.c.h.b16 %v638
    %v2163 = vunpack.c.l.b16 %v639
    %v2164 = vunpack.c.h.b16 %v639
    %v2165 = vunpack.c.l.b16 %v640
    %v2166 = vunpack.c.h.b16 %v640
    %v2167 = vunpack.c.l.b16 %v641
    %v2168 = vunpack.c.h.b16 %v641
    %v2169 = vunpack.c.l.b16 %v642
    %v2170 = vunpack.c.h.b16 %v642
    %v2171 = vunpack.c.l.b16 %v643
    %v2172 = vunpack.c.h.b16 %v643
    %v2173 = vunpack.c.l.b16 %v644
    %v2174 = vunpack.c.h.b16 %v644
    %v2175 = vunpack.c.l.b16 %v645
    %v2176 = vunpack.c.h.b16 %v645
    %v2177 = vunpack.c.l.b16 %v646
    %v2178 = vunpack.c.h.b16 %v646
    %v2179 = vunpack.c.l.b16 %v647
    %v2180 = vunpack.c.h.b16 %v647
    %v2181 = vunpack.c.l.b16 %v648
    %v2182 = vunpack.c.h.b16 %v648
    %v2183 = vunpack.c.l.b16 %v649
    %v2184 = vunpack.c.h.b16 %v649
    %v2185 = vunpack.c.l.b16 %v650
    %v2186 = vunpack.c.h.b16 %v650
    %v2187 = vunpack.c.l.b16 %v651
    %v2188 = vunpack.c.h.b16 %v651
    %v2189 = vunpack.c.l.b16 %v652
    %v2190 = vunpack.c.h.b16 %v652
    %v2191 = vunpack.c.l.b16 %v653
    %v2192 = vunpack.c.h.b16 %v653
    %v2193 = vunpack.c.l.b16 %v654
    %v2194 = vunpack.c.h.b16 %v654
    %v2195 = vunpack.c.l.b16 %v655
    %v2196 = vunpack.c.h.b16 %v655
    %v2197 = vunpack.c.l.b16 %v656
    %v2198 = vunpack.c.h.b16 %v656
    %v2199 = vunpack.c.l.b16 %v657
    %v2200 = vunpack.c.h.b16 %v657
    %v2201 = vunpack.c.l.b16 %v658
    %v2202 = vunpack.c.h.b16 %v658
    %v2203 = vunpack.c.l.b16 %v659
    %v2204 = vunpack.c.h.b16 %v659
    %v2205 = vunpack.c.l.b16 %v660
    %v2206 = vunpack.c.h.b16 %v660
    %v2207 = vunpack.c.l.b16 %v661
    %v2208 = vunpack.c.h.b16 %v661
    %v2209 = vunpack.c.l.b16 %v662
    %v2210 = vunpack.c.h.b16 %v662
    %v2211 = vunpack.c.l.b16 %v663
    %v2212 = vunpack.c.h.b16 %v663
    %v2213 = vunpack.c.l.b16 %v664
    %v2214 = vunpack.c.h.b16 %v664
    %v2215 = vunpack.c.l.b16 %v665
    %v2216 = vunpack.c.h.b16 %v665
    %v2217 = vunpack.c.l.b16 %v666
    %v2218 = vunpack.c.h.b16 %v666
    %v2219 = vunpack.c.l.b16 %v667
    %v2220 = vunpack.c.h.b16 %v667
    %v2221 = vunpack.c.l.b16 %v668
    %v2222 = vunpack.c.h.b16 %v668
    %v2223 = vunpack.c.l.b16 %v669
    %v2224 = vunpack.c.h.b16 %v669
    %v2225 = vunpack.c.l.b16 %v670
    %v2226 = vunpack.c.h.b16 %v670
    %v2227 = vunpack.c.l.b16 %v671
    %v2228 = vunpack.c.h.b16 %v671
    %v2229 = vunpack.c.l.b16 %v672
    %v2230 = vunpack.c.h.b16 %v672
    %v2231 = vunpack.c.l.b16 %v673
    %v2232 = vunpack.c.h.b16 %v673
    %v2233 = vunpack.c.l.b16 %v674
    %v2234 = vunpack.c.h.b16 %v674
    %v2235 = vunpack.c.l.b16 %v675
    %v2236 = vunpack.c.h.b16 %v675
    %v2237 = vunpack.c.l.b16 %v676
    %v2238 = vunpack.c.h.b16 %v676
    %v2239 = vunpack.c.l.b16 %v677
    %v2240 = vunpack.c.h.b16 %v677
    %v2241 = vunpack.c.l.b16 %v678
    %v2242 = vunpack.c.h.b16 %v678
    %v2243 = vunpack.c.l.b16 %v679
    %v2244 = vunpack.c.h.b16 %v679
    %v2245 = vunpack.c.l.b16 %v680
    %v2246 = vunpack.c.h.b16 %v680
    %v2247 = vunpack.c.l.b16 %v681
    %v2248 = vunpack.c.h.b16 %v681
    %v2249 = vunpack.c.l.b16 %v682
    %v2250 = vunpack.c.h.b16 %v682
    %v2251 = vunpack.c.l.b16 %v683
    %v2252 = vunpack.c.h.b16 %v683
    %v2253 = vunpack.c.l.b16 %v684
    %v2254 = vunpack.c.h.b16 %v684
    %v2255 = vunpack.c.l.b16 %v685
    %v2256 = vunpack.c.h.b16 %v685
    %v2257 = vunpack.c.l.b16 %v686
    %v2258 = vunpack.c.h.b16 %v686
    %v2259 = vunpack.c.l.b16 %v687
    %v2260 = vunpack.c.h.b16 %v687
    %v2261 = vunpack.c.l.b16 %v688
    %v2262 = vunpack.c.h.b16 %v688
    %v2263 = vunpack.c.l.b16 %v689
    %v2264 = vunpack.c.h.b16 %v689
    %v2265 = vunpack.c.l.b16 %v690
    %v2266 = vunpack.c.h.b16 %v690
    %v2267 = vunpack.c.l.b16 %v691
    %v2268 = vunpack.c.h.b16 %v691
    %v2269 = vunpack.c.l.b16 %v692
    %v2270 = vunpack.c.h.b16 %v692
    %v2271 = vpack.c.b16 %v1255, %v1247
    %v2272 = vpack.c.b16 %v1256, %v1248
    %v2273 = vpack.c.b16 %v1257, %v1249
    %v2274 = vpack.c.b16 %v1258, %v1250
    %v2275 = vpack.c.b16 %v1259, %v1251
    %v2276 = vpack.c.b16 %v1260, %v1252
    %v2277 = vpack.c.b16 %v1261, %v1253
    %v2278 = vpack.c.b16 %v1262, %v1254
    %v2279 = vpack.c.b16 %v1271, %v1263
    %v2280 = vpack.c.b16 %v1272, %v1264
    %v2281 = vpack.c.b16 %v1273, %v1265
    %v2282 = vpack.c.b16 %v1274, %v1266
    %v2283 = vpack.c.b16 %v1275, %v1267
    %v2284 = vpack.c.b16 %v1276, %v1268
    %v2285 = vpack.c.b16 %v1277, %v1269
    %v2286 = vpack.c.b16 %v1278, %v1270
    %v2287 = vpack.c.b16 %v1287, %v1279
    %v2288 = vpack.c.b16 %v1288, %v1280
    %v2289 = vpack.c.b16 %v1289, %v1281
    %v2290 = vpack.c.b16 %v1290, %v1282
    %v2291 = vpack.c.b16 %v1291, %v1283
    %v2292 = vpack.c.b16 %v1292, %v1284
    %v2293 = vpack.c.b16 %v1293, %v1285
    %v2294 = vpack.c.b16 %v1294, %v1286
    %v2295 = vpack.c.b16 %v1303, %v1295
    %v2296 = vpack.c.b16 %v1304, %v1296
    %v2297 = vpack.c.b16 %v1305, %v1297
    %v2298 = vpack.c.b16 %v1306, %v1298
    %v2299 = vpack.c.b16 %v1307, %v1299
    %v2300 = vpack.c.b16 %v1308, %v1300
    %v2301 = vpack.c.b16 %v1309, %v1301
    %v2302 = vpack.c.b16 %v1310, %v1302
    %v2303 = vpack.c.b16 %v1319, %v1311
    %v2304 = vpack.c.b16 %v1320, %v1312
    %v2305 = vpack.c.b16 %v1321, %v1313
    %v2306 = vpack.c.b16 %v1322, %v1314
    %v2307 = vpack.c.b16 %v1323, %v1315
    %v2308 = vpack.c.b16 %v1324, %v1316
    %v2309 = vpack.c.b16 %v1325, %v1317
    %v2310 = vpack.c.b16 %v1326, %v1318
    %v2311 = vpack.c.b16 %v1335, %v1327
    %v2312 = vpack.c.b16 %v1336, %v1328
    %v2313 = vpack.c.b16 %v1337, %v1329
    %v2314 = vpack.c.b16 %v1338, %v1330
    %v2315 = vpack.c.b16 %v1339, %v1331
    %v2316 = vpack.c.b16 %v1340, %v1332
    %v2317 = vpack.c.b16 %v1341, %v1333
    %v2318 = vpack.c.b16 %v1342, %v1334
    %v2319 = vpack.c.b16 %v1351, %v1343
    %v2320 = vpack.c.b16 %v1352, %v1344
    %v2321 = vpack.c.b16 %v1353, %v1345
    %v2322 = vpack.c.b16 %v1354, %v1346
    %v2323 = vpack.c.b16 %v1355, %v1347
    %v2324 = vpack.c.b16 %v1356, %v1348
    %v2325 = vpack.c.b16 %v1357, %v1349
    %v2326 = vpack.c.b16 %v1358, %v1350
    %v2327 = vpack.c.b16 %v1367, %v1359
    %v2328 = vpack.c.b16 %v1368, %v1360
    %v2329 = vpack.c.b16 %v1369, %v1361
    %v2330 = vpack.c.b16 %v1370, %v1362
    %v2331 = vpack.c.b16 %v1371, %v1363
    %v2332 = vpack.c.b16 %v1372, %v1364
    %v2333 = vpack.c.b16 %v1373, %v1365
    %v2334 = vpack.c.b16 %v1374, %v1366
    %v2335 = vpack.c.b16 %v1383, %v1375
    %v2336 = vpack.c.b16 %v1384, %v1376
    %v2337 = vpack.c.b16 %v1385, %v1377
    %v2338 = vpack.c.b16 %v1386, %v1378
    %v2339 = vpack.c.b16 %v1387, %v1379
    %v2340 = vpack.c.b16 %v1388, %v1380
    %v2341 = vpack.c.b16 %v1389, %v1381
    %v2342 = vpack.c.b16 %v1390, %v1382
    %v2343 = vpack.c.b16 %v1399, %v1391
    %v2344 = vpack.c.b16 %v1400, %v1392
    %v2345 = vpack.c.b16 %v1401, %v1393
    %v2346 = vpack.c.b16 %v1402, %v1394
    %v2347 = vpack.c.b16 %v1403, %v1395
    %v2348 = vpack.c.b16 %v1404, %v1396
    %v2349 = vpack.c.b16 %v1405, %v1397
    %v2350 = vpack.c.b16 %v1406, %v1398
    %v2351 = vpack.c.b16 %v1415, %v1407
    %v2352 = vpack.c.b16 %v1416, %v1408
    %v2353 = vpack.c.b16 %v1417, %v1409
    %v2354 = vpack.c.b16 %v1418, %v1410
    %v2355 = vpack.c.b16 %v1419, %v1411
    %v2356 = vpack.c.b16 %v1420, %v1412
    %v2357 = vpack.c.b16 %v1421, %v1413
    %v2358 = vpack.c.b16 %v1422, %v1414
    %v2359 = vpack.c.b16 %v1431, %v1423
    %v2360 = vpack.c.b16 %v1432, %v1424
    %v2361 = vpack.c.b16 %v1433, %v1425
    %v2362 = vpack.c.b16 %v1434, %v1426
    %v2363 = vpack.c.b16 %v1435, %v1427
    %v2364 = vpack.c.b16 %v1436, %v1428
    %v2365 = vpack.c.b16 %v1437, %v1429
    %v2366 = vpack.c.b16 %v1438, %v1430
    %v2367 = vpack.c.b16 %v1447, %v1439
    %v2368 = vpack.c.b16 %v1448, %v1440
    %v2369 = vpack.c.b16 %v1449, %v1441
    %v2370 = vpack.c.b16 %v1450, %v1442
    %v2371 = vpack.c.b16 %v1451, %v1443
    %v2372 = vpack.c.b16 %v1452, %v1444
    %v2373 = vpack.c.b16 %v1453, %v1445
    %v2374 = vpack.c.b16 %v1454, %v1446
    %v2375 = vpack.c.b16 %v1463, %v1455
    %v2376 = vpack.c.b16 %v1464, %v1456
    %v2377 = vpack.c.b16 %v1465, %v1457
    %v2378 = vpack.c.b16 %v1466, %v1458
    %v2379 = vpack.c.b16 %v1467, %v1459
    %v2380 = vpack.c.b16 %v1468, %v1460
    %v2381 = vpack.c.b16 %v1469, %v1461
    %v2382 = vpack.c.b16 %v1470, %v1462
    %v2383 = vpack.c.b16 %v1479, %v1471
    %v2384 = vpack.c.b16 %v1480, %v1472
    %v2385 = vpack.c.b16 %v1481, %v1473
    %v2386 = vpack.c.b16 %v1482, %v1474
    %v2387 = vpack.c.b16 %v1483, %v1475
    %v2388 = vpack.c.b16 %v1484, %v1476
    %v2389 = vpack.c.b16 %v1485, %v1477
    %v2390 = vpack.c.b16 %v1486, %v1478
    %v2391 = vpack.c.b16 %v1495, %v1487
    %v2392 = vpack.c.b16 %v1496, %v1488
    %v2393 = vpack.c.b16 %v1497, %v1489
    %v2394 = vpack.c.b16 %v1498, %v1490
    %v2395 = vpack.c.b16 %v1499, %v1491
    %v2396 = vpack.c.b16 %v1500, %v1492
    %v2397 = vpack.c.b16 %v1501, %v1493
    %v2398 = vpack.c.b16 %v1502, %v1494
    %v2399 = vpack.c.b16 %v1511, %v1503
    %v2400 = vpack.c.b16 %v1512, %v1504
    %v2401 = vpack.c.b16 %v1513, %v1505
    %v2402 = vpack.c.b16 %v1514, %v1506
    %v2403 = vpack.c.b16 %v1515, %v1507
    %v2404 = vpack.c.b16 %v1516, %v1508
    %v2405 = vpack.c.b16 %v1517, %v1509
    %v2406 = vpack.c.b16 %v1518, %v1510
    %v2407 = vpack.c.b16 %v1527, %v1519
    %v2408 = vpack.c.b16 %v1528, %v1520
    %v2409 = vpack.c.b16 %v1529, %v1521
    %v2410 = vpack.c.b16 %v1530, %v1522
    %v2411 = vpack.c.b16 %v1531, %v1523
    %v2412 = vpack.c.b16 %v1532, %v1524
    %v2413 = vpack.c.b16 %v1533, %v1525
    %v2414 = vpack.c.b16 %v1534, %v1526
    %v2415 = vpack.c.b16 %v1543, %v1535
    %v2416 = vpack.c.b16 %v1544, %v1536
    %v2417 = vpack.c.b16 %v1545, %v1537
    %v2418 = vpack.c.b16 %v1546, %v1538
    %v2419 = vpack.c.b16 %v1547, %v1539
    %v2420 = vpack.c.b16 %v1548, %v1540
    %v2421 = vpack.c.b16 %v1549, %v1541
    %v2422 = vpack.c.b16 %v1550, %v1542
    %v2423 = vpack.c.b16 %v1559, %v1551
    %v2424 = vpack.c.b16 %v1560, %v1552
    %v2425 = vpack.c.b16 %v1561, %v1553
    %v2426 = vpack.c.b16 %v1562, %v1554
    %v2427 = vpack.c.b16 %v1563, %v1555
    %v2428 = vpack.c.b16 %v1564, %v1556
    %v2429 = vpack.c.b16 %v1565, %v1557
    %v2430 = vpack.c.b16 %v1566, %v1558
    %v2431 = vpack.c.b16 %v1575, %v1567
    %v2432 = vpack.c.b16 %v1576, %v1568
    %v2433 = vpack.c.b16 %v1577, %v1569
    %v2434 = vpack.c.b16 %v1578, %v1570
    %v2435 = vpack.c.b16 %v1579, %v1571
    %v2436 = vpack.c.b16 %v1580, %v1572
    %v2437 = vpack.c.b16 %v1581, %v1573
    %v2438 = vpack.c.b16 %v1582, %v1574
    %v2439 = vpack.c.b16 %v1591, %v1583
    %v2440 = vpack.c.b16 %v1592, %v1584
    %v2441 = vpack.c.b16 %v1593, %v1585
    %v2442 = vpack.c.b16 %v1594, %v1586
    %v2443 = vpack.c.b16 %v1595, %v1587
    %v2444 = vpack.c.b16 %v1596, %v1588
    %v2445 = vpack.c.b16 %v1597, %v1589
    %v2446 = vpack.c.b16 %v1598, %v1590
    %v2447 = vpack.c.b16 %v1607, %v1599
    %v2448 = vpack.c.b16 %v1608, %v1600
    %v2449 = vpack.c.b16 %v1609, %v1601
    %v2450 = vpack.c.b16 %v1610, %v1602
    %v2451 = vpack.c.b16 %v1611, %v1603
    %v2452 = vpack.c.b16 %v1612, %v1604
    %v2453 = vpack.c.b16 %v1613, %v1605
    %v2454 = vpack.c.b16 %v1614, %v1606
    %v2455 = vpack.c.b16 %v1623, %v1615
    %v2456 = vpack.c.b16 %v1624, %v1616
    %v2457 = vpack.c.b16 %v1625, %v1617
    %v2458 = vpack.c.b16 %v1626, %v1618
    %v2459 = vpack.c.b16 %v1627, %v1619
    %v2460 = vpack.c.b16 %v1628, %v1620
    %v2461 = vpack.c.b16 %v1629, %v1621
    %v2462 = vpack.c.b16 %v1630, %v1622
    %v2463 = vpack.c.b16 %v1639, %v1631
    %v2464 = vpack.c.b16 %v1640, %v1632
    %v2465 = vpack.c.b16 %v1641, %v1633
    %v2466 = vpack.c.b16 %v1642, %v1634
    %v2467 = vpack.c.b16 %v1643, %v1635
    %v2468 = vpack.c.b16 %v1644, %v1636
    %v2469 = vpack.c.b16 %v1645, %v1637
    %v2470 = vpack.c.b16 %v1646, %v1638
    %v2471 = vpack.c.b16 %v1655, %v1647
    %v2472 = vpack.c.b16 %v1656, %v1648
    %v2473 = vpack.c.b16 %v1657, %v1649
    %v2474 = vpack.c.b16 %v1658, %v1650
    %v2475 = vpack.c.b16 %v1659, %v1651
    %v2476 = vpack.c.b16 %v1660, %v1652
    %v2477 = vpack.c.b16 %v1661, %v1653
    %v2478 = vpack.c.b16 %v1662, %v1654
    %v2479 = vpack.c.b16 %v1671, %v1663
    %v2480 = vpack.c.b16 %v1672, %v1664
    %v2481 = vpack.c.b16 %v1673, %v1665
    %v2482 = vpack.c.b16 %v1674, %v1666
    %v2483 = vpack.c.b16 %v1675, %v1667
    %v2484 = vpack.c.b16 %v1676, %v1668
    %v2485 = vpack.c.b16 %v1677, %v1669
    %v2486 = vpack.c.b16 %v1678, %v1670
    %v2487 = vpack.c.b16 %v1687, %v1679
    %v2488 = vpack.c.b16 %v1688, %v1680
    %v2489 = vpack.c.b16 %v1689, %v1681
    %v2490 = vpack.c.b16 %v1690, %v1682
    %v2491 = vpack.c.b16 %v1691, %v1683
    %v2492 = vpack.c.b16 %v1692, %v1684
    %v2493 = vpack.c.b16 %v1693, %v1685
    %v2494 = vpack.c.b16 %v1694, %v1686
    %v2495 = vpack.c.b16 %v1703, %v1695
    %v2496 = vpack.c.b16 %v1704, %v1696
    %v2497 = vpack.c.b16 %v1705, %v1697
    %v2498 = vpack.c.b16 %v1706, %v1698
    %v2499 = vpack.c.b16 %v1707, %v1699
    %v2500 = vpack.c.b16 %v1708, %v1700
    %v2501 = vpack.c.b16 %v1709, %v1701
    %v2502 = vpack.c.b16 %v1710, %v1702
    %v2503 = vpack.c.b16 %v1719, %v1711
    %v2504 = vpack.c.b16 %v1720, %v1712
    %v2505 = vpack.c.b16 %v1721, %v1713
    %v2506 = vpack.c.b16 %v1722, %v1714
    %v2507 = vpack.c.b16 %v1723, %v1715
    %v2508 = vpack.c.b16 %v1724, %v1716
    %v2509 = vpack.c.b16 %v1725, %v1717
    %v2510 = vpack.c.b16 %v1726, %v1718
    %v2511 = vpack.c.b16 %v1735, %v1727
    %v2512 = vpack.c.b16 %v1736, %v1728
    %v2513 = vpack.c.b16 %v1737, %v1729
    %v2514 = vpack.c.b16 %v1738, %v1730
    %v2515 = vpack.c.b16 %v1739, %v1731
    %v2516 = vpack.c.b16 %v1740, %v1732
    %v2517 = vpack.c.b16 %v1741, %v1733
    %v2518 = vpack.c.b16 %v1742, %v1734
    %v2519 = vpack.c.b16 %v1751, %v1743
    %v2520 = vpack.c.b16 %v1752, %v1744
    %v2521 = vpack.c.b16 %v1753, %v1745
    %v2522 = vpack.c.b16 %v1754, %v1746
    %v2523 = vpack.c.b16 %v1755, %v1747
    %v2524 = vpack.c.b16 %v1756, %v1748
    %v2525 = vpack.c.b16 %v1757, %v1749
    %v2526 = vpack.c.b16 %v1758, %v1750
    %v2527 = vpack.c.b16 %v1767, %v1759
    %v2528 = vpack.c.b16 %v1768, %v1760
    %v2529 = vpack.c.b16 %v1769, %v1761
    %v2530 = vpack.c.b16 %v1770, %v1762
    %v2531 = vpack.c.b16 %v1771, %v1763
    %v2532 = vpack.c.b16 %v1772, %v1764
    %v2533 = vpack.c.b16 %v1773, %v1765
    %v2534 = vpack.c.b16 %v1774, %v1766
    %v2535 = vpack.c.b16 %v1783, %v1775
    %v2536 = vpack.c.b16 %v1784, %v1776
    %v2537 = vpack.c.b16 %v1785, %v1777
    %v2538 = vpack.c.b16 %v1786, %v1778
    %v2539 = vpack.c.b16 %v1787, %v1779
    %v2540 = vpack.c.b16 %v1788, %v1780
    %v2541 = vpack.c.b16 %v1789, %v1781
    %v2542 = vpack.c.b16 %v1790, %v1782
    %v2543 = vpack.c.b16 %v1799, %v1791
    %v2544 = vpack.c.b16 %v1800, %v1792
    %v2545 = vpack.c.b16 %v1801, %v1793
    %v2546 = vpack.c.b16 %v1802, %v1794
    %v2547 = vpack.c.b16 %v1803, %v1795
    %v2548 = vpack.c.b16 %v1804, %v1796
    %v2549 = vpack.c.b16 %v1805, %v1797
    %v2550 = vpack.c.b16 %v1806, %v1798
    %v2551 = vpack.c.b16 %v1815, %v1807
    %v2552 = vpack.c.b16 %v1816, %v1808
    %v2553 = vpack.c.b16 %v1817, %v1809
    %v2554 = vpack.c.b16 %v1818, %v1810
    %v2555 = vpack.c.b16 %v1819, %v1811
    %v2556 = vpack.c.b16 %v1820, %v1812
    %v2557 = vpack.c.b16 %v1821, %v1813
    %v2558 = vpack.c.b16 %v1822, %v1814
    %v2559 = vpack.c.b16 %v1831, %v1823
    %v2560 = vpack.c.b16 %v1832, %v1824
    %v2561 = vpack.c.b16 %v1833, %v1825
    %v2562 = vpack.c.b16 %v1834, %v1826
    %v2563 = vpack.c.b16 %v1835, %v1827
    %v2564 = vpack.c.b16 %v1836, %v1828
    %v2565 = vpack.c.b16 %v1837, %v1829
    %v2566 = vpack.c.b16 %v1838, %v1830
    %v2567 = vpack.c.b16 %v1847, %v1839
    %v2568 = vpack.c.b16 %v1848, %v1840
    %v2569 = vpack.c.b16 %v1849, %v1841
    %v2570 = vpack.c.b16 %v1850, %v1842
    %v2571 = vpack.c.b16 %v1851, %v1843
    %v2572 = vpack.c.b16 %v1852, %v1844
    %v2573 = vpack.c.b16 %v1853, %v1845
    %v2574 = vpack.c.b16 %v1854, %v1846
    %v2575 = vpack.c.b16 %v1863, %v1855
    %v2576 = vpack.c.b16 %v1864, %v1856
    %v2577 = vpack.c.b16 %v1865, %v1857
    %v2578 = vpack.c.b16 %v1866, %v1858
    %v2579 = vpack.c.b16 %v1867, %v1859
    %v2580 = vpack.c.b16 %v1868, %v1860
    %v2581 = vpack.c.b16 %v1869, %v1861
    %v2582 = vpack.c.b16 %v1870, %v1862
    %v2583 = vpack.c.b16 %v1879, %v1871
    %v2584 = vpack.c.b16 %v1880, %v1872
    %v2585 = vpack.c.b16 %v1881, %v1873
    %v2586 = vpack.c.b16 %v1882, %v1874
    %v2587 = vpack.c.b16 %v1883, %v1875
    %v2588 = vpack.c.b16 %v1884, %v1876
    %v2589 = vpack.c.b16 %v1885, %v1877
    %v2590 = vpack.c.b16 %v1886, %v1878
    %v2591 = vpack.c.b16 %v1895, %v1887
    %v2592 = vpack.c.b16 %v1896, %v1888
    %v2593 = vpack.c.b16 %v1897, %v1889
    %v2594 = vpack.c.b16 %v1898, %v1890
    %v2595 = vpack.c.b16 %v1899, %v1891
    %v2596 = vpack.c.b16 %v1900, %v1892
    %v2597 = vpack.c.b16 %v1901, %v1893
    %v2598 = vpack.c.b16 %v1902, %v1894
    %v2599 = vpack.c.b16 %v1911, %v1903
    %v2600 = vpack.c.b16 %v1912, %v1904
    %v2601 = vpack.c.b16 %v1913, %v1905
    %v2602 = vpack.c.b16 %v1914, %v1906
    %v2603 = vpack.c.b16 %v1915, %v1907
    %v2604 = vpack.c.b16 %v1916, %v1908
    %v2605 = vpack.c.b16 %v1917, %v1909
    %v2606 = vpack.c.b16 %v1918, %v1910
    %v2607 = vpack.c.b16 %v1927, %v1919
    %v2608 = vpack.c.b16 %v1928, %v1920
    %v2609 = vpack.c.b16 %v1929, %v1921
    %v2610 = vpack.c.b16 %v1930, %v1922
    %v2611 = vpack.c.b16 %v1931, %v1923
    %v2612 = vpack.c.b16 %v1932, %v1924
    %v2613 = vpack.c.b16 %v1933, %v1925
    %v2614 = vpack.c.b16 %v1934, %v1926
    %v2615 = vpack.c.b16 %v1943, %v1935
    %v2616 = vpack.c.b16 %v1944, %v1936
    %v2617 = vpack.c.b16 %v1945, %v1937
    %v2618 = vpack.c.b16 %v1946, %v1938
    %v2619 = vpack.c.b16 %v1947, %v1939
    %v2620 = vpack.c.b16 %v1948, %v1940
    %v2621 = vpack.c.b16 %v1949, %v1941
    %v2622 = vpack.c.b16 %v1950, %v1942
    %v2623 = vpack.c.b16 %v1959, %v1951
    %v2624 = vpack.c.b16 %v1960, %v1952
    %v2625 = vpack.c.b16 %v1961, %v1953
    %v2626 = vpack.c.b16 %v1962, %v1954
    %v2627 = vpack.c.b16 %v1963, %v1955
    %v2628 = vpack.c.b16 %v1964, %v1956
    %v2629 = vpack.c.b16 %v1965, %v1957
    %v2630 = vpack.c.b16 %v1966, %v1958
    %v2631 = vpack.c.b16 %v1975, %v1967
    %v2632 = vpack.c.b16 %v1976, %v1968
    %v2633 = vpack.c.b16 %v1977, %v1969
    %v2634 = vpack.c.b16 %v1978, %v1970
    %v2635 = vpack.c.b16 %v1979, %v1971
    %v2636 = vpack.c.b16 %v1980, %v1972
    %v2637 = vpack.c.b16 %v1981, %v1973
    %v2638 = vpack.c.b16 %v1982, %v1974
    %v2639 = vpack.c.b16 %v1991, %v1983
    %v2640 = vpack.c.b16 %v1992, %v1984
    %v2641 = vpack.c.b16 %v1993, %v1985
    %v2642 = vpack.c.b16 %v1994, %v1986
    %v2643 = vpack.c.b16 %v1995, %v1987
    %v2644 = vpack.c.b16 %v1996, %v1988
    %v2645 = vpack.c.b16 %v1997, %v1989
    %v2646 = vpack.c.b16 %v1998, %v1990
    %v2647 = vpack.c.b16 %v2007, %v1999
    %v2648 = vpack.c.b16 %v2008, %v2000
    %v2649 = vpack.c.b16 %v2009, %v2001
    %v2650 = vpack.c.b16 %v2010, %v2002
    %v2651 = vpack.c.b16 %v2011, %v2003
    %v2652 = vpack.c.b16 %v2012, %v2004
    %v2653 = vpack.c.b16 %v2013, %v2005
    %v2654 = vpack.c.b16 %v2014, %v2006
    %v2655 = vpack.c.b16 %v2023, %v2015
    %v2656 = vpack.c.b16 %v2024, %v2016
    %v2657 = vpack.c.b16 %v2025, %v2017
    %v2658 = vpack.c.b16 %v2026, %v2018
    %v2659 = vpack.c.b16 %v2027, %v2019
    %v2660 = vpack.c.b16 %v2028, %v2020
    %v2661 = vpack.c.b16 %v2029, %v2021
    %v2662 = vpack.c.b16 %v2030, %v2022
    %v2663 = vpack.c.b16 %v2039, %v2031
    %v2664 = vpack.c.b16 %v2040, %v2032
    %v2665 = vpack.c.b16 %v2041, %v2033
    %v2666 = vpack.c.b16 %v2042, %v2034
    %v2667 = vpack.c.b16 %v2043, %v2035
    %v2668 = vpack.c.b16 %v2044, %v2036
    %v2669 = vpack.c.b16 %v2045, %v2037
    %v2670 = vpack.c.b16 %v2046, %v2038
    %v2671 = vpack.c.b16 %v2055, %v2047
    %v2672 = vpack.c.b16 %v2056, %v2048
    %v2673 = vpack.c.b16 %v2057, %v2049
    %v2674 = vpack.c.b16 %v2058, %v2050
    %v2675 = vpack.c.b16 %v2059, %v2051
    %v2676 = vpack.c.b16 %v2060, %v2052
    %v2677 = vpack.c.b16 %v2061, %v2053
    %v2678 = vpack.c.b16 %v2062, %v2054
    %v2679 = vpack.c.b16 %v2071, %v2063
    %v2680 = vpack.c.b16 %v2072, %v2064
    %v2681 = vpack.c.b16 %v2073, %v2065
    %v2682 = vpack.c.b16 %v2074, %v2066
    %v2683 = vpack.c.b16 %v2075, %v2067
    %v2684 = vpack.c.b16 %v2076, %v2068
    %v2685 = vpack.c.b16 %v2077, %v2069
    %v2686 = vpack.c.b16 %v2078, %v2070
    %v2687 = vpack.c.b16 %v2087, %v2079
    %v2688 = vpack.c.b16 %v2088, %v2080
    %v2689 = vpack.c.b16 %v2089, %v2081
    %v2690 = vpack.c.b16 %v2090, %v2082
    %v2691 = vpack.c.b16 %v2091, %v2083
    %v2692 = vpack.c.b16 %v2092, %v2084
    %v2693 = vpack.c.b16 %v2093, %v2085
    %v2694 = vpack.c.b16 %v2094, %v2086
    %v2695 = vpack.c.b16 %v2103, %v2095
    %v2696 = vpack.c.b16 %v2104, %v2096
    %v2697 = vpack.c.b16 %v2105, %v2097
    %v2698 = vpack.c.b16 %v2106, %v2098
    %v2699 = vpack.c.b16 %v2107, %v2099
    %v2700 = vpack.c.b16 %v2108, %v2100
    %v2701 = vpack.c.b16 %v2109, %v2101
    %v2702 = vpack.c.b16 %v2110, %v2102
    %v2703 = vpack.c.b16 %v2119, %v2111
    %v2704 = vpack.c.b16 %v2120, %v2112
    %v2705 = vpack.c.b16 %v2121, %v2113
    %v2706 = vpack.c.b16 %v2122, %v2114
    %v2707 = vpack.c.b16 %v2123, %v2115
    %v2708 = vpack.c.b16 %v2124, %v2116
    %v2709 = vpack.c.b16 %v2125, %v2117
    %v2710 = vpack.c.b16 %v2126, %v2118
    %v2711 = vpack.c.b16 %v2135, %v2127
    %v2712 = vpack.c.b16 %v2136, %v2128
    %v2713 = vpack.c.b16 %v2137, %v2129
    %v2714 = vpack.c.b16 %v2138, %v2130
    %v2715 = vpack.c.b16 %v2139, %v2131
    %v2716 = vpack.c.b16 %v2140, %v2132
    %v2717 = vpack.c.b16 %v2141, %v2133
    %v2718 = vpack.c.b16 %v2142, %v2134
    %v2719 = vpack.c.b16 %v2151, %v2143
    %v2720 = vpack.c.b16 %v2152, %v2144
    %v2721 = vpack.c.b16 %v2153, %v2145
    %v2722 = vpack.c.b16 %v2154, %v2146
    %v2723 = vpack.c.b16 %v2155, %v2147
    %v2724 = vpack.c.b16 %v2156, %v2148
    %v2725 = vpack.c.b16 %v2157, %v2149
    %v2726 = vpack.c.b16 %v2158, %v2150
    %v2727 = vpack.c.b16 %v2167, %v2159
    %v2728 = vpack.c.b16 %v2168, %v2160
    %v2729 = vpack.c.b16 %v2169, %v2161
    %v2730 = vpack.c.b16 %v2170, %v2162
    %v2731 = vpack.c.b16 %v2171, %v2163
    %v2732 = vpack.c.b16 %v2172, %v2164
    %v2733 = vpack.c.b16 %v2173, %v2165
    %v2734 = vpack.c.b16 %v2174, %v2166
    %v2735 = vpack.c.b16 %v2183, %v2175
    %v2736 = vpack.c.b16 %v2184, %v2176
    %v2737 = vpack.c.b16 %v2185, %v2177
    %v2738 = vpack.c.b16 %v2186, %v2178
    %v2739 = vpack.c.b16 %v2187, %v2179
    %v2740 = vpack.c.b16 %v2188, %v2180
    %v2741 = vpack.c.b16 %v2189, %v2181
    %v2742 = vpack.c.b16 %v2190, %v2182
    %v2743 = vpack.c.b16 %v2199, %v2191
    %v2744 = vpack.c.b16 %v2200, %v2192
    %v2745 = vpack.c.b16 %v2201, %v2193
    %v2746 = vpack.c.b16 %v2202, %v2194
    %v2747 = vpack.c.b16 %v2203, %v2195
    %v2748 = vpack.c.b16 %v2204, %v2196
    %v2749 = vpack.c.b16 %v2205, %v2197
    %v2750 = vpack.c.b16 %v2206, %v2198
    %v2751 = vpack.c.b16 %v2215, %v2207
    %v2752 = vpack.c.b16 %v2216, %v2208
    %v2753 = vpack.c.b16 %v2217, %v2209
    %v2754 = vpack.c.b16 %v2218, %v2210
    %v2755 = vpack.c.b16 %v2219, %v2211
    %v2756 = vpack.c.b16 %v2220, %v2212
    %v2757 = vpack.c.b16 %v2221, %v2213
    %v2758 = vpack.c.b16 %v2222, %v2214
    %v2759 = vpack.c.b16 %v2231, %v2223
    %v2760 = vpack.c.b16 %v2232, %v2224
    %v2761 = vpack.c.b16 %v2233, %v2225
    %v2762 = vpack.c.b16 %v2234, %v2226
    %v2763 = vpack.c.b16 %v2235, %v2227
    %v2764 = vpack.c.b16 %v2236, %v2228
    %v2765 = vpack.c.b16 %v2237, %v2229
    %v2766 = vpack.c.b16 %v2238, %v2230
    %v2767 = vpack.c.b16 %v2247, %v2239
    %v2768 = vpack.c.b16 %v2248, %v2240
    %v2769 = vpack.c.b16 %v2249, %v2241
    %v2770 = vpack.c.b16 %v2250, %v2242
    %v2771 = vpack.c.b16 %v2251, %v2243
    %v2772 = vpack.c.b16 %v2252, %v2244
    %v2773 = vpack.c.b16 %v2253, %v2245
    %v2774 = vpack.c.b16 %v2254, %v2246
    %v2775 = vpack.c.b16 %v2263, %v2255
    %v2776 = vpack.c.b16 %v2264, %v2256
    %v2777 = vpack.c.b16 %v2265, %v2257
    %v2778 = vpack.c.b16 %v2266, %v2258
    %v2779 = vpack.c.b16 %v2267, %v2259
    %v2780 = vpack.c.b16 %v2268, %v2260
    %v2781 = vpack.c.b16 %v2269, %v2261
    %v2782 = vpack.c.b16 %v2270, %v2262
    %3295 = vmatprep.subr.bf16.mxu0 %v2272
    %3296 = vmatpush1.bf16.msra.mxu0 %v2271
    %3297 = vmatprep.subr.bf16.mxu0 %v2280
    %3298 = vmatpush1.bf16.msra.mxu0 %v2279
    %3299 = vmatprep.subr.bf16.mxu0 %v2288
    %3300 = vmatpush1.bf16.msra.mxu0 %v2287
    %3301 = vmatprep.subr.bf16.mxu0 %v2296
    %3302 = vmatpush1.bf16.msra.mxu0 %v2295
    %3303 = vmatprep.subr.bf16.mxu0 %v2304
    %3304 = vmatpush1.bf16.msra.mxu0 %v2303
    %3305 = vmatprep.subr.bf16.mxu0 %v2312
    %3306 = vmatpush1.bf16.msra.mxu0 %v2311
    %3307 = vmatprep.subr.bf16.mxu0 %v2320
    %3308 = vmatpush1.bf16.msra.mxu0 %v2319
    %3309 = vmatprep.subr.bf16.mxu0 %v2328
    %3310 = vmatpush1.bf16.msra.mxu0 %v2327
    %3311 = vmatprep.subr.bf16.mxu0 %v2336
    %3312 = vmatpush1.bf16.msra.mxu0 %v2335
    %3313 = vmatprep.subr.bf16.mxu0 %v2344
    %3314 = vmatpush1.bf16.msra.mxu0 %v2343
    %3315 = vmatprep.subr.bf16.mxu0 %v2352
    %3316 = vmatpush1.bf16.msra.mxu0 %v2351
    %3317 = vmatprep.subr.bf16.mxu0 %v2360
    %3318 = vmatpush1.bf16.msra.mxu0 %v2359
    %3319 = vmatprep.subr.bf16.mxu0 %v2368
    %3320 = vmatpush1.bf16.msra.mxu0 %v2367
    %3321 = vmatprep.subr.bf16.mxu0 %v2376
    %3322 = vmatpush1.bf16.msra.mxu0 %v2375
    %3323 = vmatprep.subr.bf16.mxu0 %v2384
    %3324 = vmatpush1.bf16.msra.mxu0 %v2383
    %3325 = vmatprep.subr.bf16.mxu0 %v2392
    %3326 = vmatpush1.bf16.msra.mxu0 %v2391
    %3327 = vmatprep.mubr.bf16.mxu0 %v174
    %3328 = vmatmul.mubr.bf16.gmra.mrb[0].mxu0 %v173
    %v3329 = vpop.f32.mrb[0].mxu0
    %v3330 = vadd.f32 %v698, %v3329
    %v3331 = vpop.f32.mrb[0].mxu0
    %v3332 = vadd.f32 %v702, %v3331
    %v3333 = vpop.f32.mrb[0].mxu0
    %v3334 = vadd.f32 %v698, %v3333
    %v3335 = vpop.f32.mrb[0].mxu0
    %v3336 = vadd.f32 %v702, %v3335
    %3337 = vdwg.mxu0
    %3338 = vmatprep.subr.bf16.mxu0 %v2400
    %3339 = vmatpush1.bf16.msra.mxu0 %v2399
    %3340 = vmatprep.subr.bf16.mxu0 %v2408
    %3341 = vmatpush1.bf16.msra.mxu0 %v2407
    %3342 = vmatprep.subr.bf16.mxu0 %v2416
    %3343 = vmatpush1.bf16.msra.mxu0 %v2415
    %3344 = vmatprep.subr.bf16.mxu0 %v2424
    %3345 = vmatpush1.bf16.msra.mxu0 %v2423
    %3346 = vmatprep.subr.bf16.mxu0 %v2432
    %3347 = vmatpush1.bf16.msra.mxu0 %v2431
    %3348 = vmatprep.subr.bf16.mxu0 %v2440
    %3349 = vmatpush1.bf16.msra.mxu0 %v2439
    %3350 = vmatprep.subr.bf16.mxu0 %v2448
    %3351 = vmatpush1.bf16.msra.mxu0 %v2447
    %3352 = vmatprep.subr.bf16.mxu0 %v2456
    %3353 = vmatpush1.bf16.msra.mxu0 %v2455
    %3354 = vmatprep.subr.bf16.mxu0 %v2464
    %3355 = vmatpush1.bf16.msra.mxu0 %v2463
    %3356 = vmatprep.subr.bf16.mxu0 %v2472
    %3357 = vmatpush1.bf16.msra.mxu0 %v2471
    %3358 = vmatprep.subr.bf16.mxu0 %v2480
    %3359 = vmatpush1.bf16.msra.mxu0 %v2479
    %3360 = vmatprep.subr.bf16.mxu0 %v2488
    %3361 = vmatpush1.bf16.msra.mxu0 %v2487
    %3362 = vmatprep.subr.bf16.mxu0 %v2496
    %3363 = vmatpush1.bf16.msra.mxu0 %v2495
    %3364 = vmatprep.subr.bf16.mxu0 %v2504
    %3365 = vmatpush1.bf16.msra.mxu0 %v2503
    %3366 = vmatprep.subr.bf16.mxu0 %v2512
    %3367 = vmatpush1.bf16.msra.mxu0 %v2511
    %3368 = vmatprep.subr.bf16.mxu0 %v2520
    %3369 = vmatpush1.bf16.msra.mxu0 %v2519
    %3370 = vmatprep.mubr.bf16.mxu0 %v176
    %3371 = vmatmul.mubr.bf16.gmra.mrb[0].mxu0 %v175
    %v3372 = vpop.f32.mrb[0].mxu0
    %v3373 = vadd.f32 %v3330, %v3372
    %v3374 = vpop.f32.mrb[0].mxu0
    %v3375 = vadd.f32 %v3332, %v3374
    %v3376 = vpop.f32.mrb[0].mxu0
    %v3377 = vadd.f32 %v3334, %v3376
    %v3378 = vpop.f32.mrb[0].mxu0
    %v3379 = vadd.f32 %v3336, %v3378
    %3380 = vdwg.mxu0
    %3381 = vmatprep.subr.bf16.mxu0 %v2528
    %3382 = vmatpush1.bf16.msra.mxu0 %v2527
    %3383 = vmatprep.subr.bf16.mxu0 %v2536
    %3384 = vmatpush1.bf16.msra.mxu0 %v2535
    %3385 = vmatprep.subr.bf16.mxu0 %v2544
    %3386 = vmatpush1.bf16.msra.mxu0 %v2543
    %3387 = vmatprep.subr.bf16.mxu0 %v2552
    %3388 = vmatpush1.bf16.msra.mxu0 %v2551
    %3389 = vmatprep.subr.bf16.mxu0 %v2560
    %3390 = vmatpush1.bf16.msra.mxu0 %v2559
    %3391 = vmatprep.subr.bf16.mxu0 %v2568
    %3392 = vmatpush1.bf16.msra.mxu0 %v2567
    %3393 = vmatprep.subr.bf16.mxu0 %v2576
    %3394 = vmatpush1.bf16.msra.mxu0 %v2575
    %3395 = vmatprep.subr.bf16.mxu0 %v2584
    %3396 = vmatpush1.bf16.msra.mxu0 %v2583
    %3397 = vmatprep.subr.bf16.mxu0 %v2592
    %3398 = vmatpush1.bf16.msra.mxu0 %v2591
    %3399 = vmatprep.subr.bf16.mxu0 %v2600
    %3400 = vmatpush1.bf16.msra.mxu0 %v2599
    %3401 = vmatprep.subr.bf16.mxu0 %v2608
    %3402 = vmatpush1.bf16.msra.mxu0 %v2607
    %3403 = vmatprep.subr.bf16.mxu0 %v2616
    %3404 = vmatpush1.bf16.msra.mxu0 %v2615
    %3405 = vmatprep.subr.bf16.mxu0 %v2624
    %3406 = vmatpush1.bf16.msra.mxu0 %v2623
    %3407 = vmatprep.subr.bf16.mxu0 %v2632
    %3408 = vmatpush1.bf16.msra.mxu0 %v2631
    %3409 = vmatprep.subr.bf16.mxu0 %v2640
    %3410 = vmatpush1.bf16.msra.mxu0 %v2639
    %3411 = vmatprep.subr.bf16.mxu0 %v2648
    %3412 = vmatpush1.bf16.msra.mxu0 %v2647
    %3413 = vmatprep.mubr.bf16.mxu0 %v178
    %3414 = vmatmul.mubr.bf16.gmra.mrb[0].mxu0 %v177
    %v3415 = vpop.f32.mrb[0].mxu0
    %v3416 = vadd.f32 %v3373, %v3415
    %v3417 = vpop.f32.mrb[0].mxu0
    %v3418 = vadd.f32 %v3375, %v3417
    %v3419 = vpop.f32.mrb[0].mxu0
    %v3420 = vadd.f32 %v3377, %v3419
    %v3421 = vpop.f32.mrb[0].mxu0
    %v3422 = vadd.f32 %v3379, %v3421
    %3423 = vdwg.mxu0
    %3424 = vmatprep.subr.bf16.mxu0 %v2656
    %3425 = vmatpush1.bf16.msra.mxu0 %v2655
    %3426 = vmatprep.subr.bf16.mxu0 %v2664
    %3427 = vmatpush1.bf16.msra.mxu0 %v2663
    %3428 = vmatprep.subr.bf16.mxu0 %v2672
    %3429 = vmatpush1.bf16.msra.mxu0 %v2671
    %3430 = vmatprep.subr.bf16.mxu0 %v2680
    %3431 = vmatpush1.bf16.msra.mxu0 %v2679
    %3432 = vmatprep.subr.bf16.mxu0 %v2688
    %3433 = vmatpush1.bf16.msra.mxu0 %v2687
    %3434 = vmatprep.subr.bf16.mxu0 %v2696
    %3435 = vmatpush1.bf16.msra.mxu0 %v2695
    %3436 = vmatprep.subr.bf16.mxu0 %v2704
    %3437 = vmatpush1.bf16.msra.mxu0 %v2703
    %3438 = vmatprep.subr.bf16.mxu0 %v2712
    %3439 = vmatpush1.bf16.msra.mxu0 %v2711
    %3440 = vmatprep.subr.bf16.mxu0 %v2720
    %3441 = vmatpush1.bf16.msra.mxu0 %v2719
    %3442 = vmatprep.subr.bf16.mxu0 %v2728
    %3443 = vmatpush1.bf16.msra.mxu0 %v2727
    %3444 = vmatprep.subr.bf16.mxu0 %v2736
    %3445 = vmatpush1.bf16.msra.mxu0 %v2735
    %3446 = vmatprep.subr.bf16.mxu0 %v2744
    %3447 = vmatpush1.bf16.msra.mxu0 %v2743
    %3448 = vmatprep.subr.bf16.mxu0 %v2752
    %3449 = vmatpush1.bf16.msra.mxu0 %v2751
    %3450 = vmatprep.subr.bf16.mxu0 %v2760
    %3451 = vmatpush1.bf16.msra.mxu0 %v2759
    %3452 = vmatprep.subr.bf16.mxu0 %v2768
    %3453 = vmatpush1.bf16.msra.mxu0 %v2767
    %3454 = vmatprep.subr.bf16.mxu0 %v2776
    %3455 = vmatpush1.bf16.msra.mxu0 %v2775
    %3456 = vmatprep.mubr.bf16.mxu0 %v180
    %3457 = vmatmul.mubr.bf16.gmra.mrb[0].mxu0 %v179
    %v3458 = vpop.f32.mrb[0].mxu0
    %v3459 = vadd.f32 %v3416, %v3458
    %v3460 = vpop.f32.mrb[0].mxu0
    %v3461 = vadd.f32 %v3418, %v3460
    %v3462 = vpop.f32.mrb[0].mxu0
    %v3463 = vadd.f32 %v3420, %v3462
    %v3464 = vpop.f32.mrb[0].mxu0
    %v3465 = vadd.f32 %v3422, %v3464
    %3466 = vdwg.mxu0
    %3467 = vmatprep.subr.bf16.mxu0 %v2274
    %3468 = vmatpush1.bf16.msra.mxu0 %v2273
    %3469 = vmatprep.subr.bf16.mxu0 %v2282
    %3470 = vmatpush1.bf16.msra.mxu0 %v2281
    %3471 = vmatprep.subr.bf16.mxu0 %v2290
    %3472 = vmatpush1.bf16.msra.mxu0 %v2289
    %3473 = vmatprep.subr.bf16.mxu0 %v2298
    %3474 = vmatpush1.bf16.msra.mxu0 %v2297
    %3475 = vmatprep.subr.bf16.mxu0 %v2306
    %3476 = vmatpush1.bf16.msra.mxu0 %v2305
    %3477 = vmatprep.subr.bf16.mxu0 %v2314
    %3478 = vmatpush1.bf16.msra.mxu0 %v2313
    %3479 = vmatprep.subr.bf16.mxu0 %v2322
    %3480 = vmatpush1.bf16.msra.mxu0 %v2321
    %3481 = vmatprep.subr.bf16.mxu0 %v2330
    %3482 = vmatpush1.bf16.msra.mxu0 %v2329
    %3483 = vmatprep.subr.bf16.mxu0 %v2338
    %3484 = vmatpush1.bf16.msra.mxu0 %v2337
    %3485 = vmatprep.subr.bf16.mxu0 %v2346
    %3486 = vmatpush1.bf16.msra.mxu0 %v2345
    %3487 = vmatprep.subr.bf16.mxu0 %v2354
    %3488 = vmatpush1.bf16.msra.mxu0 %v2353
    %3489 = vmatprep.subr.bf16.mxu0 %v2362
    %3490 = vmatpush1.bf16.msra.mxu0 %v2361
    %3491 = vmatprep.subr.bf16.mxu0 %v2370
    %3492 = vmatpush1.bf16.msra.mxu0 %v2369
    %3493 = vmatprep.subr.bf16.mxu0 %v2378
    %3494 = vmatpush1.bf16.msra.mxu0 %v2377
    %3495 = vmatprep.subr.bf16.mxu0 %v2386
    %3496 = vmatpush1.bf16.msra.mxu0 %v2385
    %3497 = vmatprep.subr.bf16.mxu0 %v2394
    %3498 = vmatpush1.bf16.msra.mxu0 %v2393
    %3499 = vmatprep.mubr.bf16.mxu0 %v174
    %3500 = vmatmul.mubr.bf16.gmra.mrb[0].mxu0 %v173
    %v3501 = vpop.f32.mrb[0].mxu0
    %v3502 = vadd.f32 %v706, %v3501
    %v3503 = vpop.f32.mrb[0].mxu0
    %v3504 = vadd.f32 %v710, %v3503
    %v3505 = vpop.f32.mrb[0].mxu0
    %v3506 = vadd.f32 %v706, %v3505
    %v3507 = vpop.f32.mrb[0].mxu0
    %v3508 = vadd.f32 %v710, %v3507
    %3509 = vdwg.mxu0
    %3510 = vmatprep.subr.bf16.mxu0 %v2402
    %3511 = vmatpush1.bf16.msra.mxu0 %v2401
    %3512 = vmatprep.subr.bf16.mxu0 %v2410
    %3513 = vmatpush1.bf16.msra.mxu0 %v2409
    %3514 = vmatprep.subr.bf16.mxu0 %v2418
    %3515 = vmatpush1.bf16.msra.mxu0 %v2417
    %3516 = vmatprep.subr.bf16.mxu0 %v2426
    %3517 = vmatpush1.bf16.msra.mxu0 %v2425
    %3518 = vmatprep.subr.bf16.mxu0 %v2434
    %3519 = vmatpush1.bf16.msra.mxu0 %v2433
    %3520 = vmatprep.subr.bf16.mxu0 %v2442
    %3521 = vmatpush1.bf16.msra.mxu0 %v2441
    %3522 = vmatprep.subr.bf16.mxu0 %v2450
    %3523 = vmatpush1.bf16.msra.mxu0 %v2449
    %3524 = vmatprep.subr.bf16.mxu0 %v2458
    %3525 = vmatpush1.bf16.msra.mxu0 %v2457
    %3526 = vmatprep.subr.bf16.mxu0 %v2466
    %3527 = vmatpush1.bf16.msra.mxu0 %v2465
    %3528 = vmatprep.subr.bf16.mxu0 %v2474
    %3529 = vmatpush1.bf16.msra.mxu0 %v2473
    %3530 = vmatprep.subr.bf16.mxu0 %v2482
    %3531 = vmatpush1.bf16.msra.mxu0 %v2481
    %3532 = vmatprep.subr.bf16.mxu0 %v2490
    %3533 = vmatpush1.bf16.msra.mxu0 %v2489
    %3534 = vmatprep.subr.bf16.mxu0 %v2498
    %3535 = vmatpush1.bf16.msra.mxu0 %v2497
    %3536 = vmatprep.subr.bf16.mxu0 %v2506
    %3537 = vmatpush1.bf16.msra.mxu0 %v2505
    %3538 = vmatprep.subr.bf16.mxu0 %v2514
    %3539 = vmatpush1.bf16.msra.mxu0 %v2513
    %3540 = vmatprep.subr.bf16.mxu0 %v2522
    %3541 = vmatpush1.bf16.msra.mxu0 %v2521
    %3542 = vmatprep.mubr.bf16.mxu0 %v176
    %3543 = vmatmul.mubr.bf16.gmra.mrb[0].mxu0 %v175
    %v3544 = vpop.f32.mrb[0].mxu0
    %v3545 = vadd.f32 %v3502, %v3544
    %v3546 = vpop.f32.mrb[0].mxu0
    %v3547 = vadd.f32 %v3504, %v3546
    %v3548 = vpop.f32.mrb[0].mxu0
    %v3549 = vadd.f32 %v3506, %v3548
    %v3550 = vpop.f32.mrb[0].mxu0
    %v3551 = vadd.f32 %v3508, %v3550
    %3552 = vdwg.mxu0
    %3553 = vmatprep.subr.bf16.mxu0 %v2530
    %3554 = vmatpush1.bf16.msra.mxu0 %v2529
    %3555 = vmatprep.subr.bf16.mxu0 %v2538
    %3556 = vmatpush1.bf16.msra.mxu0 %v2537
    %3557 = vmatprep.subr.bf16.mxu0 %v2546
    %3558 = vmatpush1.bf16.msra.mxu0 %v2545
    %3559 = vmatprep.subr.bf16.mxu0 %v2554
    %3560 = vmatpush1.bf16.msra.mxu0 %v2553
    %3561 = vmatprep.subr.bf16.mxu0 %v2562
    %3562 = vmatpush1.bf16.msra.mxu0 %v2561
    %3563 = vmatprep.subr.bf16.mxu0 %v2570
    %3564 = vmatpush1.bf16.msra.mxu0 %v2569
    %3565 = vmatprep.subr.bf16.mxu0 %v2578
    %3566 = vmatpush1.bf16.msra.mxu0 %v2577
    %3567 = vmatprep.subr.bf16.mxu0 %v2586
    %3568 = vmatpush1.bf16.msra.mxu0 %v2585
    %3569 = vmatprep.subr.bf16.mxu0 %v2594
    %3570 = vmatpush1.bf16.msra.mxu0 %v2593
    %3571 = vmatprep.subr.bf16.mxu0 %v2602
    %3572 = vmatpush1.bf16.msra.mxu0 %v2601
    %3573 = vmatprep.subr.bf16.mxu0 %v2610
    %3574 = vmatpush1.bf16.msra.mxu0 %v2609
    %3575 = vmatprep.subr.bf16.mxu0 %v2618
    %3576 = vmatpush1.bf16.msra.mxu0 %v2617
    %3577 = vmatprep.subr.bf16.mxu0 %v2626
    %3578 = vmatpush1.bf16.msra.mxu0 %v2625
    %3579 = vmatprep.subr.bf16.mxu0 %v2634
    %3580 = vmatpush1.bf16.msra.mxu0 %v2633
    %3581 = vmatprep.subr.bf16.mxu0 %v2642
    %3582 = vmatpush1.bf16.msra.mxu0 %v2641
    %3583 = vmatprep.subr.bf16.mxu0 %v2650
    %3584 = vmatpush1.bf16.msra.mxu0 %v2649
    %3585 = vmatprep.mubr.bf16.mxu0 %v178
    %3586 = vmatmul.mubr.bf16.gmra.mrb[0].mxu0 %v177
    %v3587 = vpop.f32.mrb[0].mxu0
    %v3588 = vadd.f32 %v3545, %v3587
    %v3589 = vpop.f32.mrb[0].mxu0
    %v3590 = vadd.f32 %v3547, %v3589
    %v3591 = vpop.f32.mrb[0].mxu0
    %v3592 = vadd.f32 %v3549, %v3591
    %v3593 = vpop.f32.mrb[0].mxu0
    %v3594 = vadd.f32 %v3551, %v3593
    %3595 = vdwg.mxu0
    %3596 = vmatprep.subr.bf16.mxu0 %v2658
    %3597 = vmatpush1.bf16.msra.mxu0 %v2657
    %3598 = vmatprep.subr.bf16.mxu0 %v2666
    %3599 = vmatpush1.bf16.msra.mxu0 %v2665
    %3600 = vmatprep.subr.bf16.mxu0 %v2674
    %3601 = vmatpush1.bf16.msra.mxu0 %v2673
    %3602 = vmatprep.subr.bf16.mxu0 %v2682
    %3603 = vmatpush1.bf16.msra.mxu0 %v2681
    %3604 = vmatprep.subr.bf16.mxu0 %v2690
    %3605 = vmatpush1.bf16.msra.mxu0 %v2689
    %3606 = vmatprep.subr.bf16.mxu0 %v2698
    %3607 = vmatpush1.bf16.msra.mxu0 %v2697
    %3608 = vmatprep.subr.bf16.mxu0 %v2706
    %3609 = vmatpush1.bf16.msra.mxu0 %v2705
    %3610 = vmatprep.subr.bf16.mxu0 %v2714
    %3611 = vmatpush1.bf16.msra.mxu0 %v2713
    %3612 = vmatprep.subr.bf16.mxu0 %v2722
    %3613 = vmatpush1.bf16.msra.mxu0 %v2721
    %3614 = vmatprep.subr.bf16.mxu0 %v2730
    %3615 = vmatpush1.bf16.msra.mxu0 %v2729
    %3616 = vmatprep.subr.bf16.mxu0 %v2738
    %3617 = vmatpush1.bf16.msra.mxu0 %v2737
    %3618 = vmatprep.subr.bf16.mxu0 %v2746
    %3619 = vmatpush1.bf16.msra.mxu0 %v2745
    %3620 = vmatprep.subr.bf16.mxu0 %v2754
    %3621 = vmatpush1.bf16.msra.mxu0 %v2753
    %3622 = vmatprep.subr.bf16.mxu0 %v2762
    %3623 = vmatpush1.bf16.msra.mxu0 %v2761
    %3624 = vmatprep.subr.bf16.mxu0 %v2770
    %3625 = vmatpush1.bf16.msra.mxu0 %v2769
    %3626 = vmatprep.subr.bf16.mxu0 %v2778
    %3627 = vmatpush1.bf16.msra.mxu0 %v2777
    %3628 = vmatprep.mubr.bf16.mxu0 %v180
    %3629 = vmatmul.mubr.bf16.gmra.mrb[0].mxu0 %v179
    %v3630 = vpop.f32.mrb[0].mxu0
    %v3631 = vadd.f32 %v3588, %v3630
    %v3632 = vpop.f32.mrb[0].mxu0
    %v3633 = vadd.f32 %v3590, %v3632
    %v3634 = vpop.f32.mrb[0].mxu0
    %v3635 = vadd.f32 %v3592, %v3634
    %v3636 = vpop.f32.mrb[0].mxu0
    %v3637 = vadd.f32 %v3594, %v3636
    %3638 = vdwg.mxu0
    %3639 = vmatprep.subr.bf16.mxu0 %v2276
    %3640 = vmatpush1.bf16.msra.mxu0 %v2275
    %3641 = vmatprep.subr.bf16.mxu0 %v2284
    %3642 = vmatpush1.bf16.msra.mxu0 %v2283
    %3643 = vmatprep.subr.bf16.mxu0 %v2292
    %3644 = vmatpush1.bf16.msra.mxu0 %v2291
    %3645 = vmatprep.subr.bf16.mxu0 %v2300
    %3646 = vmatpush1.bf16.msra.mxu0 %v2299
    %3647 = vmatprep.subr.bf16.mxu0 %v2308
    %3648 = vmatpush1.bf16.msra.mxu0 %v2307
    %3649 = vmatprep.subr.bf16.mxu0 %v2316
    %3650 = vmatpush1.bf16.msra.mxu0 %v2315
    %3651 = vmatprep.subr.bf16.mxu0 %v2324
    %3652 = vmatpush1.bf16.msra.mxu0 %v2323
    %3653 = vmatprep.subr.bf16.mxu0 %v2332
    %3654 = vmatpush1.bf16.msra.mxu0 %v2331
    %3655 = vmatprep.subr.bf16.mxu0 %v2340
    %3656 = vmatpush1.bf16.msra.mxu0 %v2339
    %3657 = vmatprep.subr.bf16.mxu0 %v2348
    %3658 = vmatpush1.bf16.msra.mxu0 %v2347
    %3659 = vmatprep.subr.bf16.mxu0 %v2356
    %3660 = vmatpush1.bf16.msra.mxu0 %v2355
    %3661 = vmatprep.subr.bf16.mxu0 %v2364
    %3662 = vmatpush1.bf16.msra.mxu0 %v2363
    %3663 = vmatprep.subr.bf16.mxu0 %v2372
    %3664 = vmatpush1.bf16.msra.mxu0 %v2371
    %3665 = vmatprep.subr.bf16.mxu0 %v2380
    %3666 = vmatpush1.bf16.msra.mxu0 %v2379
    %3667 = vmatprep.subr.bf16.mxu0 %v2388
    %3668 = vmatpush1.bf16.msra.mxu0 %v2387
    %3669 = vmatprep.subr.bf16.mxu0 %v2396
    %3670 = vmatpush1.bf16.msra.mxu0 %v2395
    %3671 = vmatprep.mubr.bf16.mxu0 %v174
    %3672 = vmatmul.mubr.bf16.gmra.mrb[0].mxu0 %v173
    %v3673 = vpop.f32.mrb[0].mxu0
    %v3674 = vadd.f32 %v714, %v3673
    %v3675 = vpop.f32.mrb[0].mxu0
    %v3676 = vadd.f32 %v718, %v3675
    %v3677 = vpop.f32.mrb[0].mxu0
    %v3678 = vadd.f32 %v714, %v3677
    %v3679 = vpop.f32.mrb[0].mxu0
    %v3680 = vadd.f32 %v718, %v3679
    %3681 = vdwg.mxu0
    %3682 = vmatprep.subr.bf16.mxu0 %v2404
    %3683 = vmatpush1.bf16.msra.mxu0 %v2403
    %3684 = vmatprep.subr.bf16.mxu0 %v2412
    %3685 = vmatpush1.bf16.msra.mxu0 %v2411
    %3686 = vmatprep.subr.bf16.mxu0 %v2420
    %3687 = vmatpush1.bf16.msra.mxu0 %v2419
    %3688 = vmatprep.subr.bf16.mxu0 %v2428
    %3689 = vmatpush1.bf16.msra.mxu0 %v2427
    %3690 = vmatprep.subr.bf16.mxu0 %v2436
    %3691 = vmatpush1.bf16.msra.mxu0 %v2435
    %3692 = vmatprep.subr.bf16.mxu0 %v2444
    %3693 = vmatpush1.bf16.msra.mxu0 %v2443
    %3694 = vmatprep.subr.bf16.mxu0 %v2452
    %3695 = vmatpush1.bf16.msra.mxu0 %v2451
    %3696 = vmatprep.subr.bf16.mxu0 %v2460
    %3697 = vmatpush1.bf16.msra.mxu0 %v2459
    %3698 = vmatprep.subr.bf16.mxu0 %v2468
    %3699 = vmatpush1.bf16.msra.mxu0 %v2467
    %3700 = vmatprep.subr.bf16.mxu0 %v2476
    %3701 = vmatpush1.bf16.msra.mxu0 %v2475
    %3702 = vmatprep.subr.bf16.mxu0 %v2484
    %3703 = vmatpush1.bf16.msra.mxu0 %v2483
    %3704 = vmatprep.subr.bf16.mxu0 %v2492
    %3705 = vmatpush1.bf16.msra.mxu0 %v2491
    %3706 = vmatprep.subr.bf16.mxu0 %v2500
    %3707 = vmatpush1.bf16.msra.mxu0 %v2499
    %3708 = vmatprep.subr.bf16.mxu0 %v2508
    %3709 = vmatpush1.bf16.msra.mxu0 %v2507
    %3710 = vmatprep.subr.bf16.mxu0 %v2516
    %3711 = vmatpush1.bf16.msra.mxu0 %v2515
    %3712 = vmatprep.subr.bf16.mxu0 %v2524
    %3713 = vmatpush1.bf16.msra.mxu0 %v2523
    %3714 = vmatprep.mubr.bf16.mxu0 %v176
    %3715 = vmatmul.mubr.bf16.gmra.mrb[0].mxu0 %v175
    %v3716 = vpop.f32.mrb[0].mxu0
    %v3717 = vadd.f32 %v3674, %v3716
    %v3718 = vpop.f32.mrb[0].mxu0
    %v3719 = vadd.f32 %v3676, %v3718
    %v3720 = vpop.f32.mrb[0].mxu0
    %v3721 = vadd.f32 %v3678, %v3720
    %v3722 = vpop.f32.mrb[0].mxu0
    %v3723 = vadd.f32 %v3680, %v3722
    %3724 = vdwg.mxu0
    %3725 = vmatprep.subr.bf16.mxu0 %v2532
    %3726 = vmatpush1.bf16.msra.mxu0 %v2531
    %3727 = vmatprep.subr.bf16.mxu0 %v2540
    %3728 = vmatpush1.bf16.msra.mxu0 %v2539
    %3729 = vmatprep.subr.bf16.mxu0 %v2548
    %3730 = vmatpush1.bf16.msra.mxu0 %v2547
    %3731 = vmatprep.subr.bf16.mxu0 %v2556
    %3732 = vmatpush1.bf16.msra.mxu0 %v2555
    %3733 = vmatprep.subr.bf16.mxu0 %v2564
    %3734 = vmatpush1.bf16.msra.mxu0 %v2563
    %3735 = vmatprep.subr.bf16.mxu0 %v2572
    %3736 = vmatpush1.bf16.msra.mxu0 %v2571
    %3737 = vmatprep.subr.bf16.mxu0 %v2580
    %3738 = vmatpush1.bf16.msra.mxu0 %v2579
    %3739 = vmatprep.subr.bf16.mxu0 %v2588
    %3740 = vmatpush1.bf16.msra.mxu0 %v2587
    %3741 = vmatprep.subr.bf16.mxu0 %v2596
    %3742 = vmatpush1.bf16.msra.mxu0 %v2595
    %3743 = vmatprep.subr.bf16.mxu0 %v2604
    %3744 = vmatpush1.bf16.msra.mxu0 %v2603
    %3745 = vmatprep.subr.bf16.mxu0 %v2612
    %3746 = vmatpush1.bf16.msra.mxu0 %v2611
    %3747 = vmatprep.subr.bf16.mxu0 %v2620
    %3748 = vmatpush1.bf16.msra.mxu0 %v2619
    %3749 = vmatprep.subr.bf16.mxu0 %v2628
    %3750 = vmatpush1.bf16.msra.mxu0 %v2627
    %3751 = vmatprep.subr.bf16.mxu0 %v2636
    %3752 = vmatpush1.bf16.msra.mxu0 %v2635
    %3753 = vmatprep.subr.bf16.mxu0 %v2644
    %3754 = vmatpush1.bf16.msra.mxu0 %v2643
    %3755 = vmatprep.subr.bf16.mxu0 %v2652
    %3756 = vmatpush1.bf16.msra.mxu0 %v2651
    %3757 = vmatprep.mubr.bf16.mxu0 %v178
    %3758 = vmatmul.mubr.bf16.gmra.mrb[0].mxu0 %v177
    %v3759 = vpop.f32.mrb[0].mxu0
    %v3760 = vadd.f32 %v3717, %v3759
    %v3761 = vpop.f32.mrb[0].mxu0
    %v3762 = vadd.f32 %v3719, %v3761
    %v3763 = vpop.f32.mrb[0].mxu0
    %v3764 = vadd.f32 %v3721, %v3763
    %v3765 = vpop.f32.mrb[0].mxu0
    %v3766 = vadd.f32 %v3723, %v3765
    %3767 = vdwg.mxu0
    %3768 = vmatprep.subr.bf16.mxu0 %v2660
    %3769 = vmatpush1.bf16.msra.mxu0 %v2659
    %3770 = vmatprep.subr.bf16.mxu0 %v2668
    %3771 = vmatpush1.bf16.msra.mxu0 %v2667
    %3772 = vmatprep.subr.bf16.mxu0 %v2676
    %3773 = vmatpush1.bf16.msra.mxu0 %v2675
    %3774 = vmatprep.subr.bf16.mxu0 %v2684
    %3775 = vmatpush1.bf16.msra.mxu0 %v2683
    %3776 = vmatprep.subr.bf16.mxu0 %v2692
    %3777 = vmatpush1.bf16.msra.mxu0 %v2691
    %3778 = vmatprep.subr.bf16.mxu0 %v2700
    %3779 = vmatpush1.bf16.msra.mxu0 %v2699
    %3780 = vmatprep.subr.bf16.mxu0 %v2708
    %3781 = vmatpush1.bf16.msra.mxu0 %v2707
    %3782 = vmatprep.subr.bf16.mxu0 %v2716
    %3783 = vmatpush1.bf16.msra.mxu0 %v2715
    %3784 = vmatprep.subr.bf16.mxu0 %v2724
    %3785 = vmatpush1.bf16.msra.mxu0 %v2723
    %3786 = vmatprep.subr.bf16.mxu0 %v2732
    %3787 = vmatpush1.bf16.msra.mxu0 %v2731
    %3788 = vmatprep.subr.bf16.mxu0 %v2740
    %3789 = vmatpush1.bf16.msra.mxu0 %v2739
    %3790 = vmatprep.subr.bf16.mxu0 %v2748
    %3791 = vmatpush1.bf16.msra.mxu0 %v2747
    %3792 = vmatprep.subr.bf16.mxu0 %v2756
    %3793 = vmatpush1.bf16.msra.mxu0 %v2755
    %3794 = vmatprep.subr.bf16.mxu0 %v2764
    %3795 = vmatpush1.bf16.msra.mxu0 %v2763
    %3796 = vmatprep.subr.bf16.mxu0 %v2772
    %3797 = vmatpush1.bf16.msra.mxu0 %v2771
    %3798 = vmatprep.subr.bf16.mxu0 %v2780
    %3799 = vmatpush1.bf16.msra.mxu0 %v2779
    %3800 = vmatprep.mubr.bf16.mxu0 %v180
    %3801 = vmatmul.mubr.bf16.gmra.mrb[0].mxu0 %v179
    %v3802 = vpop.f32.mrb[0].mxu0
    %v3803 = vadd.f32 %v3760, %v3802
    %v3804 = vpop.f32.mrb[0].mxu0
    %v3805 = vadd.f32 %v3762, %v3804
    %v3806 = vpop.f32.mrb[0].mxu0
    %v3807 = vadd.f32 %v3764, %v3806
    %v3808 = vpop.f32.mrb[0].mxu0
    %v3809 = vadd.f32 %v3766, %v3808
    %3810 = vdwg.mxu0
    %3811 = vmatprep.subr.bf16.mxu0 %v2278
    %3812 = vmatpush1.bf16.msra.mxu0 %v2277
    %3813 = vmatprep.subr.bf16.mxu0 %v2286
    %3814 = vmatpush1.bf16.msra.mxu0 %v2285
    %3815 = vmatprep.subr.bf16.mxu0 %v2294
    %3816 = vmatpush1.bf16.msra.mxu0 %v2293
    %3817 = vmatprep.subr.bf16.mxu0 %v2302
    %3818 = vmatpush1.bf16.msra.mxu0 %v2301
    %3819 = vmatprep.subr.bf16.mxu0 %v2310
    %3820 = vmatpush1.bf16.msra.mxu0 %v2309
    %3821 = vmatprep.subr.bf16.mxu0 %v2318
    %3822 = vmatpush1.bf16.msra.mxu0 %v2317
    %3823 = vmatprep.subr.bf16.mxu0 %v2326
    %3824 = vmatpush1.bf16.msra.mxu0 %v2325
    %3825 = vmatprep.subr.bf16.mxu0 %v2334
    %3826 = vmatpush1.bf16.msra.mxu0 %v2333
    %3827 = vmatprep.subr.bf16.mxu0 %v2342
    %3828 = vmatpush1.bf16.msra.mxu0 %v2341
    %3829 = vmatprep.subr.bf16.mxu0 %v2350
    %3830 = vmatpush1.bf16.msra.mxu0 %v2349
    %3831 = vmatprep.subr.bf16.mxu0 %v2358
    %3832 = vmatpush1.bf16.msra.mxu0 %v2357
    %3833 = vmatprep.subr.bf16.mxu0 %v2366
    %3834 = vmatpush1.bf16.msra.mxu0 %v2365
    %3835 = vmatprep.subr.bf16.mxu0 %v2374
    %3836 = vmatpush1.bf16.msra.mxu0 %v2373
    %3837 = vmatprep.subr.bf16.mxu0 %v2382
    %3838 = vmatpush1.bf16.msra.mxu0 %v2381
    %3839 = vmatprep.subr.bf16.mxu0 %v2390
    %3840 = vmatpush1.bf16.msra.mxu0 %v2389
    %3841 = vmatprep.subr.bf16.mxu0 %v2398
    %3842 = vmatpush1.bf16.msra.mxu0 %v2397
    %3843 = vmatprep.mubr.bf16.mxu0 %v174
    %3844 = vmatmul.mubr.bf16.gmra.mrb[0].mxu0 %v173
    %v3845 = vpop.f32.mrb[0].mxu0
    %v3846 = vadd.f32 %v722, %v3845
    %v3847 = vpop.f32.mrb[0].mxu0
    %v3848 = vadd.f32 %v726, %v3847
    %v3849 = vpop.f32.mrb[0].mxu0
    %v3850 = vadd.f32 %v722, %v3849
    %v3851 = vpop.f32.mrb[0].mxu0
    %v3852 = vadd.f32 %v726, %v3851
    %3853 = vdwg.mxu0
    %3854 = vmatprep.subr.bf16.mxu0 %v2406
    %3855 = vmatpush1.bf16.msra.mxu0 %v2405
    %3856 = vmatprep.subr.bf16.mxu0 %v2414
    %3857 = vmatpush1.bf16.msra.mxu0 %v2413
    %3858 = vmatprep.subr.bf16.mxu0 %v2422
    %3859 = vmatpush1.bf16.msra.mxu0 %v2421
    %3860 = vmatprep.subr.bf16.mxu0 %v2430
    %3861 = vmatpush1.bf16.msra.mxu0 %v2429
    %3862 = vmatprep.subr.bf16.mxu0 %v2438
    %3863 = vmatpush1.bf16.msra.mxu0 %v2437
    %3864 = vmatprep.subr.bf16.mxu0 %v2446
    %3865 = vmatpush1.bf16.msra.mxu0 %v2445
    %3866 = vmatprep.subr.bf16.mxu0 %v2454
    %3867 = vmatpush1.bf16.msra.mxu0 %v2453
    %3868 = vmatprep.subr.bf16.mxu0 %v2462
    %3869 = vmatpush1.bf16.msra.mxu0 %v2461
    %3870 = vmatprep.subr.bf16.mxu0 %v2470
    %3871 = vmatpush1.bf16.msra.mxu0 %v2469
    %3872 = vmatprep.subr.bf16.mxu0 %v2478
    %3873 = vmatpush1.bf16.msra.mxu0 %v2477
    %3874 = vmatprep.subr.bf16.mxu0 %v2486
    %3875 = vmatpush1.bf16.msra.mxu0 %v2485
    %3876 = vmatprep.subr.bf16.mxu0 %v2494
    %3877 = vmatpush1.bf16.msra.mxu0 %v2493
    %3878 = vmatprep.subr.bf16.mxu0 %v2502
    %3879 = vmatpush1.bf16.msra.mxu0 %v2501
    %3880 = vmatprep.subr.bf16.mxu0 %v2510
    %3881 = vmatpush1.bf16.msra.mxu0 %v2509
    %3882 = vmatprep.subr.bf16.mxu0 %v2518
    %3883 = vmatpush1.bf16.msra.mxu0 %v2517
    %3884 = vmatprep.subr.bf16.mxu0 %v2526
    %3885 = vmatpush1.bf16.msra.mxu0 %v2525
    %3886 = vmatprep.mubr.bf16.mxu0 %v176
    %3887 = vmatmul.mubr.bf16.gmra.mrb[0].mxu0 %v175
    %v3888 = vpop.f32.mrb[0].mxu0
    %v3889 = vadd.f32 %v3846, %v3888
    %v3890 = vpop.f32.mrb[0].mxu0
    %v3891 = vadd.f32 %v3848, %v3890
    %v3892 = vpop.f32.mrb[0].mxu0
    %v3893 = vadd.f32 %v3850, %v3892
    %v3894 = vpop.f32.mrb[0].mxu0
    %v3895 = vadd.f32 %v3852, %v3894
    %3896 = vdwg.mxu0
    %3897 = vmatprep.subr.bf16.mxu0 %v2534
    %3898 = vmatpush1.bf16.msra.mxu0 %v2533
    %3899 = vmatprep.subr.bf16.mxu0 %v2542
    %3900 = vmatpush1.bf16.msra.mxu0 %v2541
    %3901 = vmatprep.subr.bf16.mxu0 %v2550
    %3902 = vmatpush1.bf16.msra.mxu0 %v2549
    %3903 = vmatprep.subr.bf16.mxu0 %v2558
    %3904 = vmatpush1.bf16.msra.mxu0 %v2557
    %3905 = vmatprep.subr.bf16.mxu0 %v2566
    %3906 = vmatpush1.bf16.msra.mxu0 %v2565
    %3907 = vmatprep.subr.bf16.mxu0 %v2574
    %3908 = vmatpush1.bf16.msra.mxu0 %v2573
    %3909 = vmatprep.subr.bf16.mxu0 %v2582
    %3910 = vmatpush1.bf16.msra.mxu0 %v2581
    %3911 = vmatprep.subr.bf16.mxu0 %v2590
    %3912 = vmatpush1.bf16.msra.mxu0 %v2589
    %3913 = vmatprep.subr.bf16.mxu0 %v2598
    %3914 = vmatpush1.bf16.msra.mxu0 %v2597
    %3915 = vmatprep.subr.bf16.mxu0 %v2606
    %3916 = vmatpush1.bf16.msra.mxu0 %v2605
    %3917 = vmatprep.subr.bf16.mxu0 %v2614
    %3918 = vmatpush1.bf16.msra.mxu0 %v2613
    %3919 = vmatprep.subr.bf16.mxu0 %v2622
    %3920 = vmatpush1.bf16.msra.mxu0 %v2621
    %3921 = vmatprep.subr.bf16.mxu0 %v2630
    %3922 = vmatpush1.bf16.msra.mxu0 %v2629
    %3923 = vmatprep.subr.bf16.mxu0 %v2638
    %3924 = vmatpush1.bf16.msra.mxu0 %v2637
    %3925 = vmatprep.subr.bf16.mxu0 %v2646
    %3926 = vmatpush1.bf16.msra.mxu0 %v2645
    %3927 = vmatprep.subr.bf16.mxu0 %v2654
    %3928 = vmatpush1.bf16.msra.mxu0 %v2653
    %3929 = vmatprep.mubr.bf16.mxu0 %v178
    %3930 = vmatmul.mubr.bf16.gmra.mrb[0].mxu0 %v177
    %v3931 = vpop.f32.mrb[0].mxu0
    %v3932 = vadd.f32 %v3889, %v3931
    %v3933 = vpop.f32.mrb[0].mxu0
    %v3934 = vadd.f32 %v3891, %v3933
    %v3935 = vpop.f32.mrb[0].mxu0
    %v3936 = vadd.f32 %v3893, %v3935
    %v3937 = vpop.f32.mrb[0].mxu0
    %v3938 = vadd.f32 %v3895, %v3937
    %3939 = vdwg.mxu0
    %3940 = vmatprep.subr.bf16.mxu0 %v2662
    %3941 = vmatpush1.bf16.msra.mxu0 %v2661
    %3942 = vmatprep.subr.bf16.mxu0 %v2670
    %3943 = vmatpush1.bf16.msra.mxu0 %v2669
    %3944 = vmatprep.subr.bf16.mxu0 %v2678
    %3945 = vmatpush1.bf16.msra.mxu0 %v2677
    %3946 = vmatprep.subr.bf16.mxu0 %v2686
    %3947 = vmatpush1.bf16.msra.mxu0 %v2685
    %3948 = vmatprep.subr.bf16.mxu0 %v2694
    %3949 = vmatpush1.bf16.msra.mxu0 %v2693
    %3950 = vmatprep.subr.bf16.mxu0 %v2702
    %3951 = vmatpush1.bf16.msra.mxu0 %v2701
    %3952 = vmatprep.subr.bf16.mxu0 %v2710
    %3953 = vmatpush1.bf16.msra.mxu0 %v2709
    %3954 = vmatprep.subr.bf16.mxu0 %v2718
    %3955 = vmatpush1.bf16.msra.mxu0 %v2717
    %3956 = vmatprep.subr.bf16.mxu0 %v2726
    %3957 = vmatpush1.bf16.msra.mxu0 %v2725
    %3958 = vmatprep.subr.bf16.mxu0 %v2734
    %3959 = vmatpush1.bf16.msra.mxu0 %v2733
    %3960 = vmatprep.subr.bf16.mxu0 %v2742
    %3961 = vmatpush1.bf16.msra.mxu0 %v2741
    %3962 = vmatprep.subr.bf16.mxu0 %v2750
    %3963 = vmatpush1.bf16.msra.mxu0 %v2749
    %3964 = vmatprep.subr.bf16.mxu0 %v2758
    %3965 = vmatpush1.bf16.msra.mxu0 %v2757
    %3966 = vmatprep.subr.bf16.mxu0 %v2766
    %3967 = vmatpush1.bf16.msra.mxu0 %v2765
    %3968 = vmatprep.subr.bf16.mxu0 %v2774
    %3969 = vmatpush1.bf16.msra.mxu0 %v2773
    %3970 = vmatprep.subr.bf16.mxu0 %v2782
    %3971 = vmatpush1.bf16.msra.mxu0 %v2781
    %3972 = vmatprep.mubr.bf16.mxu0 %v180
    %3973 = vmatmul.mubr.bf16.gmra.mrb[0].mxu0 %v179
    %v3974 = vpop.f32.mrb[0].mxu0
    %v3975 = vadd.f32 %v3932, %v3974
    %v3976 = vpop.f32.mrb[0].mxu0
    %v3977 = vadd.f32 %v3934, %v3976
    %v3978 = vpop.f32.mrb[0].mxu0
    %v3979 = vadd.f32 %v3936, %v3978
    %v3980 = vpop.f32.mrb[0].mxu0
    %v3981 = vadd.f32 %v3938, %v3980
    %3982 = vdwg.mxu0
    %v3983 = vmax.f32 %v3459, 0.0
    %v3984 = vmax.f32 %v3461, 0.0
    %v3985 = vmax.f32 %v3631, 0.0
    %v3986 = vmax.f32 %v3633, 0.0
    %v3987 = vmax.f32 %v3803, 0.0
    %v3988 = vmax.f32 %v3805, 0.0
    %v3989 = vmax.f32 %v3975, 0.0
    %v3990 = vmax.f32 %v3977, 0.0
    %v3991 = vmax.f32 %v3463, 0.0
    %v3992 = vmax.f32 %v3465, 0.0
    %v3993 = vmax.f32 %v3635, 0.0
    %v3994 = vmax.f32 %v3637, 0.0
    %v3995 = vmax.f32 %v3807, 0.0
    %v3996 = vmax.f32 %v3809, 0.0
    %v3997 = vmax.f32 %v3979, 0.0
    %v3998 = vmax.f32 %v3981, 0.0
    %v3999 = vpack.c.bf16 %v3991, %v3983
    %v4000 = vpack.c.bf16 %v3992, %v3984
    %v4001 = vpack.c.bf16 %v3993, %v3985
    %v4002 = vpack.c.bf16 %v3994, %v3986
    %v4003 = vpack.c.bf16 %v3995, %v3987
    %v4004 = vpack.c.bf16 %v3996, %v3988
    %v4005 = vpack.c.bf16 %v3997, %v3989
    %v4006 = vpack.c.bf16 %v3998, %v3990
    %v4007 = vld [vmem:[#allocation9] sm:$0xff]
    %v4008 = vld [vmem:[#allocation9 + $0x8] sm:$0xff]
    %v4009 = vld [vmem:[#allocation9 + $0x10] sm:$0xff]
    %v4010 = vld [vmem:[#allocation9 + $0x18] sm:$0xff]
    %v4011 = vld [vmem:[#allocation9 + $0x20] sm:$0xff]
    %v4012 = vld [vmem:[#allocation9 + $0x28] sm:$0xff]
    %v4013 = vld [vmem:[#allocation9 + $0x30] sm:$0xff]
    %v4014 = vld [vmem:[#allocation9 + $0x38] sm:$0xff]
    %v4015 = vld [vmem:[#allocation9 + $0x40] sm:$0xff]
    %v4016 = vld [vmem:[#allocation9 + $0x48] sm:$0xff]
    %v4017 = vld [vmem:[#allocation9 + $0x50] sm:$0xff]
    %v4018 = vld [vmem:[#allocation9 + $0x58] sm:$0xff]
    %v4019 = vld [vmem:[#allocation9 + $0x60] sm:$0xff]
    %v4020 = vld [vmem:[#allocation9 + $0x68] sm:$0xff]
    %v4021 = vld [vmem:[#allocation9 + $0x70] sm:$0xff]
    %v4022 = vld [vmem:[#allocation9 + $0x78] sm:$0xff]
    %v4023 = vld [vmem:[#allocation9 + $0x80] sm:$0xff]
    %v4024 = vld [vmem:[#allocation9 + $0x88] sm:$0xff]
    %v4025 = vld [vmem:[#allocation9 + $0x90] sm:$0xff]
    %v4026 = vld [vmem:[#allocation9 + $0x98] sm:$0xff]
    %v4027 = vld [vmem:[#allocation9 + $0xa0] sm:$0xff]
    %v4028 = vld [vmem:[#allocation9 + $0xa8] sm:$0xff]
    %v4029 = vld [vmem:[#allocation9 + $0xb0] sm:$0xff]
    %v4030 = vld [vmem:[#allocation9 + $0xb8] sm:$0xff]
    %v4031 = vld [vmem:[#allocation9 + $0xc0] sm:$0xff]
    %v4032 = vld [vmem:[#allocation9 + $0xc8] sm:$0xff]
    %v4033 = vld [vmem:[#allocation9 + $0xd0] sm:$0xff]
    %v4034 = vld [vmem:[#allocation9 + $0xd8] sm:$0xff]
    %v4035 = vld [vmem:[#allocation9 + $0xe0] sm:$0xff]
    %v4036 = vld [vmem:[#allocation9 + $0xe8] sm:$0xff]
    %v4037 = vld [vmem:[#allocation9 + $0xf0] sm:$0xff]
    %v4038 = vld [vmem:[#allocation9 + $0xf8] sm:$0xff]
    %v4039 = vld [vmem:[#allocation9 + $0x100] sm:$0xff]
    %v4040 = vld [vmem:[#allocation9 + $0x108] sm:$0xff]
    %v4041 = vld [vmem:[#allocation9 + $0x110] sm:$0xff]
    %v4042 = vld [vmem:[#allocation9 + $0x118] sm:$0xff]
    %v4043 = vld [vmem:[#allocation9 + $0x120] sm:$0xff]
    %v4044 = vld [vmem:[#allocation9 + $0x128] sm:$0xff]
    %v4045 = vld [vmem:[#allocation9 + $0x130] sm:$0xff]
    %v4046 = vld [vmem:[#allocation9 + $0x138] sm:$0xff]
    %v4047 = vld [vmem:[#allocation9 + $0x140] sm:$0xff]
    %v4048 = vld [vmem:[#allocation9 + $0x148] sm:$0xff]
    %v4049 = vld [vmem:[#allocation9 + $0x150] sm:$0xff]
    %v4050 = vld [vmem:[#allocation9 + $0x158] sm:$0xff]
    %v4051 = vld [vmem:[#allocation9 + $0x160] sm:$0xff]
    %v4052 = vld [vmem:[#allocation9 + $0x168] sm:$0xff]
    %v4053 = vld [vmem:[#allocation9 + $0x170] sm:$0xff]
    %v4054 = vld [vmem:[#allocation9 + $0x178] sm:$0xff]
    %v4055 = vld [vmem:[#allocation9 + $0x180] sm:$0xff]
    %v4056 = vld [vmem:[#allocation9 + $0x188] sm:$0xff]
    %v4057 = vld [vmem:[#allocation9 + $0x190] sm:$0xff]
    %v4058 = vld [vmem:[#allocation9 + $0x198] sm:$0xff]
    %v4059 = vld [vmem:[#allocation9 + $0x1a0] sm:$0xff]
    %v4060 = vld [vmem:[#allocation9 + $0x1a8] sm:$0xff]
    %v4061 = vld [vmem:[#allocation9 + $0x1b0] sm:$0xff]
    %v4062 = vld [vmem:[#allocation9 + $0x1b8] sm:$0xff]
    %v4063 = vld [vmem:[#allocation9 + $0x1c0] sm:$0xff]
    %v4064 = vld [vmem:[#allocation9 + $0x1c8] sm:$0xff]
    %v4065 = vld [vmem:[#allocation9 + $0x1d0] sm:$0xff]
    %v4066 = vld [vmem:[#allocation9 + $0x1d8] sm:$0xff]
    %v4067 = vld [vmem:[#allocation9 + $0x1e0] sm:$0xff]
    %v4068 = vld [vmem:[#allocation9 + $0x1e8] sm:$0xff]
    %v4069 = vld [vmem:[#allocation9 + $0x1f0] sm:$0xff]
    %v4070 = vld [vmem:[#allocation9 + $0x1f8] sm:$0xff]
    %v4071 = vld [vmem:[#allocation9 + $0x200] sm:$0xff]
    %v4072 = vld [vmem:[#allocation9 + $0x208] sm:$0xff]
    %v4073 = vld [vmem:[#allocation9 + $0x210] sm:$0xff]
    %v4074 = vld [vmem:[#allocation9 + $0x218] sm:$0xff]
    %v4075 = vld [vmem:[#allocation9 + $0x220] sm:$0xff]
    %v4076 = vld [vmem:[#allocation9 + $0x228] sm:$0xff]
    %v4077 = vld [vmem:[#allocation9 + $0x230] sm:$0xff]
    %v4078 = vld [vmem:[#allocation9 + $0x238] sm:$0xff]
    %v4079 = vld [vmem:[#allocation9 + $0x240] sm:$0xff]
    %v4080 = vld [vmem:[#allocation9 + $0x248] sm:$0xff]
    %v4081 = vld [vmem:[#allocation9 + $0x250] sm:$0xff]
    %v4082 = vld [vmem:[#allocation9 + $0x258] sm:$0xff]
    %v4083 = vld [vmem:[#allocation9 + $0x260] sm:$0xff]
    %v4084 = vld [vmem:[#allocation9 + $0x268] sm:$0xff]
    %v4085 = vld [vmem:[#allocation9 + $0x270] sm:$0xff]
    %v4086 = vld [vmem:[#allocation9 + $0x278] sm:$0xff]
    %v4087 = vld [vmem:[#allocation9 + $0x280] sm:$0xff]
    %v4088 = vld [vmem:[#allocation9 + $0x288] sm:$0xff]
    %v4089 = vld [vmem:[#allocation9 + $0x290] sm:$0xff]
    %v4090 = vld [vmem:[#allocation9 + $0x298] sm:$0xff]
    %v4091 = vld [vmem:[#allocation9 + $0x2a0] sm:$0xff]
    %v4092 = vld [vmem:[#allocation9 + $0x2a8] sm:$0xff]
    %v4093 = vld [vmem:[#allocation9 + $0x2b0] sm:$0xff]
    %v4094 = vld [vmem:[#allocation9 + $0x2b8] sm:$0xff]
    %v4095 = vld [vmem:[#allocation9 + $0x2c0] sm:$0xff]
    %v4096 = vld [vmem:[#allocation9 + $0x2c8] sm:$0xff]
    %v4097 = vld [vmem:[#allocation9 + $0x2d0] sm:$0xff]
    %v4098 = vld [vmem:[#allocation9 + $0x2d8] sm:$0xff]
    %v4099 = vld [vmem:[#allocation9 + $0x2e0] sm:$0xff]
    %v4100 = vld [vmem:[#allocation9 + $0x2e8] sm:$0xff]
    %v4101 = vld [vmem:[#allocation9 + $0x2f0] sm:$0xff]
    %v4102 = vld [vmem:[#allocation9 + $0x2f8] sm:$0xff]
    %v4103 = vld [vmem:[#allocation9 + $0x300] sm:$0xff]
    %v4104 = vld [vmem:[#allocation9 + $0x308] sm:$0xff]
    %v4105 = vld [vmem:[#allocation9 + $0x310] sm:$0xff]
    %v4106 = vld [vmem:[#allocation9 + $0x318] sm:$0xff]
    %v4107 = vld [vmem:[#allocation9 + $0x320] sm:$0xff]
    %v4108 = vld [vmem:[#allocation9 + $0x328] sm:$0xff]
    %v4109 = vld [vmem:[#allocation9 + $0x330] sm:$0xff]
    %v4110 = vld [vmem:[#allocation9 + $0x338] sm:$0xff]
    %v4111 = vld [vmem:[#allocation9 + $0x340] sm:$0xff]
    %v4112 = vld [vmem:[#allocation9 + $0x348] sm:$0xff]
    %v4113 = vld [vmem:[#allocation9 + $0x350] sm:$0xff]
    %v4114 = vld [vmem:[#allocation9 + $0x358] sm:$0xff]
    %v4115 = vld [vmem:[#allocation9 + $0x360] sm:$0xff]
    %v4116 = vld [vmem:[#allocation9 + $0x368] sm:$0xff]
    %v4117 = vld [vmem:[#allocation9 + $0x370] sm:$0xff]
    %v4118 = vld [vmem:[#allocation9 + $0x378] sm:$0xff]
    %v4119 = vld [vmem:[#allocation9 + $0x380] sm:$0xff]
    %v4120 = vld [vmem:[#allocation9 + $0x388] sm:$0xff]
    %v4121 = vld [vmem:[#allocation9 + $0x390] sm:$0xff]
    %v4122 = vld [vmem:[#allocation9 + $0x398] sm:$0xff]
    %v4123 = vld [vmem:[#allocation9 + $0x3a0] sm:$0xff]
    %v4124 = vld [vmem:[#allocation9 + $0x3a8] sm:$0xff]
    %v4125 = vld [vmem:[#allocation9 + $0x3b0] sm:$0xff]
    %v4126 = vld [vmem:[#allocation9 + $0x3b8] sm:$0xff]
    %v4127 = vld [vmem:[#allocation9 + $0x3c0] sm:$0xff]
    %v4128 = vld [vmem:[#allocation9 + $0x3c8] sm:$0xff]
    %v4129 = vld [vmem:[#allocation9 + $0x3d0] sm:$0xff]
    %v4130 = vld [vmem:[#allocation9 + $0x3d8] sm:$0xff]
    %v4131 = vld [vmem:[#allocation9 + $0x3e0] sm:$0xff]
    %v4132 = vld [vmem:[#allocation9 + $0x3e8] sm:$0xff]
    %v4133 = vld [vmem:[#allocation9 + $0x3f0] sm:$0xff]
    %v4134 = vld [vmem:[#allocation9 + $0x3f8] sm:$0xff]
    %v4135 = vld [vmem:[#allocation9 + $0x400] sm:$0xff]
    %v4136 = vld [vmem:[#allocation9 + $0x408] sm:$0xff]
    %v4137 = vld [vmem:[#allocation9 + $0x410] sm:$0xff]
    %v4138 = vld [vmem:[#allocation9 + $0x418] sm:$0xff]
    %v4139 = vld [vmem:[#allocation9 + $0x420] sm:$0xff]
    %v4140 = vld [vmem:[#allocation9 + $0x428] sm:$0xff]
    %v4141 = vld [vmem:[#allocation9 + $0x430] sm:$0xff]
    %v4142 = vld [vmem:[#allocation9 + $0x438] sm:$0xff]
    %v4143 = vld [vmem:[#allocation9 + $0x440] sm:$0xff]
    %v4144 = vld [vmem:[#allocation9 + $0x448] sm:$0xff]
    %v4145 = vld [vmem:[#allocation9 + $0x450] sm:$0xff]
    %v4146 = vld [vmem:[#allocation9 + $0x458] sm:$0xff]
    %v4147 = vld [vmem:[#allocation9 + $0x460] sm:$0xff]
    %v4148 = vld [vmem:[#allocation9 + $0x468] sm:$0xff]
    %v4149 = vld [vmem:[#allocation9 + $0x470] sm:$0xff]
    %v4150 = vld [vmem:[#allocation9 + $0x478] sm:$0xff]
    %v4151 = vld [vmem:[#allocation9 + $0x480] sm:$0xff]
    %v4152 = vld [vmem:[#allocation9 + $0x488] sm:$0xff]
    %v4153 = vld [vmem:[#allocation9 + $0x490] sm:$0xff]
    %v4154 = vld [vmem:[#allocation9 + $0x498] sm:$0xff]
    %v4155 = vld [vmem:[#allocation9 + $0x4a0] sm:$0xff]
    %v4156 = vld [vmem:[#allocation9 + $0x4a8] sm:$0xff]
    %v4157 = vld [vmem:[#allocation9 + $0x4b0] sm:$0xff]
    %v4158 = vld [vmem:[#allocation9 + $0x4b8] sm:$0xff]
    %v4159 = vld [vmem:[#allocation9 + $0x4c0] sm:$0xff]
    %v4160 = vld [vmem:[#allocation9 + $0x4c8] sm:$0xff]
    %v4161 = vld [vmem:[#allocation9 + $0x4d0] sm:$0xff]
    %v4162 = vld [vmem:[#allocation9 + $0x4d8] sm:$0xff]
    %v4163 = vld [vmem:[#allocation9 + $0x4e0] sm:$0xff]
    %v4164 = vld [vmem:[#allocation9 + $0x4e8] sm:$0xff]
    %v4165 = vld [vmem:[#allocation9 + $0x4f0] sm:$0xff]
    %v4166 = vld [vmem:[#allocation9 + $0x4f8] sm:$0xff]
    %v4167 = vld [vmem:[#allocation9 + $0x500] sm:$0xff]
    %v4168 = vld [vmem:[#allocation9 + $0x508] sm:$0xff]
    %v4169 = vld [vmem:[#allocation9 + $0x510] sm:$0xff]
    %v4170 = vld [vmem:[#allocation9 + $0x518] sm:$0xff]
    %v4171 = vld [vmem:[#allocation9 + $0x520] sm:$0xff]
    %v4172 = vld [vmem:[#allocation9 + $0x528] sm:$0xff]
    %v4173 = vld [vmem:[#allocation9 + $0x530] sm:$0xff]
    %v4174 = vld [vmem:[#allocation9 + $0x538] sm:$0xff]
    %v4175 = vld [vmem:[#allocation9 + $0x540] sm:$0xff]
    %v4176 = vld [vmem:[#allocation9 + $0x548] sm:$0xff]
    %v4177 = vld [vmem:[#allocation9 + $0x550] sm:$0xff]
    %v4178 = vld [vmem:[#allocation9 + $0x558] sm:$0xff]
    %v4179 = vld [vmem:[#allocation9 + $0x560] sm:$0xff]
    %v4180 = vld [vmem:[#allocation9 + $0x568] sm:$0xff]
    %v4181 = vld [vmem:[#allocation9 + $0x570] sm:$0xff]
    %v4182 = vld [vmem:[#allocation9 + $0x578] sm:$0xff]
    %v4183 = vld [vmem:[#allocation9 + $0x580] sm:$0xff]
    %v4184 = vld [vmem:[#allocation9 + $0x588] sm:$0xff]
    %v4185 = vld [vmem:[#allocation9 + $0x590] sm:$0xff]
    %v4186 = vld [vmem:[#allocation9 + $0x598] sm:$0xff]
    %v4187 = vld [vmem:[#allocation9 + $0x5a0] sm:$0xff]
    %v4188 = vld [vmem:[#allocation9 + $0x5a8] sm:$0xff]
    %v4189 = vld [vmem:[#allocation9 + $0x5b0] sm:$0xff]
    %v4190 = vld [vmem:[#allocation9 + $0x5b8] sm:$0xff]
    %v4191 = vld [vmem:[#allocation9 + $0x5c0] sm:$0xff]
    %v4192 = vld [vmem:[#allocation9 + $0x5c8] sm:$0xff]
    %v4193 = vld [vmem:[#allocation9 + $0x5d0] sm:$0xff]
    %v4194 = vld [vmem:[#allocation9 + $0x5d8] sm:$0xff]
    %v4195 = vld [vmem:[#allocation9 + $0x5e0] sm:$0xff]
    %v4196 = vld [vmem:[#allocation9 + $0x5e8] sm:$0xff]
    %v4197 = vld [vmem:[#allocation9 + $0x5f0] sm:$0xff]
    %v4198 = vld [vmem:[#allocation9 + $0x5f8] sm:$0xff]
    %v4199 = vld [vmem:[#allocation9 + $0x600] sm:$0xff]
    %v4200 = vld [vmem:[#allocation9 + $0x608] sm:$0xff]
    %v4201 = vld [vmem:[#allocation9 + $0x610] sm:$0xff]
    %v4202 = vld [vmem:[#allocation9 + $0x618] sm:$0xff]
    %v4203 = vld [vmem:[#allocation9 + $0x620] sm:$0xff]
    %v4204 = vld [vmem:[#allocation9 + $0x628] sm:$0xff]
    %v4205 = vld [vmem:[#allocation9 + $0x630] sm:$0xff]
    %v4206 = vld [vmem:[#allocation9 + $0x638] sm:$0xff]
    %v4207 = vld [vmem:[#allocation9 + $0x640] sm:$0xff]
    %v4208 = vld [vmem:[#allocation9 + $0x648] sm:$0xff]
    %v4209 = vld [vmem:[#allocation9 + $0x650] sm:$0xff]
    %v4210 = vld [vmem:[#allocation9 + $0x658] sm:$0xff]
    %v4211 = vld [vmem:[#allocation9 + $0x660] sm:$0xff]
    %v4212 = vld [vmem:[#allocation9 + $0x668] sm:$0xff]
    %v4213 = vld [vmem:[#allocation9 + $0x670] sm:$0xff]
    %v4214 = vld [vmem:[#allocation9 + $0x678] sm:$0xff]
    %v4215 = vld [vmem:[#allocation9 + $0x680] sm:$0xff]
    %v4216 = vld [vmem:[#allocation9 + $0x688] sm:$0xff]
    %v4217 = vld [vmem:[#allocation9 + $0x690] sm:$0xff]
    %v4218 = vld [vmem:[#allocation9 + $0x698] sm:$0xff]
    %v4219 = vld [vmem:[#allocation9 + $0x6a0] sm:$0xff]
    %v4220 = vld [vmem:[#allocation9 + $0x6a8] sm:$0xff]
    %v4221 = vld [vmem:[#allocation9 + $0x6b0] sm:$0xff]
    %v4222 = vld [vmem:[#allocation9 + $0x6b8] sm:$0xff]
    %v4223 = vld [vmem:[#allocation9 + $0x6c0] sm:$0xff]
    %v4224 = vld [vmem:[#allocation9 + $0x6c8] sm:$0xff]
    %v4225 = vld [vmem:[#allocation9 + $0x6d0] sm:$0xff]
    %v4226 = vld [vmem:[#allocation9 + $0x6d8] sm:$0xff]
    %v4227 = vld [vmem:[#allocation9 + $0x6e0] sm:$0xff]
    %v4228 = vld [vmem:[#allocation9 + $0x6e8] sm:$0xff]
    %v4229 = vld [vmem:[#allocation9 + $0x6f0] sm:$0xff]
    %v4230 = vld [vmem:[#allocation9 + $0x6f8] sm:$0xff]
    %v4231 = vld [vmem:[#allocation9 + $0x700] sm:$0xff]
    %v4232 = vld [vmem:[#allocation9 + $0x708] sm:$0xff]
    %v4233 = vld [vmem:[#allocation9 + $0x710] sm:$0xff]
    %v4234 = vld [vmem:[#allocation9 + $0x718] sm:$0xff]
    %v4235 = vld [vmem:[#allocation9 + $0x720] sm:$0xff]
    %v4236 = vld [vmem:[#allocation9 + $0x728] sm:$0xff]
    %v4237 = vld [vmem:[#allocation9 + $0x730] sm:$0xff]
    %v4238 = vld [vmem:[#allocation9 + $0x738] sm:$0xff]
    %v4239 = vld [vmem:[#allocation9 + $0x740] sm:$0xff]
    %v4240 = vld [vmem:[#allocation9 + $0x748] sm:$0xff]
    %v4241 = vld [vmem:[#allocation9 + $0x750] sm:$0xff]
    %v4242 = vld [vmem:[#allocation9 + $0x758] sm:$0xff]
    %v4243 = vld [vmem:[#allocation9 + $0x760] sm:$0xff]
    %v4244 = vld [vmem:[#allocation9 + $0x768] sm:$0xff]
    %v4245 = vld [vmem:[#allocation9 + $0x770] sm:$0xff]
    %v4246 = vld [vmem:[#allocation9 + $0x778] sm:$0xff]
    %v4247 = vld [vmem:[#allocation9 + $0x780] sm:$0xff]
    %v4248 = vld [vmem:[#allocation9 + $0x788] sm:$0xff]
    %v4249 = vld [vmem:[#allocation9 + $0x790] sm:$0xff]
    %v4250 = vld [vmem:[#allocation9 + $0x798] sm:$0xff]
    %v4251 = vld [vmem:[#allocation9 + $0x7a0] sm:$0xff]
    %v4252 = vld [vmem:[#allocation9 + $0x7a8] sm:$0xff]
    %v4253 = vld [vmem:[#allocation9 + $0x7b0] sm:$0xff]
    %v4254 = vld [vmem:[#allocation9 + $0x7b8] sm:$0xff]
    %v4255 = vld [vmem:[#allocation9 + $0x7c0] sm:$0xff]
    %v4256 = vld [vmem:[#allocation9 + $0x7c8] sm:$0xff]
    %v4257 = vld [vmem:[#allocation9 + $0x7d0] sm:$0xff]
    %v4258 = vld [vmem:[#allocation9 + $0x7d8] sm:$0xff]
    %v4259 = vld [vmem:[#allocation9 + $0x7e0] sm:$0xff]
    %v4260 = vld [vmem:[#allocation9 + $0x7e8] sm:$0xff]
    %v4261 = vld [vmem:[#allocation9 + $0x7f0] sm:$0xff]
    %v4262 = vld [vmem:[#allocation9 + $0x7f8] sm:$0xff]
    %v4263 = vld [vmem:[#allocation11] sm:$0xf]
    %v4265 = vlaneseq
    %v4266 = vshrl.u32 %v4265, 7
    %v4267 = vsub.s32 0, %v4266
    %v4268 = vrot.slane %v4263, %v4267
    %v4269 = vlaneseq
    %v4270 = vshrl.u32 %v4269, 7
    %v4271 = vsub.s32 1, %v4270
    %v4272 = vrot.slane %v4263, %v4271
    %v4273 = vlaneseq
    %v4274 = vshrl.u32 %v4273, 7
    %v4275 = vsub.s32 2, %v4274
    %v4276 = vrot.slane %v4263, %v4275
    %v4277 = vlaneseq
    %v4278 = vshrl.u32 %v4277, 7
    %v4279 = vsub.s32 3, %v4278
    %v4280 = vrot.slane %v4263, %v4279
    %v4541 = vunpack.c.l.b16 %v4007
    %v4542 = vunpack.c.h.b16 %v4007
    %v4543 = vunpack.c.l.b16 %v4008
    %v4544 = vunpack.c.h.b16 %v4008
    %v4545 = vunpack.c.l.b16 %v4009
    %v4546 = vunpack.c.h.b16 %v4009
    %v4547 = vunpack.c.l.b16 %v4010
    %v4548 = vunpack.c.h.b16 %v4010
    %v4549 = vunpack.c.l.b16 %v4011
    %v4550 = vunpack.c.h.b16 %v4011
    %v4551 = vunpack.c.l.b16 %v4012
    %v4552 = vunpack.c.h.b16 %v4012
    %v4553 = vunpack.c.l.b16 %v4013
    %v4554 = vunpack.c.h.b16 %v4013
    %v4555 = vunpack.c.l.b16 %v4014
    %v4556 = vunpack.c.h.b16 %v4014
    %v4557 = vunpack.c.l.b16 %v4015
    %v4558 = vunpack.c.h.b16 %v4015
    %v4559 = vunpack.c.l.b16 %v4016
    %v4560 = vunpack.c.h.b16 %v4016
    %v4561 = vunpack.c.l.b16 %v4017
    %v4562 = vunpack.c.h.b16 %v4017
    %v4563 = vunpack.c.l.b16 %v4018
    %v4564 = vunpack.c.h.b16 %v4018
    %v4565 = vunpack.c.l.b16 %v4019
    %v4566 = vunpack.c.h.b16 %v4019
    %v4567 = vunpack.c.l.b16 %v4020
    %v4568 = vunpack.c.h.b16 %v4020
    %v4569 = vunpack.c.l.b16 %v4021
    %v4570 = vunpack.c.h.b16 %v4021
    %v4571 = vunpack.c.l.b16 %v4022
    %v4572 = vunpack.c.h.b16 %v4022
    %v4573 = vunpack.c.l.b16 %v4023
    %v4574 = vunpack.c.h.b16 %v4023
    %v4575 = vunpack.c.l.b16 %v4024
    %v4576 = vunpack.c.h.b16 %v4024
    %v4577 = vunpack.c.l.b16 %v4025
    %v4578 = vunpack.c.h.b16 %v4025
    %v4579 = vunpack.c.l.b16 %v4026
    %v4580 = vunpack.c.h.b16 %v4026
    %v4581 = vunpack.c.l.b16 %v4027
    %v4582 = vunpack.c.h.b16 %v4027
    %v4583 = vunpack.c.l.b16 %v4028
    %v4584 = vunpack.c.h.b16 %v4028
    %v4585 = vunpack.c.l.b16 %v4029
    %v4586 = vunpack.c.h.b16 %v4029
    %v4587 = vunpack.c.l.b16 %v4030
    %v4588 = vunpack.c.h.b16 %v4030
    %v4589 = vunpack.c.l.b16 %v4031
    %v4590 = vunpack.c.h.b16 %v4031
    %v4591 = vunpack.c.l.b16 %v4032
    %v4592 = vunpack.c.h.b16 %v4032
    %v4593 = vunpack.c.l.b16 %v4033
    %v4594 = vunpack.c.h.b16 %v4033
    %v4595 = vunpack.c.l.b16 %v4034
    %v4596 = vunpack.c.h.b16 %v4034
    %v4597 = vunpack.c.l.b16 %v4035
    %v4598 = vunpack.c.h.b16 %v4035
    %v4599 = vunpack.c.l.b16 %v4036
    %v4600 = vunpack.c.h.b16 %v4036
    %v4601 = vunpack.c.l.b16 %v4037
    %v4602 = vunpack.c.h.b16 %v4037
    %v4603 = vunpack.c.l.b16 %v4038
    %v4604 = vunpack.c.h.b16 %v4038
    %v4605 = vunpack.c.l.b16 %v4039
    %v4606 = vunpack.c.h.b16 %v4039
    %v4607 = vunpack.c.l.b16 %v4040
    %v4608 = vunpack.c.h.b16 %v4040
    %v4609 = vunpack.c.l.b16 %v4041
    %v4610 = vunpack.c.h.b16 %v4041
    %v4611 = vunpack.c.l.b16 %v4042
    %v4612 = vunpack.c.h.b16 %v4042
    %v4613 = vunpack.c.l.b16 %v4043
    %v4614 = vunpack.c.h.b16 %v4043
    %v4615 = vunpack.c.l.b16 %v4044
    %v4616 = vunpack.c.h.b16 %v4044
    %v4617 = vunpack.c.l.b16 %v4045
    %v4618 = vunpack.c.h.b16 %v4045
    %v4619 = vunpack.c.l.b16 %v4046
    %v4620 = vunpack.c.h.b16 %v4046
    %v4621 = vunpack.c.l.b16 %v4047
    %v4622 = vunpack.c.h.b16 %v4047
    %v4623 = vunpack.c.l.b16 %v4048
    %v4624 = vunpack.c.h.b16 %v4048
    %v4625 = vunpack.c.l.b16 %v4049
    %v4626 = vunpack.c.h.b16 %v4049
    %v4627 = vunpack.c.l.b16 %v4050
    %v4628 = vunpack.c.h.b16 %v4050
    %v4629 = vunpack.c.l.b16 %v4051
    %v4630 = vunpack.c.h.b16 %v4051
    %v4631 = vunpack.c.l.b16 %v4052
    %v4632 = vunpack.c.h.b16 %v4052
    %v4633 = vunpack.c.l.b16 %v4053
    %v4634 = vunpack.c.h.b16 %v4053
    %v4635 = vunpack.c.l.b16 %v4054
    %v4636 = vunpack.c.h.b16 %v4054
    %v4637 = vunpack.c.l.b16 %v4055
    %v4638 = vunpack.c.h.b16 %v4055
    %v4639 = vunpack.c.l.b16 %v4056
    %v4640 = vunpack.c.h.b16 %v4056
    %v4641 = vunpack.c.l.b16 %v4057
    %v4642 = vunpack.c.h.b16 %v4057
    %v4643 = vunpack.c.l.b16 %v4058
    %v4644 = vunpack.c.h.b16 %v4058
    %v4645 = vunpack.c.l.b16 %v4059
    %v4646 = vunpack.c.h.b16 %v4059
    %v4647 = vunpack.c.l.b16 %v4060
    %v4648 = vunpack.c.h.b16 %v4060
    %v4649 = vunpack.c.l.b16 %v4061
    %v4650 = vunpack.c.h.b16 %v4061
    %v4651 = vunpack.c.l.b16 %v4062
    %v4652 = vunpack.c.h.b16 %v4062
    %v4653 = vunpack.c.l.b16 %v4063
    %v4654 = vunpack.c.h.b16 %v4063
    %v4655 = vunpack.c.l.b16 %v4064
    %v4656 = vunpack.c.h.b16 %v4064
    %v4657 = vunpack.c.l.b16 %v4065
    %v4658 = vunpack.c.h.b16 %v4065
    %v4659 = vunpack.c.l.b16 %v4066
    %v4660 = vunpack.c.h.b16 %v4066
    %v4661 = vunpack.c.l.b16 %v4067
    %v4662 = vunpack.c.h.b16 %v4067
    %v4663 = vunpack.c.l.b16 %v4068
    %v4664 = vunpack.c.h.b16 %v4068
    %v4665 = vunpack.c.l.b16 %v4069
    %v4666 = vunpack.c.h.b16 %v4069
    %v4667 = vunpack.c.l.b16 %v4070
    %v4668 = vunpack.c.h.b16 %v4070
    %v4669 = vunpack.c.l.b16 %v4071
    %v4670 = vunpack.c.h.b16 %v4071
    %v4671 = vunpack.c.l.b16 %v4072
    %v4672 = vunpack.c.h.b16 %v4072
    %v4673 = vunpack.c.l.b16 %v4073
    %v4674 = vunpack.c.h.b16 %v4073
    %v4675 = vunpack.c.l.b16 %v4074
    %v4676 = vunpack.c.h.b16 %v4074
    %v4677 = vunpack.c.l.b16 %v4075
    %v4678 = vunpack.c.h.b16 %v4075
    %v4679 = vunpack.c.l.b16 %v4076
    %v4680 = vunpack.c.h.b16 %v4076
    %v4681 = vunpack.c.l.b16 %v4077
    %v4682 = vunpack.c.h.b16 %v4077
    %v4683 = vunpack.c.l.b16 %v4078
    %v4684 = vunpack.c.h.b16 %v4078
    %v4685 = vunpack.c.l.b16 %v4079
    %v4686 = vunpack.c.h.b16 %v4079
    %v4687 = vunpack.c.l.b16 %v4080
    %v4688 = vunpack.c.h.b16 %v4080
    %v4689 = vunpack.c.l.b16 %v4081
    %v4690 = vunpack.c.h.b16 %v4081
    %v4691 = vunpack.c.l.b16 %v4082
    %v4692 = vunpack.c.h.b16 %v4082
    %v4693 = vunpack.c.l.b16 %v4083
    %v4694 = vunpack.c.h.b16 %v4083
    %v4695 = vunpack.c.l.b16 %v4084
    %v4696 = vunpack.c.h.b16 %v4084
    %v4697 = vunpack.c.l.b16 %v4085
    %v4698 = vunpack.c.h.b16 %v4085
    %v4699 = vunpack.c.l.b16 %v4086
    %v4700 = vunpack.c.h.b16 %v4086
    %v4701 = vunpack.c.l.b16 %v4087
    %v4702 = vunpack.c.h.b16 %v4087
    %v4703 = vunpack.c.l.b16 %v4088
    %v4704 = vunpack.c.h.b16 %v4088
    %v4705 = vunpack.c.l.b16 %v4089
    %v4706 = vunpack.c.h.b16 %v4089
    %v4707 = vunpack.c.l.b16 %v4090
    %v4708 = vunpack.c.h.b16 %v4090
    %v4709 = vunpack.c.l.b16 %v4091
    %v4710 = vunpack.c.h.b16 %v4091
    %v4711 = vunpack.c.l.b16 %v4092
    %v4712 = vunpack.c.h.b16 %v4092
    %v4713 = vunpack.c.l.b16 %v4093
    %v4714 = vunpack.c.h.b16 %v4093
    %v4715 = vunpack.c.l.b16 %v4094
    %v4716 = vunpack.c.h.b16 %v4094
    %v4717 = vunpack.c.l.b16 %v4095
    %v4718 = vunpack.c.h.b16 %v4095
    %v4719 = vunpack.c.l.b16 %v4096
    %v4720 = vunpack.c.h.b16 %v4096
    %v4721 = vunpack.c.l.b16 %v4097
    %v4722 = vunpack.c.h.b16 %v4097
    %v4723 = vunpack.c.l.b16 %v4098
    %v4724 = vunpack.c.h.b16 %v4098
    %v4725 = vunpack.c.l.b16 %v4099
    %v4726 = vunpack.c.h.b16 %v4099
    %v4727 = vunpack.c.l.b16 %v4100
    %v4728 = vunpack.c.h.b16 %v4100
    %v4729 = vunpack.c.l.b16 %v4101
    %v4730 = vunpack.c.h.b16 %v4101
    %v4731 = vunpack.c.l.b16 %v4102
    %v4732 = vunpack.c.h.b16 %v4102
    %v4733 = vunpack.c.l.b16 %v4103
    %v4734 = vunpack.c.h.b16 %v4103
    %v4735 = vunpack.c.l.b16 %v4104
    %v4736 = vunpack.c.h.b16 %v4104
    %v4737 = vunpack.c.l.b16 %v4105
    %v4738 = vunpack.c.h.b16 %v4105
    %v4739 = vunpack.c.l.b16 %v4106
    %v4740 = vunpack.c.h.b16 %v4106
    %v4741 = vunpack.c.l.b16 %v4107
    %v4742 = vunpack.c.h.b16 %v4107
    %v4743 = vunpack.c.l.b16 %v4108
    %v4744 = vunpack.c.h.b16 %v4108
    %v4745 = vunpack.c.l.b16 %v4109
    %v4746 = vunpack.c.h.b16 %v4109
    %v4747 = vunpack.c.l.b16 %v4110
    %v4748 = vunpack.c.h.b16 %v4110
    %v4749 = vunpack.c.l.b16 %v4111
    %v4750 = vunpack.c.h.b16 %v4111
    %v4751 = vunpack.c.l.b16 %v4112
    %v4752 = vunpack.c.h.b16 %v4112
    %v4753 = vunpack.c.l.b16 %v4113
    %v4754 = vunpack.c.h.b16 %v4113
    %v4755 = vunpack.c.l.b16 %v4114
    %v4756 = vunpack.c.h.b16 %v4114
    %v4757 = vunpack.c.l.b16 %v4115
    %v4758 = vunpack.c.h.b16 %v4115
    %v4759 = vunpack.c.l.b16 %v4116
    %v4760 = vunpack.c.h.b16 %v4116
    %v4761 = vunpack.c.l.b16 %v4117
    %v4762 = vunpack.c.h.b16 %v4117
    %v4763 = vunpack.c.l.b16 %v4118
    %v4764 = vunpack.c.h.b16 %v4118
    %v4765 = vunpack.c.l.b16 %v4119
    %v4766 = vunpack.c.h.b16 %v4119
    %v4767 = vunpack.c.l.b16 %v4120
    %v4768 = vunpack.c.h.b16 %v4120
    %v4769 = vunpack.c.l.b16 %v4121
    %v4770 = vunpack.c.h.b16 %v4121
    %v4771 = vunpack.c.l.b16 %v4122
    %v4772 = vunpack.c.h.b16 %v4122
    %v4773 = vunpack.c.l.b16 %v4123
    %v4774 = vunpack.c.h.b16 %v4123
    %v4775 = vunpack.c.l.b16 %v4124
    %v4776 = vunpack.c.h.b16 %v4124
    %v4777 = vunpack.c.l.b16 %v4125
    %v4778 = vunpack.c.h.b16 %v4125
    %v4779 = vunpack.c.l.b16 %v4126
    %v4780 = vunpack.c.h.b16 %v4126
    %v4781 = vunpack.c.l.b16 %v4127
    %v4782 = vunpack.c.h.b16 %v4127
    %v4783 = vunpack.c.l.b16 %v4128
    %v4784 = vunpack.c.h.b16 %v4128
    %v4785 = vunpack.c.l.b16 %v4129
    %v4786 = vunpack.c.h.b16 %v4129
    %v4787 = vunpack.c.l.b16 %v4130
    %v4788 = vunpack.c.h.b16 %v4130
    %v4789 = vunpack.c.l.b16 %v4131
    %v4790 = vunpack.c.h.b16 %v4131
    %v4791 = vunpack.c.l.b16 %v4132
    %v4792 = vunpack.c.h.b16 %v4132
    %v4793 = vunpack.c.l.b16 %v4133
    %v4794 = vunpack.c.h.b16 %v4133
    %v4795 = vunpack.c.l.b16 %v4134
    %v4796 = vunpack.c.h.b16 %v4134
    %v4797 = vunpack.c.l.b16 %v4135
    %v4798 = vunpack.c.h.b16 %v4135
    %v4799 = vunpack.c.l.b16 %v4136
    %v4800 = vunpack.c.h.b16 %v4136
    %v4801 = vunpack.c.l.b16 %v4137
    %v4802 = vunpack.c.h.b16 %v4137
    %v4803 = vunpack.c.l.b16 %v4138
    %v4804 = vunpack.c.h.b16 %v4138
    %v4805 = vunpack.c.l.b16 %v4139
    %v4806 = vunpack.c.h.b16 %v4139
    %v4807 = vunpack.c.l.b16 %v4140
    %v4808 = vunpack.c.h.b16 %v4140
    %v4809 = vunpack.c.l.b16 %v4141
    %v4810 = vunpack.c.h.b16 %v4141
    %v4811 = vunpack.c.l.b16 %v4142
    %v4812 = vunpack.c.h.b16 %v4142
    %v4813 = vunpack.c.l.b16 %v4143
    %v4814 = vunpack.c.h.b16 %v4143
    %v4815 = vunpack.c.l.b16 %v4144
    %v4816 = vunpack.c.h.b16 %v4144
    %v4817 = vunpack.c.l.b16 %v4145
    %v4818 = vunpack.c.h.b16 %v4145
    %v4819 = vunpack.c.l.b16 %v4146
    %v4820 = vunpack.c.h.b16 %v4146
    %v4821 = vunpack.c.l.b16 %v4147
    %v4822 = vunpack.c.h.b16 %v4147
    %v4823 = vunpack.c.l.b16 %v4148
    %v4824 = vunpack.c.h.b16 %v4148
    %v4825 = vunpack.c.l.b16 %v4149
    %v4826 = vunpack.c.h.b16 %v4149
    %v4827 = vunpack.c.l.b16 %v4150
    %v4828 = vunpack.c.h.b16 %v4150
    %v4829 = vunpack.c.l.b16 %v4151
    %v4830 = vunpack.c.h.b16 %v4151
    %v4831 = vunpack.c.l.b16 %v4152
    %v4832 = vunpack.c.h.b16 %v4152
    %v4833 = vunpack.c.l.b16 %v4153
    %v4834 = vunpack.c.h.b16 %v4153
    %v4835 = vunpack.c.l.b16 %v4154
    %v4836 = vunpack.c.h.b16 %v4154
    %v4837 = vunpack.c.l.b16 %v4155
    %v4838 = vunpack.c.h.b16 %v4155
    %v4839 = vunpack.c.l.b16 %v4156
    %v4840 = vunpack.c.h.b16 %v4156
    %v4841 = vunpack.c.l.b16 %v4157
    %v4842 = vunpack.c.h.b16 %v4157
    %v4843 = vunpack.c.l.b16 %v4158
    %v4844 = vunpack.c.h.b16 %v4158
    %v4845 = vunpack.c.l.b16 %v4159
    %v4846 = vunpack.c.h.b16 %v4159
    %v4847 = vunpack.c.l.b16 %v4160
    %v4848 = vunpack.c.h.b16 %v4160
    %v4849 = vunpack.c.l.b16 %v4161
    %v4850 = vunpack.c.h.b16 %v4161
    %v4851 = vunpack.c.l.b16 %v4162
    %v4852 = vunpack.c.h.b16 %v4162
    %v4853 = vunpack.c.l.b16 %v4163
    %v4854 = vunpack.c.h.b16 %v4163
    %v4855 = vunpack.c.l.b16 %v4164
    %v4856 = vunpack.c.h.b16 %v4164
    %v4857 = vunpack.c.l.b16 %v4165
    %v4858 = vunpack.c.h.b16 %v4165
    %v4859 = vunpack.c.l.b16 %v4166
    %v4860 = vunpack.c.h.b16 %v4166
    %v4861 = vunpack.c.l.b16 %v4167
    %v4862 = vunpack.c.h.b16 %v4167
    %v4863 = vunpack.c.l.b16 %v4168
    %v4864 = vunpack.c.h.b16 %v4168
    %v4865 = vunpack.c.l.b16 %v4169
    %v4866 = vunpack.c.h.b16 %v4169
    %v4867 = vunpack.c.l.b16 %v4170
    %v4868 = vunpack.c.h.b16 %v4170
    %v4869 = vunpack.c.l.b16 %v4171
    %v4870 = vunpack.c.h.b16 %v4171
    %v4871 = vunpack.c.l.b16 %v4172
    %v4872 = vunpack.c.h.b16 %v4172
    %v4873 = vunpack.c.l.b16 %v4173
    %v4874 = vunpack.c.h.b16 %v4173
    %v4875 = vunpack.c.l.b16 %v4174
    %v4876 = vunpack.c.h.b16 %v4174
    %v4877 = vunpack.c.l.b16 %v4175
    %v4878 = vunpack.c.h.b16 %v4175
    %v4879 = vunpack.c.l.b16 %v4176
    %v4880 = vunpack.c.h.b16 %v4176
    %v4881 = vunpack.c.l.b16 %v4177
    %v4882 = vunpack.c.h.b16 %v4177
    %v4883 = vunpack.c.l.b16 %v4178
    %v4884 = vunpack.c.h.b16 %v4178
    %v4885 = vunpack.c.l.b16 %v4179
    %v4886 = vunpack.c.h.b16 %v4179
    %v4887 = vunpack.c.l.b16 %v4180
    %v4888 = vunpack.c.h.b16 %v4180
    %v4889 = vunpack.c.l.b16 %v4181
    %v4890 = vunpack.c.h.b16 %v4181
    %v4891 = vunpack.c.l.b16 %v4182
    %v4892 = vunpack.c.h.b16 %v4182
    %v4893 = vunpack.c.l.b16 %v4183
    %v4894 = vunpack.c.h.b16 %v4183
    %v4895 = vunpack.c.l.b16 %v4184
    %v4896 = vunpack.c.h.b16 %v4184
    %v4897 = vunpack.c.l.b16 %v4185
    %v4898 = vunpack.c.h.b16 %v4185
    %v4899 = vunpack.c.l.b16 %v4186
    %v4900 = vunpack.c.h.b16 %v4186
    %v4901 = vunpack.c.l.b16 %v4187
    %v4902 = vunpack.c.h.b16 %v4187
    %v4903 = vunpack.c.l.b16 %v4188
    %v4904 = vunpack.c.h.b16 %v4188
    %v4905 = vunpack.c.l.b16 %v4189
    %v4906 = vunpack.c.h.b16 %v4189
    %v4907 = vunpack.c.l.b16 %v4190
    %v4908 = vunpack.c.h.b16 %v4190
    %v4909 = vunpack.c.l.b16 %v4191
    %v4910 = vunpack.c.h.b16 %v4191
    %v4911 = vunpack.c.l.b16 %v4192
    %v4912 = vunpack.c.h.b16 %v4192
    %v4913 = vunpack.c.l.b16 %v4193
    %v4914 = vunpack.c.h.b16 %v4193
    %v4915 = vunpack.c.l.b16 %v4194
    %v4916 = vunpack.c.h.b16 %v4194
    %v4917 = vunpack.c.l.b16 %v4195
    %v4918 = vunpack.c.h.b16 %v4195
    %v4919 = vunpack.c.l.b16 %v4196
    %v4920 = vunpack.c.h.b16 %v4196
    %v4921 = vunpack.c.l.b16 %v4197
    %v4922 = vunpack.c.h.b16 %v4197
    %v4923 = vunpack.c.l.b16 %v4198
    %v4924 = vunpack.c.h.b16 %v4198
    %v4925 = vunpack.c.l.b16 %v4199
    %v4926 = vunpack.c.h.b16 %v4199
    %v4927 = vunpack.c.l.b16 %v4200
    %v4928 = vunpack.c.h.b16 %v4200
    %v4929 = vunpack.c.l.b16 %v4201
    %v4930 = vunpack.c.h.b16 %v4201
    %v4931 = vunpack.c.l.b16 %v4202
    %v4932 = vunpack.c.h.b16 %v4202
    %v4933 = vunpack.c.l.b16 %v4203
    %v4934 = vunpack.c.h.b16 %v4203
    %v4935 = vunpack.c.l.b16 %v4204
    %v4936 = vunpack.c.h.b16 %v4204
    %v4937 = vunpack.c.l.b16 %v4205
    %v4938 = vunpack.c.h.b16 %v4205
    %v4939 = vunpack.c.l.b16 %v4206
    %v4940 = vunpack.c.h.b16 %v4206
    %v4941 = vunpack.c.l.b16 %v4207
    %v4942 = vunpack.c.h.b16 %v4207
    %v4943 = vunpack.c.l.b16 %v4208
    %v4944 = vunpack.c.h.b16 %v4208
    %v4945 = vunpack.c.l.b16 %v4209
    %v4946 = vunpack.c.h.b16 %v4209
    %v4947 = vunpack.c.l.b16 %v4210
    %v4948 = vunpack.c.h.b16 %v4210
    %v4949 = vunpack.c.l.b16 %v4211
    %v4950 = vunpack.c.h.b16 %v4211
    %v4951 = vunpack.c.l.b16 %v4212
    %v4952 = vunpack.c.h.b16 %v4212
    %v4953 = vunpack.c.l.b16 %v4213
    %v4954 = vunpack.c.h.b16 %v4213
    %v4955 = vunpack.c.l.b16 %v4214
    %v4956 = vunpack.c.h.b16 %v4214
    %v4957 = vunpack.c.l.b16 %v4215
    %v4958 = vunpack.c.h.b16 %v4215
    %v4959 = vunpack.c.l.b16 %v4216
    %v4960 = vunpack.c.h.b16 %v4216
    %v4961 = vunpack.c.l.b16 %v4217
    %v4962 = vunpack.c.h.b16 %v4217
    %v4963 = vunpack.c.l.b16 %v4218
    %v4964 = vunpack.c.h.b16 %v4218
    %v4965 = vunpack.c.l.b16 %v4219
    %v4966 = vunpack.c.h.b16 %v4219
    %v4967 = vunpack.c.l.b16 %v4220
    %v4968 = vunpack.c.h.b16 %v4220
    %v4969 = vunpack.c.l.b16 %v4221
    %v4970 = vunpack.c.h.b16 %v4221
    %v4971 = vunpack.c.l.b16 %v4222
    %v4972 = vunpack.c.h.b16 %v4222
    %v4973 = vunpack.c.l.b16 %v4223
    %v4974 = vunpack.c.h.b16 %v4223
    %v4975 = vunpack.c.l.b16 %v4224
    %v4976 = vunpack.c.h.b16 %v4224
    %v4977 = vunpack.c.l.b16 %v4225
    %v4978 = vunpack.c.h.b16 %v4225
    %v4979 = vunpack.c.l.b16 %v4226
    %v4980 = vunpack.c.h.b16 %v4226
    %v4981 = vunpack.c.l.b16 %v4227
    %v4982 = vunpack.c.h.b16 %v4227
    %v4983 = vunpack.c.l.b16 %v4228
    %v4984 = vunpack.c.h.b16 %v4228
    %v4985 = vunpack.c.l.b16 %v4229
    %v4986 = vunpack.c.h.b16 %v4229
    %v4987 = vunpack.c.l.b16 %v4230
    %v4988 = vunpack.c.h.b16 %v4230
    %v4989 = vunpack.c.l.b16 %v4231
    %v4990 = vunpack.c.h.b16 %v4231
    %v4991 = vunpack.c.l.b16 %v4232
    %v4992 = vunpack.c.h.b16 %v4232
    %v4993 = vunpack.c.l.b16 %v4233
    %v4994 = vunpack.c.h.b16 %v4233
    %v4995 = vunpack.c.l.b16 %v4234
    %v4996 = vunpack.c.h.b16 %v4234
    %v4997 = vunpack.c.l.b16 %v4235
    %v4998 = vunpack.c.h.b16 %v4235
    %v4999 = vunpack.c.l.b16 %v4236
    %v5000 = vunpack.c.h.b16 %v4236
    %v5001 = vunpack.c.l.b16 %v4237
    %v5002 = vunpack.c.h.b16 %v4237
    %v5003 = vunpack.c.l.b16 %v4238
    %v5004 = vunpack.c.h.b16 %v4238
    %v5005 = vunpack.c.l.b16 %v4239
    %v5006 = vunpack.c.h.b16 %v4239
    %v5007 = vunpack.c.l.b16 %v4240
    %v5008 = vunpack.c.h.b16 %v4240
    %v5009 = vunpack.c.l.b16 %v4241
    %v5010 = vunpack.c.h.b16 %v4241
    %v5011 = vunpack.c.l.b16 %v4242
    %v5012 = vunpack.c.h.b16 %v4242
    %v5013 = vunpack.c.l.b16 %v4243
    %v5014 = vunpack.c.h.b16 %v4243
    %v5015 = vunpack.c.l.b16 %v4244
    %v5016 = vunpack.c.h.b16 %v4244
    %v5017 = vunpack.c.l.b16 %v4245
    %v5018 = vunpack.c.h.b16 %v4245
    %v5019 = vunpack.c.l.b16 %v4246
    %v5020 = vunpack.c.h.b16 %v4246
    %v5021 = vunpack.c.l.b16 %v4247
    %v5022 = vunpack.c.h.b16 %v4247
    %v5023 = vunpack.c.l.b16 %v4248
    %v5024 = vunpack.c.h.b16 %v4248
    %v5025 = vunpack.c.l.b16 %v4249
    %v5026 = vunpack.c.h.b16 %v4249
    %v5027 = vunpack.c.l.b16 %v4250
    %v5028 = vunpack.c.h.b16 %v4250
    %v5029 = vunpack.c.l.b16 %v4251
    %v5030 = vunpack.c.h.b16 %v4251
    %v5031 = vunpack.c.l.b16 %v4252
    %v5032 = vunpack.c.h.b16 %v4252
    %v5033 = vunpack.c.l.b16 %v4253
    %v5034 = vunpack.c.h.b16 %v4253
    %v5035 = vunpack.c.l.b16 %v4254
    %v5036 = vunpack.c.h.b16 %v4254
    %v5037 = vunpack.c.l.b16 %v4255
    %v5038 = vunpack.c.h.b16 %v4255
    %v5039 = vunpack.c.l.b16 %v4256
    %v5040 = vunpack.c.h.b16 %v4256
    %v5041 = vunpack.c.l.b16 %v4257
    %v5042 = vunpack.c.h.b16 %v4257
    %v5043 = vunpack.c.l.b16 %v4258
    %v5044 = vunpack.c.h.b16 %v4258
    %v5045 = vunpack.c.l.b16 %v4259
    %v5046 = vunpack.c.h.b16 %v4259
    %v5047 = vunpack.c.l.b16 %v4260
    %v5048 = vunpack.c.h.b16 %v4260
    %v5049 = vunpack.c.l.b16 %v4261
    %v5050 = vunpack.c.h.b16 %v4261
    %v5051 = vunpack.c.l.b16 %v4262
    %v5052 = vunpack.c.h.b16 %v4262
    %v5053 = vpack.c.b16 %v4545, %v4541
    %v5054 = vpack.c.b16 %v4546, %v4542
    %v5055 = vpack.c.b16 %v4547, %v4543
    %v5056 = vpack.c.b16 %v4548, %v4544
    %v5057 = vpack.c.b16 %v4553, %v4549
    %v5058 = vpack.c.b16 %v4554, %v4550
    %v5059 = vpack.c.b16 %v4555, %v4551
    %v5060 = vpack.c.b16 %v4556, %v4552
    %v5061 = vpack.c.b16 %v4561, %v4557
    %v5062 = vpack.c.b16 %v4562, %v4558
    %v5063 = vpack.c.b16 %v4563, %v4559
    %v5064 = vpack.c.b16 %v4564, %v4560
    %v5065 = vpack.c.b16 %v4569, %v4565
    %v5066 = vpack.c.b16 %v4570, %v4566
    %v5067 = vpack.c.b16 %v4571, %v4567
    %v5068 = vpack.c.b16 %v4572, %v4568
    %v5069 = vpack.c.b16 %v4577, %v4573
    %v5070 = vpack.c.b16 %v4578, %v4574
    %v5071 = vpack.c.b16 %v4579, %v4575
    %v5072 = vpack.c.b16 %v4580, %v4576
    %v5073 = vpack.c.b16 %v4585, %v4581
    %v5074 = vpack.c.b16 %v4586, %v4582
    %v5075 = vpack.c.b16 %v4587, %v4583
    %v5076 = vpack.c.b16 %v4588, %v4584
    %v5077 = vpack.c.b16 %v4593, %v4589
    %v5078 = vpack.c.b16 %v4594, %v4590
    %v5079 = vpack.c.b16 %v4595, %v4591
    %v5080 = vpack.c.b16 %v4596, %v4592
    %v5081 = vpack.c.b16 %v4601, %v4597
    %v5082 = vpack.c.b16 %v4602, %v4598
    %v5083 = vpack.c.b16 %v4603, %v4599
    %v5084 = vpack.c.b16 %v4604, %v4600
    %v5085 = vpack.c.b16 %v4609, %v4605
    %v5086 = vpack.c.b16 %v4610, %v4606
    %v5087 = vpack.c.b16 %v4611, %v4607
    %v5088 = vpack.c.b16 %v4612, %v4608
    %v5089 = vpack.c.b16 %v4617, %v4613
    %v5090 = vpack.c.b16 %v4618, %v4614
    %v5091 = vpack.c.b16 %v4619, %v4615
    %v5092 = vpack.c.b16 %v4620, %v4616
    %v5093 = vpack.c.b16 %v4625, %v4621
    %v5094 = vpack.c.b16 %v4626, %v4622
    %v5095 = vpack.c.b16 %v4627, %v4623
    %v5096 = vpack.c.b16 %v4628, %v4624
    %v5097 = vpack.c.b16 %v4633, %v4629
    %v5098 = vpack.c.b16 %v4634, %v4630
    %v5099 = vpack.c.b16 %v4635, %v4631
    %v5100 = vpack.c.b16 %v4636, %v4632
    %v5101 = vpack.c.b16 %v4641, %v4637
    %v5102 = vpack.c.b16 %v4642, %v4638
    %v5103 = vpack.c.b16 %v4643, %v4639
    %v5104 = vpack.c.b16 %v4644, %v4640
    %v5105 = vpack.c.b16 %v4649, %v4645
    %v5106 = vpack.c.b16 %v4650, %v4646
    %v5107 = vpack.c.b16 %v4651, %v4647
    %v5108 = vpack.c.b16 %v4652, %v4648
    %v5109 = vpack.c.b16 %v4657, %v4653
    %v5110 = vpack.c.b16 %v4658, %v4654
    %v5111 = vpack.c.b16 %v4659, %v4655
    %v5112 = vpack.c.b16 %v4660, %v4656
    %v5113 = vpack.c.b16 %v4665, %v4661
    %v5114 = vpack.c.b16 %v4666, %v4662
    %v5115 = vpack.c.b16 %v4667, %v4663
    %v5116 = vpack.c.b16 %v4668, %v4664
    %v5117 = vpack.c.b16 %v4673, %v4669
    %v5118 = vpack.c.b16 %v4674, %v4670
    %v5119 = vpack.c.b16 %v4675, %v4671
    %v5120 = vpack.c.b16 %v4676, %v4672
    %v5121 = vpack.c.b16 %v4681, %v4677
    %v5122 = vpack.c.b16 %v4682, %v4678
    %v5123 = vpack.c.b16 %v4683, %v4679
    %v5124 = vpack.c.b16 %v4684, %v4680
    %v5125 = vpack.c.b16 %v4689, %v4685
    %v5126 = vpack.c.b16 %v4690, %v4686
    %v5127 = vpack.c.b16 %v4691, %v4687
    %v5128 = vpack.c.b16 %v4692, %v4688
    %v5129 = vpack.c.b16 %v4697, %v4693
    %v5130 = vpack.c.b16 %v4698, %v4694
    %v5131 = vpack.c.b16 %v4699, %v4695
    %v5132 = vpack.c.b16 %v4700, %v4696
    %v5133 = vpack.c.b16 %v4705, %v4701
    %v5134 = vpack.c.b16 %v4706, %v4702
    %v5135 = vpack.c.b16 %v4707, %v4703
    %v5136 = vpack.c.b16 %v4708, %v4704
    %v5137 = vpack.c.b16 %v4713, %v4709
    %v5138 = vpack.c.b16 %v4714, %v4710
    %v5139 = vpack.c.b16 %v4715, %v4711
    %v5140 = vpack.c.b16 %v4716, %v4712
    %v5141 = vpack.c.b16 %v4721, %v4717
    %v5142 = vpack.c.b16 %v4722, %v4718
    %v5143 = vpack.c.b16 %v4723, %v4719
    %v5144 = vpack.c.b16 %v4724, %v4720
    %v5145 = vpack.c.b16 %v4729, %v4725
    %v5146 = vpack.c.b16 %v4730, %v4726
    %v5147 = vpack.c.b16 %v4731, %v4727
    %v5148 = vpack.c.b16 %v4732, %v4728
    %v5149 = vpack.c.b16 %v4737, %v4733
    %v5150 = vpack.c.b16 %v4738, %v4734
    %v5151 = vpack.c.b16 %v4739, %v4735
    %v5152 = vpack.c.b16 %v4740, %v4736
    %v5153 = vpack.c.b16 %v4745, %v4741
    %v5154 = vpack.c.b16 %v4746, %v4742
    %v5155 = vpack.c.b16 %v4747, %v4743
    %v5156 = vpack.c.b16 %v4748, %v4744
    %v5157 = vpack.c.b16 %v4753, %v4749
    %v5158 = vpack.c.b16 %v4754, %v4750
    %v5159 = vpack.c.b16 %v4755, %v4751
    %v5160 = vpack.c.b16 %v4756, %v4752
    %v5161 = vpack.c.b16 %v4761, %v4757
    %v5162 = vpack.c.b16 %v4762, %v4758
    %v5163 = vpack.c.b16 %v4763, %v4759
    %v5164 = vpack.c.b16 %v4764, %v4760
    %v5165 = vpack.c.b16 %v4769, %v4765
    %v5166 = vpack.c.b16 %v4770, %v4766
    %v5167 = vpack.c.b16 %v4771, %v4767
    %v5168 = vpack.c.b16 %v4772, %v4768
    %v5169 = vpack.c.b16 %v4777, %v4773
    %v5170 = vpack.c.b16 %v4778, %v4774
    %v5171 = vpack.c.b16 %v4779, %v4775
    %v5172 = vpack.c.b16 %v4780, %v4776
    %v5173 = vpack.c.b16 %v4785, %v4781
    %v5174 = vpack.c.b16 %v4786, %v4782
    %v5175 = vpack.c.b16 %v4787, %v4783
    %v5176 = vpack.c.b16 %v4788, %v4784
    %v5177 = vpack.c.b16 %v4793, %v4789
    %v5178 = vpack.c.b16 %v4794, %v4790
    %v5179 = vpack.c.b16 %v4795, %v4791
    %v5180 = vpack.c.b16 %v4796, %v4792
    %v5181 = vpack.c.b16 %v4801, %v4797
    %v5182 = vpack.c.b16 %v4802, %v4798
    %v5183 = vpack.c.b16 %v4803, %v4799
    %v5184 = vpack.c.b16 %v4804, %v4800
    %v5185 = vpack.c.b16 %v4809, %v4805
    %v5186 = vpack.c.b16 %v4810, %v4806
    %v5187 = vpack.c.b16 %v4811, %v4807
    %v5188 = vpack.c.b16 %v4812, %v4808
    %v5189 = vpack.c.b16 %v4817, %v4813
    %v5190 = vpack.c.b16 %v4818, %v4814
    %v5191 = vpack.c.b16 %v4819, %v4815
    %v5192 = vpack.c.b16 %v4820, %v4816
    %v5193 = vpack.c.b16 %v4825, %v4821
    %v5194 = vpack.c.b16 %v4826, %v4822
    %v5195 = vpack.c.b16 %v4827, %v4823
    %v5196 = vpack.c.b16 %v4828, %v4824
    %v5197 = vpack.c.b16 %v4833, %v4829
    %v5198 = vpack.c.b16 %v4834, %v4830
    %v5199 = vpack.c.b16 %v4835, %v4831
    %v5200 = vpack.c.b16 %v4836, %v4832
    %v5201 = vpack.c.b16 %v4841, %v4837
    %v5202 = vpack.c.b16 %v4842, %v4838
    %v5203 = vpack.c.b16 %v4843, %v4839
    %v5204 = vpack.c.b16 %v4844, %v4840
    %v5205 = vpack.c.b16 %v4849, %v4845
    %v5206 = vpack.c.b16 %v4850, %v4846
    %v5207 = vpack.c.b16 %v4851, %v4847
    %v5208 = vpack.c.b16 %v4852, %v4848
    %v5209 = vpack.c.b16 %v4857, %v4853
    %v5210 = vpack.c.b16 %v4858, %v4854
    %v5211 = vpack.c.b16 %v4859, %v4855
    %v5212 = vpack.c.b16 %v4860, %v4856
    %v5213 = vpack.c.b16 %v4865, %v4861
    %v5214 = vpack.c.b16 %v4866, %v4862
    %v5215 = vpack.c.b16 %v4867, %v4863
    %v5216 = vpack.c.b16 %v4868, %v4864
    %v5217 = vpack.c.b16 %v4873, %v4869
    %v5218 = vpack.c.b16 %v4874, %v4870
    %v5219 = vpack.c.b16 %v4875, %v4871
    %v5220 = vpack.c.b16 %v4876, %v4872
    %v5221 = vpack.c.b16 %v4881, %v4877
    %v5222 = vpack.c.b16 %v4882, %v4878
    %v5223 = vpack.c.b16 %v4883, %v4879
    %v5224 = vpack.c.b16 %v4884, %v4880
    %v5225 = vpack.c.b16 %v4889, %v4885
    %v5226 = vpack.c.b16 %v4890, %v4886
    %v5227 = vpack.c.b16 %v4891, %v4887
    %v5228 = vpack.c.b16 %v4892, %v4888
    %v5229 = vpack.c.b16 %v4897, %v4893
    %v5230 = vpack.c.b16 %v4898, %v4894
    %v5231 = vpack.c.b16 %v4899, %v4895
    %v5232 = vpack.c.b16 %v4900, %v4896
    %v5233 = vpack.c.b16 %v4905, %v4901
    %v5234 = vpack.c.b16 %v4906, %v4902
    %v5235 = vpack.c.b16 %v4907, %v4903
    %v5236 = vpack.c.b16 %v4908, %v4904
    %v5237 = vpack.c.b16 %v4913, %v4909
    %v5238 = vpack.c.b16 %v4914, %v4910
    %v5239 = vpack.c.b16 %v4915, %v4911
    %v5240 = vpack.c.b16 %v4916, %v4912
    %v5241 = vpack.c.b16 %v4921, %v4917
    %v5242 = vpack.c.b16 %v4922, %v4918
    %v5243 = vpack.c.b16 %v4923, %v4919
    %v5244 = vpack.c.b16 %v4924, %v4920
    %v5245 = vpack.c.b16 %v4929, %v4925
    %v5246 = vpack.c.b16 %v4930, %v4926
    %v5247 = vpack.c.b16 %v4931, %v4927
    %v5248 = vpack.c.b16 %v4932, %v4928
    %v5249 = vpack.c.b16 %v4937, %v4933
    %v5250 = vpack.c.b16 %v4938, %v4934
    %v5251 = vpack.c.b16 %v4939, %v4935
    %v5252 = vpack.c.b16 %v4940, %v4936
    %v5253 = vpack.c.b16 %v4945, %v4941
    %v5254 = vpack.c.b16 %v4946, %v4942
    %v5255 = vpack.c.b16 %v4947, %v4943
    %v5256 = vpack.c.b16 %v4948, %v4944
    %v5257 = vpack.c.b16 %v4953, %v4949
    %v5258 = vpack.c.b16 %v4954, %v4950
    %v5259 = vpack.c.b16 %v4955, %v4951
    %v5260 = vpack.c.b16 %v4956, %v4952
    %v5261 = vpack.c.b16 %v4961, %v4957
    %v5262 = vpack.c.b16 %v4962, %v4958
    %v5263 = vpack.c.b16 %v4963, %v4959
    %v5264 = vpack.c.b16 %v4964, %v4960
    %v5265 = vpack.c.b16 %v4969, %v4965
    %v5266 = vpack.c.b16 %v4970, %v4966
    %v5267 = vpack.c.b16 %v4971, %v4967
    %v5268 = vpack.c.b16 %v4972, %v4968
    %v5269 = vpack.c.b16 %v4977, %v4973
    %v5270 = vpack.c.b16 %v4978, %v4974
    %v5271 = vpack.c.b16 %v4979, %v4975
    %v5272 = vpack.c.b16 %v4980, %v4976
    %v5273 = vpack.c.b16 %v4985, %v4981
    %v5274 = vpack.c.b16 %v4986, %v4982
    %v5275 = vpack.c.b16 %v4987, %v4983
    %v5276 = vpack.c.b16 %v4988, %v4984
    %v5277 = vpack.c.b16 %v4993, %v4989
    %v5278 = vpack.c.b16 %v4994, %v4990
    %v5279 = vpack.c.b16 %v4995, %v4991
    %v5280 = vpack.c.b16 %v4996, %v4992
    %v5281 = vpack.c.b16 %v5001, %v4997
    %v5282 = vpack.c.b16 %v5002, %v4998
    %v5283 = vpack.c.b16 %v5003, %v4999
    %v5284 = vpack.c.b16 %v5004, %v5000
    %v5285 = vpack.c.b16 %v5009, %v5005
    %v5286 = vpack.c.b16 %v5010, %v5006
    %v5287 = vpack.c.b16 %v5011, %v5007
    %v5288 = vpack.c.b16 %v5012, %v5008
    %v5289 = vpack.c.b16 %v5017, %v5013
    %v5290 = vpack.c.b16 %v5018, %v5014
    %v5291 = vpack.c.b16 %v5019, %v5015
    %v5292 = vpack.c.b16 %v5020, %v5016
    %v5293 = vpack.c.b16 %v5025, %v5021
    %v5294 = vpack.c.b16 %v5026, %v5022
    %v5295 = vpack.c.b16 %v5027, %v5023
    %v5296 = vpack.c.b16 %v5028, %v5024
    %v5297 = vpack.c.b16 %v5033, %v5029
    %v5298 = vpack.c.b16 %v5034, %v5030
    %v5299 = vpack.c.b16 %v5035, %v5031
    %v5300 = vpack.c.b16 %v5036, %v5032
    %v5301 = vpack.c.b16 %v5041, %v5037
    %v5302 = vpack.c.b16 %v5042, %v5038
    %v5303 = vpack.c.b16 %v5043, %v5039
    %v5304 = vpack.c.b16 %v5044, %v5040
    %v5305 = vpack.c.b16 %v5049, %v5045
    %v5306 = vpack.c.b16 %v5050, %v5046
    %v5307 = vpack.c.b16 %v5051, %v5047
    %v5308 = vpack.c.b16 %v5052, %v5048
    %5565 = vmatprep.subr.bf16.mxu0 %v5054
    %5566 = vmatpush1.bf16.msra.mxu0 %v5053
    %5567 = vmatprep.subr.bf16.mxu0 %v5058
    %5568 = vmatpush1.bf16.msra.mxu0 %v5057
    %5569 = vmatprep.subr.bf16.mxu0 %v5062
    %5570 = vmatpush1.bf16.msra.mxu0 %v5061
    %5571 = vmatprep.subr.bf16.mxu0 %v5066
    %5572 = vmatpush1.bf16.msra.mxu0 %v5065
    %5573 = vmatprep.subr.bf16.mxu0 %v5070
    %5574 = vmatpush1.bf16.msra.mxu0 %v5069
    %5575 = vmatprep.subr.bf16.mxu0 %v5074
    %5576 = vmatpush1.bf16.msra.mxu0 %v5073
    %5577 = vmatprep.subr.bf16.mxu0 %v5078
    %5578 = vmatpush1.bf16.msra.mxu0 %v5077
    %5579 = vmatprep.subr.bf16.mxu0 %v5082
    %5580 = vmatpush1.bf16.msra.mxu0 %v5081
    %5581 = vmatprep.subr.bf16.mxu0 %v5086
    %5582 = vmatpush1.bf16.msra.mxu0 %v5085
    %5583 = vmatprep.subr.bf16.mxu0 %v5090
    %5584 = vmatpush1.bf16.msra.mxu0 %v5089
    %5585 = vmatprep.subr.bf16.mxu0 %v5094
    %5586 = vmatpush1.bf16.msra.mxu0 %v5093
    %5587 = vmatprep.subr.bf16.mxu0 %v5098
    %5588 = vmatpush1.bf16.msra.mxu0 %v5097
    %5589 = vmatprep.subr.bf16.mxu0 %v5102
    %5590 = vmatpush1.bf16.msra.mxu0 %v5101
    %5591 = vmatprep.subr.bf16.mxu0 %v5106
    %5592 = vmatpush1.bf16.msra.mxu0 %v5105
    %5593 = vmatprep.subr.bf16.mxu0 %v5110
    %5594 = vmatpush1.bf16.msra.mxu0 %v5109
    %5595 = vmatprep.subr.bf16.mxu0 %v5114
    %5596 = vmatpush1.bf16.msra.mxu0 %v5113
    %5597 = vmatprep.mubr.bf16.mxu0 %v4000
    %5598 = vmatmul.mubr.bf16.gmra.mrb[0].mxu0 %v3999
    %v5599 = vpop.f32.mrb[0].mxu0
    %v5600 = vadd.f32 %v4268, %v5599
    %v5601 = vpop.f32.mrb[0].mxu0
    %v5602 = vadd.f32 %v4272, %v5601
    %v5603 = vpop.f32.mrb[0].mxu0
    %v5604 = vadd.f32 %v4268, %v5603
    %v5605 = vpop.f32.mrb[0].mxu0
    %v5606 = vadd.f32 %v4272, %v5605
    %5607 = vdwg.mxu0
    %5608 = vmatprep.subr.bf16.mxu0 %v5118
    %5609 = vmatpush1.bf16.msra.mxu0 %v5117
    %5610 = vmatprep.subr.bf16.mxu0 %v5122
    %5611 = vmatpush1.bf16.msra.mxu0 %v5121
    %5612 = vmatprep.subr.bf16.mxu0 %v5126
    %5613 = vmatpush1.bf16.msra.mxu0 %v5125
    %5614 = vmatprep.subr.bf16.mxu0 %v5130
    %5615 = vmatpush1.bf16.msra.mxu0 %v5129
    %5616 = vmatprep.subr.bf16.mxu0 %v5134
    %5617 = vmatpush1.bf16.msra.mxu0 %v5133
    %5618 = vmatprep.subr.bf16.mxu0 %v5138
    %5619 = vmatpush1.bf16.msra.mxu0 %v5137
    %5620 = vmatprep.subr.bf16.mxu0 %v5142
    %5621 = vmatpush1.bf16.msra.mxu0 %v5141
    %5622 = vmatprep.subr.bf16.mxu0 %v5146
    %5623 = vmatpush1.bf16.msra.mxu0 %v5145
    %5624 = vmatprep.subr.bf16.mxu0 %v5150
    %5625 = vmatpush1.bf16.msra.mxu0 %v5149
    %5626 = vmatprep.subr.bf16.mxu0 %v5154
    %5627 = vmatpush1.bf16.msra.mxu0 %v5153
    %5628 = vmatprep.subr.bf16.mxu0 %v5158
    %5629 = vmatpush1.bf16.msra.mxu0 %v5157
    %5630 = vmatprep.subr.bf16.mxu0 %v5162
    %5631 = vmatpush1.bf16.msra.mxu0 %v5161
    %5632 = vmatprep.subr.bf16.mxu0 %v5166
    %5633 = vmatpush1.bf16.msra.mxu0 %v5165
    %5634 = vmatprep.subr.bf16.mxu0 %v5170
    %5635 = vmatpush1.bf16.msra.mxu0 %v5169
    %5636 = vmatprep.subr.bf16.mxu0 %v5174
    %5637 = vmatpush1.bf16.msra.mxu0 %v5173
    %5638 = vmatprep.subr.bf16.mxu0 %v5178
    %5639 = vmatpush1.bf16.msra.mxu0 %v5177
    %5640 = vmatprep.mubr.bf16.mxu0 %v4002
    %5641 = vmatmul.mubr.bf16.gmra.mrb[0].mxu0 %v4001
    %v5642 = vpop.f32.mrb[0].mxu0
    %v5643 = vadd.f32 %v5600, %v5642
    %v5644 = vpop.f32.mrb[0].mxu0
    %v5645 = vadd.f32 %v5602, %v5644
    %v5646 = vpop.f32.mrb[0].mxu0
    %v5647 = vadd.f32 %v5604, %v5646
    %v5648 = vpop.f32.mrb[0].mxu0
    %v5649 = vadd.f32 %v5606, %v5648
    %5650 = vdwg.mxu0
    %5651 = vmatprep.subr.bf16.mxu0 %v5182
    %5652 = vmatpush1.bf16.msra.mxu0 %v5181
    %5653 = vmatprep.subr.bf16.mxu0 %v5186
    %5654 = vmatpush1.bf16.msra.mxu0 %v5185
    %5655 = vmatprep.subr.bf16.mxu0 %v5190
    %5656 = vmatpush1.bf16.msra.mxu0 %v5189
    %5657 = vmatprep.subr.bf16.mxu0 %v5194
    %5658 = vmatpush1.bf16.msra.mxu0 %v5193
    %5659 = vmatprep.subr.bf16.mxu0 %v5198
    %5660 = vmatpush1.bf16.msra.mxu0 %v5197
    %5661 = vmatprep.subr.bf16.mxu0 %v5202
    %5662 = vmatpush1.bf16.msra.mxu0 %v5201
    %5663 = vmatprep.subr.bf16.mxu0 %v5206
    %5664 = vmatpush1.bf16.msra.mxu0 %v5205
    %5665 = vmatprep.subr.bf16.mxu0 %v5210
    %5666 = vmatpush1.bf16.msra.mxu0 %v5209
    %5667 = vmatprep.subr.bf16.mxu0 %v5214
    %5668 = vmatpush1.bf16.msra.mxu0 %v5213
    %5669 = vmatprep.subr.bf16.mxu0 %v5218
    %5670 = vmatpush1.bf16.msra.mxu0 %v5217
    %5671 = vmatprep.subr.bf16.mxu0 %v5222
    %5672 = vmatpush1.bf16.msra.mxu0 %v5221
    %5673 = vmatprep.subr.bf16.mxu0 %v5226
    %5674 = vmatpush1.bf16.msra.mxu0 %v5225
    %5675 = vmatprep.subr.bf16.mxu0 %v5230
    %5676 = vmatpush1.bf16.msra.mxu0 %v5229
    %5677 = vmatprep.subr.bf16.mxu0 %v5234
    %5678 = vmatpush1.bf16.msra.mxu0 %v5233
    %5679 = vmatprep.subr.bf16.mxu0 %v5238
    %5680 = vmatpush1.bf16.msra.mxu0 %v5237
    %5681 = vmatprep.subr.bf16.mxu0 %v5242
    %5682 = vmatpush1.bf16.msra.mxu0 %v5241
    %5683 = vmatprep.mubr.bf16.mxu0 %v4004
    %5684 = vmatmul.mubr.bf16.gmra.mrb[0].mxu0 %v4003
    %v5685 = vpop.f32.mrb[0].mxu0
    %v5686 = vadd.f32 %v5643, %v5685
    %v5687 = vpop.f32.mrb[0].mxu0
    %v5688 = vadd.f32 %v5645, %v5687
    %v5689 = vpop.f32.mrb[0].mxu0
    %v5690 = vadd.f32 %v5647, %v5689
    %v5691 = vpop.f32.mrb[0].mxu0
    %v5692 = vadd.f32 %v5649, %v5691
    %5693 = vdwg.mxu0
    %5694 = vmatprep.subr.bf16.mxu0 %v5246
    %5695 = vmatpush1.bf16.msra.mxu0 %v5245
    %5696 = vmatprep.subr.bf16.mxu0 %v5250
    %5697 = vmatpush1.bf16.msra.mxu0 %v5249
    %5698 = vmatprep.subr.bf16.mxu0 %v5254
    %5699 = vmatpush1.bf16.msra.mxu0 %v5253
    %5700 = vmatprep.subr.bf16.mxu0 %v5258
    %5701 = vmatpush1.bf16.msra.mxu0 %v5257
    %5702 = vmatprep.subr.bf16.mxu0 %v5262
    %5703 = vmatpush1.bf16.msra.mxu0 %v5261
    %5704 = vmatprep.subr.bf16.mxu0 %v5266
    %5705 = vmatpush1.bf16.msra.mxu0 %v5265
    %5706 = vmatprep.subr.bf16.mxu0 %v5270
    %5707 = vmatpush1.bf16.msra.mxu0 %v5269
    %5708 = vmatprep.subr.bf16.mxu0 %v5274
    %5709 = vmatpush1.bf16.msra.mxu0 %v5273
    %5710 = vmatprep.subr.bf16.mxu0 %v5278
    %5711 = vmatpush1.bf16.msra.mxu0 %v5277
    %5712 = vmatprep.subr.bf16.mxu0 %v5282
    %5713 = vmatpush1.bf16.msra.mxu0 %v5281
    %5714 = vmatprep.subr.bf16.mxu0 %v5286
    %5715 = vmatpush1.bf16.msra.mxu0 %v5285
    %5716 = vmatprep.subr.bf16.mxu0 %v5290
    %5717 = vmatpush1.bf16.msra.mxu0 %v5289
    %5718 = vmatprep.subr.bf16.mxu0 %v5294
    %5719 = vmatpush1.bf16.msra.mxu0 %v5293
    %5720 = vmatprep.subr.bf16.mxu0 %v5298
    %5721 = vmatpush1.bf16.msra.mxu0 %v5297
    %5722 = vmatprep.subr.bf16.mxu0 %v5302
    %5723 = vmatpush1.bf16.msra.mxu0 %v5301
    %5724 = vmatprep.subr.bf16.mxu0 %v5306
    %5725 = vmatpush1.bf16.msra.mxu0 %v5305
    %5726 = vmatprep.mubr.bf16.mxu0 %v4006
    %5727 = vmatmul.mubr.bf16.gmra.mrb[0].mxu0 %v4005
    %v5728 = vpop.f32.mrb[0].mxu0
    %v5729 = vadd.f32 %v5686, %v5728
    %v5730 = vpop.f32.mrb[0].mxu0
    %v5731 = vadd.f32 %v5688, %v5730
    %v5732 = vpop.f32.mrb[0].mxu0
    %v5733 = vadd.f32 %v5690, %v5732
    %v5734 = vpop.f32.mrb[0].mxu0
    %v5735 = vadd.f32 %v5692, %v5734
    %5736 = vdwg.mxu0
    %5737 = vmatprep.subr.bf16.mxu0 %v5056
    %5738 = vmatpush1.bf16.msra.mxu0 %v5055
    %5739 = vmatprep.subr.bf16.mxu0 %v5060
    %5740 = vmatpush1.bf16.msra.mxu0 %v5059
    %5741 = vmatprep.subr.bf16.mxu0 %v5064
    %5742 = vmatpush1.bf16.msra.mxu0 %v5063
    %5743 = vmatprep.subr.bf16.mxu0 %v5068
    %5744 = vmatpush1.bf16.msra.mxu0 %v5067
    %5745 = vmatprep.subr.bf16.mxu0 %v5072
    %5746 = vmatpush1.bf16.msra.mxu0 %v5071
    %5747 = vmatprep.subr.bf16.mxu0 %v5076
    %5748 = vmatpush1.bf16.msra.mxu0 %v5075
    %5749 = vmatprep.subr.bf16.mxu0 %v5080
    %5750 = vmatpush1.bf16.msra.mxu0 %v5079
    %5751 = vmatprep.subr.bf16.mxu0 %v5084
    %5752 = vmatpush1.bf16.msra.mxu0 %v5083
    %5753 = vmatprep.subr.bf16.mxu0 %v5088
    %5754 = vmatpush1.bf16.msra.mxu0 %v5087
    %5755 = vmatprep.subr.bf16.mxu0 %v5092
    %5756 = vmatpush1.bf16.msra.mxu0 %v5091
    %5757 = vmatprep.subr.bf16.mxu0 %v5096
    %5758 = vmatpush1.bf16.msra.mxu0 %v5095
    %5759 = vmatprep.subr.bf16.mxu0 %v5100
    %5760 = vmatpush1.bf16.msra.mxu0 %v5099
    %5761 = vmatprep.subr.bf16.mxu0 %v5104
    %5762 = vmatpush1.bf16.msra.mxu0 %v5103
    %5763 = vmatprep.subr.bf16.mxu0 %v5108
    %5764 = vmatpush1.bf16.msra.mxu0 %v5107
    %5765 = vmatprep.subr.bf16.mxu0 %v5112
    %5766 = vmatpush1.bf16.msra.mxu0 %v5111
    %5767 = vmatprep.subr.bf16.mxu0 %v5116
    %5768 = vmatpush1.bf16.msra.mxu0 %v5115
    %5769 = vmatprep.mubr.bf16.mxu0 %v4000
    %5770 = vmatmul.mubr.bf16.gmra.mrb[0].mxu0 %v3999
    %v5771 = vpop.f32.mrb[0].mxu0
    %v5772 = vadd.f32 %v4276, %v5771
    %v5773 = vpop.f32.mrb[0].mxu0
    %v5774 = vadd.f32 %v4280, %v5773
    %v5775 = vpop.f32.mrb[0].mxu0
    %v5776 = vadd.f32 %v4276, %v5775
    %v5777 = vpop.f32.mrb[0].mxu0
    %v5778 = vadd.f32 %v4280, %v5777
    %5779 = vdwg.mxu0
    %5780 = vmatprep.subr.bf16.mxu0 %v5120
    %5781 = vmatpush1.bf16.msra.mxu0 %v5119
    %5782 = vmatprep.subr.bf16.mxu0 %v5124
    %5783 = vmatpush1.bf16.msra.mxu0 %v5123
    %5784 = vmatprep.subr.bf16.mxu0 %v5128
    %5785 = vmatpush1.bf16.msra.mxu0 %v5127
    %5786 = vmatprep.subr.bf16.mxu0 %v5132
    %5787 = vmatpush1.bf16.msra.mxu0 %v5131
    %5788 = vmatprep.subr.bf16.mxu0 %v5136
    %5789 = vmatpush1.bf16.msra.mxu0 %v5135
    %5790 = vmatprep.subr.bf16.mxu0 %v5140
    %5791 = vmatpush1.bf16.msra.mxu0 %v5139
    %5792 = vmatprep.subr.bf16.mxu0 %v5144
    %5793 = vmatpush1.bf16.msra.mxu0 %v5143
    %5794 = vmatprep.subr.bf16.mxu0 %v5148
    %5795 = vmatpush1.bf16.msra.mxu0 %v5147
    %5796 = vmatprep.subr.bf16.mxu0 %v5152
    %5797 = vmatpush1.bf16.msra.mxu0 %v5151
    %5798 = vmatprep.subr.bf16.mxu0 %v5156
    %5799 = vmatpush1.bf16.msra.mxu0 %v5155
    %5800 = vmatprep.subr.bf16.mxu0 %v5160
    %5801 = vmatpush1.bf16.msra.mxu0 %v5159
    %5802 = vmatprep.subr.bf16.mxu0 %v5164
    %5803 = vmatpush1.bf16.msra.mxu0 %v5163
    %5804 = vmatprep.subr.bf16.mxu0 %v5168
    %5805 = vmatpush1.bf16.msra.mxu0 %v5167
    %5806 = vmatprep.subr.bf16.mxu0 %v5172
    %5807 = vmatpush1.bf16.msra.mxu0 %v5171
    %5808 = vmatprep.subr.bf16.mxu0 %v5176
    %5809 = vmatpush1.bf16.msra.mxu0 %v5175
    %5810 = vmatprep.subr.bf16.mxu0 %v5180
    %5811 = vmatpush1.bf16.msra.mxu0 %v5179
    %5812 = vmatprep.mubr.bf16.mxu0 %v4002
    %5813 = vmatmul.mubr.bf16.gmra.mrb[0].mxu0 %v4001
    %v5814 = vpop.f32.mrb[0].mxu0
    %v5815 = vadd.f32 %v5772, %v5814
    %v5816 = vpop.f32.mrb[0].mxu0
    %v5817 = vadd.f32 %v5774, %v5816
    %v5818 = vpop.f32.mrb[0].mxu0
    %v5819 = vadd.f32 %v5776, %v5818
    %v5820 = vpop.f32.mrb[0].mxu0
    %v5821 = vadd.f32 %v5778, %v5820
    %5822 = vdwg.mxu0
    %5823 = vmatprep.subr.bf16.mxu0 %v5184
    %5824 = vmatpush1.bf16.msra.mxu0 %v5183
    %5825 = vmatprep.subr.bf16.mxu0 %v5188
    %5826 = vmatpush1.bf16.msra.mxu0 %v5187
    %5827 = vmatprep.subr.bf16.mxu0 %v5192
    %5828 = vmatpush1.bf16.msra.mxu0 %v5191
    %5829 = vmatprep.subr.bf16.mxu0 %v5196
    %5830 = vmatpush1.bf16.msra.mxu0 %v5195
    %5831 = vmatprep.subr.bf16.mxu0 %v5200
    %5832 = vmatpush1.bf16.msra.mxu0 %v5199
    %5833 = vmatprep.subr.bf16.mxu0 %v5204
    %5834 = vmatpush1.bf16.msra.mxu0 %v5203
    %5835 = vmatprep.subr.bf16.mxu0 %v5208
    %5836 = vmatpush1.bf16.msra.mxu0 %v5207
    %5837 = vmatprep.subr.bf16.mxu0 %v5212
    %5838 = vmatpush1.bf16.msra.mxu0 %v5211
    %5839 = vmatprep.subr.bf16.mxu0 %v5216
    %5840 = vmatpush1.bf16.msra.mxu0 %v5215
    %5841 = vmatprep.subr.bf16.mxu0 %v5220
    %5842 = vmatpush1.bf16.msra.mxu0 %v5219
    %5843 = vmatprep.subr.bf16.mxu0 %v5224
    %5844 = vmatpush1.bf16.msra.mxu0 %v5223
    %5845 = vmatprep.subr.bf16.mxu0 %v5228
    %5846 = vmatpush1.bf16.msra.mxu0 %v5227
    %5847 = vmatprep.subr.bf16.mxu0 %v5232
    %5848 = vmatpush1.bf16.msra.mxu0 %v5231
    %5849 = vmatprep.subr.bf16.mxu0 %v5236
    %5850 = vmatpush1.bf16.msra.mxu0 %v5235
    %5851 = vmatprep.subr.bf16.mxu0 %v5240
    %5852 = vmatpush1.bf16.msra.mxu0 %v5239
    %5853 = vmatprep.subr.bf16.mxu0 %v5244
    %5854 = vmatpush1.bf16.msra.mxu0 %v5243
    %5855 = vmatprep.mubr.bf16.mxu0 %v4004
    %5856 = vmatmul.mubr.bf16.gmra.mrb[0].mxu0 %v4003
    %v5857 = vpop.f32.mrb[0].mxu0
    %v5858 = vadd.f32 %v5815, %v5857
    %v5859 = vpop.f32.mrb[0].mxu0
    %v5860 = vadd.f32 %v5817, %v5859
    %v5861 = vpop.f32.mrb[0].mxu0
    %v5862 = vadd.f32 %v5819, %v5861
    %v5863 = vpop.f32.mrb[0].mxu0
    %v5864 = vadd.f32 %v5821, %v5863
    %5865 = vdwg.mxu0
    %5866 = vmatprep.subr.bf16.mxu0 %v5248
    %5867 = vmatpush1.bf16.msra.mxu0 %v5247
    %5868 = vmatprep.subr.bf16.mxu0 %v5252
    %5869 = vmatpush1.bf16.msra.mxu0 %v5251
    %5870 = vmatprep.subr.bf16.mxu0 %v5256
    %5871 = vmatpush1.bf16.msra.mxu0 %v5255
    %5872 = vmatprep.subr.bf16.mxu0 %v5260
    %5873 = vmatpush1.bf16.msra.mxu0 %v5259
    %5874 = vmatprep.subr.bf16.mxu0 %v5264
    %5875 = vmatpush1.bf16.msra.mxu0 %v5263
    %5876 = vmatprep.subr.bf16.mxu0 %v5268
    %5877 = vmatpush1.bf16.msra.mxu0 %v5267
    %5878 = vmatprep.subr.bf16.mxu0 %v5272
    %5879 = vmatpush1.bf16.msra.mxu0 %v5271
    %5880 = vmatprep.subr.bf16.mxu0 %v5276
    %5881 = vmatpush1.bf16.msra.mxu0 %v5275
    %5882 = vmatprep.subr.bf16.mxu0 %v5280
    %5883 = vmatpush1.bf16.msra.mxu0 %v5279
    %5884 = vmatprep.subr.bf16.mxu0 %v5284
    %5885 = vmatpush1.bf16.msra.mxu0 %v5283
    %5886 = vmatprep.subr.bf16.mxu0 %v5288
    %5887 = vmatpush1.bf16.msra.mxu0 %v5287
    %5888 = vmatprep.subr.bf16.mxu0 %v5292
    %5889 = vmatpush1.bf16.msra.mxu0 %v5291
    %5890 = vmatprep.subr.bf16.mxu0 %v5296
    %5891 = vmatpush1.bf16.msra.mxu0 %v5295
    %5892 = vmatprep.subr.bf16.mxu0 %v5300
    %5893 = vmatpush1.bf16.msra.mxu0 %v5299
    %5894 = vmatprep.subr.bf16.mxu0 %v5304
    %5895 = vmatpush1.bf16.msra.mxu0 %v5303
    %5896 = vmatprep.subr.bf16.mxu0 %v5308
    %5897 = vmatpush1.bf16.msra.mxu0 %v5307
    %5898 = vmatprep.mubr.bf16.mxu0 %v4006
    %5899 = vmatmul.mubr.bf16.gmra.mrb[0].mxu0 %v4005
    %v5900 = vpop.f32.mrb[0].mxu0
    %v5901 = vadd.f32 %v5858, %v5900
    %v5902 = vpop.f32.mrb[0].mxu0
    %v5903 = vadd.f32 %v5860, %v5902
    %v5904 = vpop.f32.mrb[0].mxu0
    %v5905 = vadd.f32 %v5862, %v5904
    %v5906 = vpop.f32.mrb[0].mxu0
    %v5907 = vadd.f32 %v5864, %v5906
    %5908 = vdwg.mxu0
    %v5909 = vmax.f32 %v5729, 0.0
    %v5910 = vmax.f32 %v5731, 0.0
    %v5911 = vmax.f32 %v5901, 0.0
    %v5912 = vmax.f32 %v5903, 0.0
    %v5913 = vmax.f32 %v5733, 0.0
    %v5914 = vmax.f32 %v5735, 0.0
    %v5915 = vmax.f32 %v5905, 0.0
    %v5916 = vmax.f32 %v5907, 0.0
    %v5917 = vpack.c.bf16 %v5913, %v5909
    %v5918 = vpack.c.bf16 %v5914, %v5910
    %v5919 = vpack.c.bf16 %v5915, %v5911
    %v5920 = vpack.c.bf16 %v5916, %v5912
    %v5921 = vld [vmem:[#allocation12] sm:$0xff]
    %v5922 = vld [vmem:[#allocation12 + $0x8] sm:$0xff]
    %v5923 = vld [vmem:[#allocation12 + $0x10] sm:$0xff]
    %v5924 = vld [vmem:[#allocation12 + $0x18] sm:$0xff]
    %v5925 = vld [vmem:[#allocation12 + $0x20] sm:$0xff]
    %v5926 = vld [vmem:[#allocation12 + $0x28] sm:$0xff]
    %v5927 = vld [vmem:[#allocation12 + $0x30] sm:$0xff]
    %v5928 = vld [vmem:[#allocation12 + $0x38] sm:$0xff]
    %v5929 = vld [vmem:[#allocation12 + $0x40] sm:$0xff]
    %v5930 = vld [vmem:[#allocation12 + $0x48] sm:$0xff]
    %v5931 = vld [vmem:[#allocation12 + $0x50] sm:$0xff]
    %v5932 = vld [vmem:[#allocation12 + $0x58] sm:$0xff]
    %v5933 = vld [vmem:[#allocation12 + $0x60] sm:$0xff]
    %v5934 = vld [vmem:[#allocation12 + $0x68] sm:$0xff]
    %v5935 = vld [vmem:[#allocation12 + $0x70] sm:$0xff]
    %v5936 = vld [vmem:[#allocation12 + $0x78] sm:$0xff]
    %v5937 = vld [vmem:[#allocation12 + $0x80] sm:$0xff]
    %v5938 = vld [vmem:[#allocation12 + $0x88] sm:$0xff]
    %v5939 = vld [vmem:[#allocation12 + $0x90] sm:$0xff]
    %v5940 = vld [vmem:[#allocation12 + $0x98] sm:$0xff]
    %v5941 = vld [vmem:[#allocation12 + $0xa0] sm:$0xff]
    %v5942 = vld [vmem:[#allocation12 + $0xa8] sm:$0xff]
    %v5943 = vld [vmem:[#allocation12 + $0xb0] sm:$0xff]
    %v5944 = vld [vmem:[#allocation12 + $0xb8] sm:$0xff]
    %v5945 = vld [vmem:[#allocation12 + $0xc0] sm:$0xff]
    %v5946 = vld [vmem:[#allocation12 + $0xc8] sm:$0xff]
    %v5947 = vld [vmem:[#allocation12 + $0xd0] sm:$0xff]
    %v5948 = vld [vmem:[#allocation12 + $0xd8] sm:$0xff]
    %v5949 = vld [vmem:[#allocation12 + $0xe0] sm:$0xff]
    %v5950 = vld [vmem:[#allocation12 + $0xe8] sm:$0xff]
    %v5951 = vld [vmem:[#allocation12 + $0xf0] sm:$0xff]
    %v5952 = vld [vmem:[#allocation12 + $0xf8] sm:$0xff]
    %v5953 = vld [vmem:[#allocation12 + $0x100] sm:$0xff]
    %v5954 = vld [vmem:[#allocation12 + $0x108] sm:$0xff]
    %v5955 = vld [vmem:[#allocation12 + $0x110] sm:$0xff]
    %v5956 = vld [vmem:[#allocation12 + $0x118] sm:$0xff]
    %v5957 = vld [vmem:[#allocation12 + $0x120] sm:$0xff]
    %v5958 = vld [vmem:[#allocation12 + $0x128] sm:$0xff]
    %v5959 = vld [vmem:[#allocation12 + $0x130] sm:$0xff]
    %v5960 = vld [vmem:[#allocation12 + $0x138] sm:$0xff]
    %v5961 = vld [vmem:[#allocation12 + $0x140] sm:$0xff]
    %v5962 = vld [vmem:[#allocation12 + $0x148] sm:$0xff]
    %v5963 = vld [vmem:[#allocation12 + $0x150] sm:$0xff]
    %v5964 = vld [vmem:[#allocation12 + $0x158] sm:$0xff]
    %v5965 = vld [vmem:[#allocation12 + $0x160] sm:$0xff]
    %v5966 = vld [vmem:[#allocation12 + $0x168] sm:$0xff]
    %v5967 = vld [vmem:[#allocation12 + $0x170] sm:$0xff]
    %v5968 = vld [vmem:[#allocation12 + $0x178] sm:$0xff]
    %v5969 = vld [vmem:[#allocation12 + $0x180] sm:$0xff]
    %v5970 = vld [vmem:[#allocation12 + $0x188] sm:$0xff]
    %v5971 = vld [vmem:[#allocation12 + $0x190] sm:$0xff]
    %v5972 = vld [vmem:[#allocation12 + $0x198] sm:$0xff]
    %v5973 = vld [vmem:[#allocation12 + $0x1a0] sm:$0xff]
    %v5974 = vld [vmem:[#allocation12 + $0x1a8] sm:$0xff]
    %v5975 = vld [vmem:[#allocation12 + $0x1b0] sm:$0xff]
    %v5976 = vld [vmem:[#allocation12 + $0x1b8] sm:$0xff]
    %v5977 = vld [vmem:[#allocation12 + $0x1c0] sm:$0xff]
    %v5978 = vld [vmem:[#allocation12 + $0x1c8] sm:$0xff]
    %v5979 = vld [vmem:[#allocation12 + $0x1d0] sm:$0xff]
    %v5980 = vld [vmem:[#allocation12 + $0x1d8] sm:$0xff]
    %v5981 = vld [vmem:[#allocation12 + $0x1e0] sm:$0xff]
    %v5982 = vld [vmem:[#allocation12 + $0x1e8] sm:$0xff]
    %v5983 = vld [vmem:[#allocation12 + $0x1f0] sm:$0xff]
    %v5984 = vld [vmem:[#allocation12 + $0x1f8] sm:$0xff]
    %v5985 = vld [vmem:[#allocation14] sm:$0x3]
    %v5987 = vlaneseq
    %v5988 = vshrl.u32 %v5987, 7
    %v5989 = vsub.s32 0, %v5988
    %v5990 = vrot.slane %v5985, %v5989
    %v5991 = vlaneseq
    %v5992 = vshrl.u32 %v5991, 7
    %v5993 = vsub.s32 1, %v5992
    %v5994 = vrot.slane %v5985, %v5993
    %v6061 = vunpack.c.l.b16 %v5921
    %v6062 = vunpack.c.h.b16 %v5921
    %v6063 = vunpack.c.l.b16 %v5922
    %v6064 = vunpack.c.h.b16 %v5922
    %v6065 = vunpack.c.l.b16 %v5923
    %v6066 = vunpack.c.h.b16 %v5923
    %v6067 = vunpack.c.l.b16 %v5924
    %v6068 = vunpack.c.h.b16 %v5924
    %v6069 = vunpack.c.l.b16 %v5925
    %v6070 = vunpack.c.h.b16 %v5925
    %v6071 = vunpack.c.l.b16 %v5926
    %v6072 = vunpack.c.h.b16 %v5926
    %v6073 = vunpack.c.l.b16 %v5927
    %v6074 = vunpack.c.h.b16 %v5927
    %v6075 = vunpack.c.l.b16 %v5928
    %v6076 = vunpack.c.h.b16 %v5928
    %v6077 = vunpack.c.l.b16 %v5929
    %v6078 = vunpack.c.h.b16 %v5929
    %v6079 = vunpack.c.l.b16 %v5930
    %v6080 = vunpack.c.h.b16 %v5930
    %v6081 = vunpack.c.l.b16 %v5931
    %v6082 = vunpack.c.h.b16 %v5931
    %v6083 = vunpack.c.l.b16 %v5932
    %v6084 = vunpack.c.h.b16 %v5932
    %v6085 = vunpack.c.l.b16 %v5933
    %v6086 = vunpack.c.h.b16 %v5933
    %v6087 = vunpack.c.l.b16 %v5934
    %v6088 = vunpack.c.h.b16 %v5934
    %v6089 = vunpack.c.l.b16 %v5935
    %v6090 = vunpack.c.h.b16 %v5935
    %v6091 = vunpack.c.l.b16 %v5936
    %v6092 = vunpack.c.h.b16 %v5936
    %v6093 = vunpack.c.l.b16 %v5937
    %v6094 = vunpack.c.h.b16 %v5937
    %v6095 = vunpack.c.l.b16 %v5938
    %v6096 = vunpack.c.h.b16 %v5938
    %v6097 = vunpack.c.l.b16 %v5939
    %v6098 = vunpack.c.h.b16 %v5939
    %v6099 = vunpack.c.l.b16 %v5940
    %v6100 = vunpack.c.h.b16 %v5940
    %v6101 = vunpack.c.l.b16 %v5941
    %v6102 = vunpack.c.h.b16 %v5941
    %v6103 = vunpack.c.l.b16 %v5942
    %v6104 = vunpack.c.h.b16 %v5942
    %v6105 = vunpack.c.l.b16 %v5943
    %v6106 = vunpack.c.h.b16 %v5943
    %v6107 = vunpack.c.l.b16 %v5944
    %v6108 = vunpack.c.h.b16 %v5944
    %v6109 = vunpack.c.l.b16 %v5945
    %v6110 = vunpack.c.h.b16 %v5945
    %v6111 = vunpack.c.l.b16 %v5946
    %v6112 = vunpack.c.h.b16 %v5946
    %v6113 = vunpack.c.l.b16 %v5947
    %v6114 = vunpack.c.h.b16 %v5947
    %v6115 = vunpack.c.l.b16 %v5948
    %v6116 = vunpack.c.h.b16 %v5948
    %v6117 = vunpack.c.l.b16 %v5949
    %v6118 = vunpack.c.h.b16 %v5949
    %v6119 = vunpack.c.l.b16 %v5950
    %v6120 = vunpack.c.h.b16 %v5950
    %v6121 = vunpack.c.l.b16 %v5951
    %v6122 = vunpack.c.h.b16 %v5951
    %v6123 = vunpack.c.l.b16 %v5952
    %v6124 = vunpack.c.h.b16 %v5952
    %v6125 = vunpack.c.l.b16 %v5953
    %v6126 = vunpack.c.h.b16 %v5953
    %v6127 = vunpack.c.l.b16 %v5954
    %v6128 = vunpack.c.h.b16 %v5954
    %v6129 = vunpack.c.l.b16 %v5955
    %v6130 = vunpack.c.h.b16 %v5955
    %v6131 = vunpack.c.l.b16 %v5956
    %v6132 = vunpack.c.h.b16 %v5956
    %v6133 = vunpack.c.l.b16 %v5957
    %v6134 = vunpack.c.h.b16 %v5957
    %v6135 = vunpack.c.l.b16 %v5958
    %v6136 = vunpack.c.h.b16 %v5958
    %v6137 = vunpack.c.l.b16 %v5959
    %v6138 = vunpack.c.h.b16 %v5959
    %v6139 = vunpack.c.l.b16 %v5960
    %v6140 = vunpack.c.h.b16 %v5960
    %v6141 = vunpack.c.l.b16 %v5961
    %v6142 = vunpack.c.h.b16 %v5961
    %v6143 = vunpack.c.l.b16 %v5962
    %v6144 = vunpack.c.h.b16 %v5962
    %v6145 = vunpack.c.l.b16 %v5963
    %v6146 = vunpack.c.h.b16 %v5963
    %v6147 = vunpack.c.l.b16 %v5964
    %v6148 = vunpack.c.h.b16 %v5964
    %v6149 = vunpack.c.l.b16 %v5965
    %v6150 = vunpack.c.h.b16 %v5965
    %v6151 = vunpack.c.l.b16 %v5966
    %v6152 = vunpack.c.h.b16 %v5966
    %v6153 = vunpack.c.l.b16 %v5967
    %v6154 = vunpack.c.h.b16 %v5967
    %v6155 = vunpack.c.l.b16 %v5968
    %v6156 = vunpack.c.h.b16 %v5968
    %v6157 = vunpack.c.l.b16 %v5969
    %v6158 = vunpack.c.h.b16 %v5969
    %v6159 = vunpack.c.l.b16 %v5970
    %v6160 = vunpack.c.h.b16 %v5970
    %v6161 = vunpack.c.l.b16 %v5971
    %v6162 = vunpack.c.h.b16 %v5971
    %v6163 = vunpack.c.l.b16 %v5972
    %v6164 = vunpack.c.h.b16 %v5972
    %v6165 = vunpack.c.l.b16 %v5973
    %v6166 = vunpack.c.h.b16 %v5973
    %v6167 = vunpack.c.l.b16 %v5974
    %v6168 = vunpack.c.h.b16 %v5974
    %v6169 = vunpack.c.l.b16 %v5975
    %v6170 = vunpack.c.h.b16 %v5975
    %v6171 = vunpack.c.l.b16 %v5976
    %v6172 = vunpack.c.h.b16 %v5976
    %v6173 = vunpack.c.l.b16 %v5977
    %v6174 = vunpack.c.h.b16 %v5977
    %v6175 = vunpack.c.l.b16 %v5978
    %v6176 = vunpack.c.h.b16 %v5978
    %v6177 = vunpack.c.l.b16 %v5979
    %v6178 = vunpack.c.h.b16 %v5979
    %v6179 = vunpack.c.l.b16 %v5980
    %v6180 = vunpack.c.h.b16 %v5980
    %v6181 = vunpack.c.l.b16 %v5981
    %v6182 = vunpack.c.h.b16 %v5981
    %v6183 = vunpack.c.l.b16 %v5982
    %v6184 = vunpack.c.h.b16 %v5982
    %v6185 = vunpack.c.l.b16 %v5983
    %v6186 = vunpack.c.h.b16 %v5983
    %v6187 = vunpack.c.l.b16 %v5984
    %v6188 = vunpack.c.h.b16 %v5984
    %v6189 = vpack.c.b16 %v6063, %v6061
    %v6190 = vpack.c.b16 %v6064, %v6062
    %v6191 = vpack.c.b16 %v6067, %v6065
    %v6192 = vpack.c.b16 %v6068, %v6066
    %v6193 = vpack.c.b16 %v6071, %v6069
    %v6194 = vpack.c.b16 %v6072, %v6070
    %v6195 = vpack.c.b16 %v6075, %v6073
    %v6196 = vpack.c.b16 %v6076, %v6074
    %v6197 = vpack.c.b16 %v6079, %v6077
    %v6198 = vpack.c.b16 %v6080, %v6078
    %v6199 = vpack.c.b16 %v6083, %v6081
    %v6200 = vpack.c.b16 %v6084, %v6082
    %v6201 = vpack.c.b16 %v6087, %v6085
    %v6202 = vpack.c.b16 %v6088, %v6086
    %v6203 = vpack.c.b16 %v6091, %v6089
    %v6204 = vpack.c.b16 %v6092, %v6090
    %v6205 = vpack.c.b16 %v6095, %v6093
    %v6206 = vpack.c.b16 %v6096, %v6094
    %v6207 = vpack.c.b16 %v6099, %v6097
    %v6208 = vpack.c.b16 %v6100, %v6098
    %v6209 = vpack.c.b16 %v6103, %v6101
    %v6210 = vpack.c.b16 %v6104, %v6102
    %v6211 = vpack.c.b16 %v6107, %v6105
    %v6212 = vpack.c.b16 %v6108, %v6106
    %v6213 = vpack.c.b16 %v6111, %v6109
    %v6214 = vpack.c.b16 %v6112, %v6110
    %v6215 = vpack.c.b16 %v6115, %v6113
    %v6216 = vpack.c.b16 %v6116, %v6114
    %v6217 = vpack.c.b16 %v6119, %v6117
    %v6218 = vpack.c.b16 %v6120, %v6118
    %v6219 = vpack.c.b16 %v6123, %v6121
    %v6220 = vpack.c.b16 %v6124, %v6122
    %v6221 = vpack.c.b16 %v6127, %v6125
    %v6222 = vpack.c.b16 %v6128, %v6126
    %v6223 = vpack.c.b16 %v6131, %v6129
    %v6224 = vpack.c.b16 %v6132, %v6130
    %v6225 = vpack.c.b16 %v6135, %v6133
    %v6226 = vpack.c.b16 %v6136, %v6134
    %v6227 = vpack.c.b16 %v6139, %v6137
    %v6228 = vpack.c.b16 %v6140, %v6138
    %v6229 = vpack.c.b16 %v6143, %v6141
    %v6230 = vpack.c.b16 %v6144, %v6142
    %v6231 = vpack.c.b16 %v6147, %v6145
    %v6232 = vpack.c.b16 %v6148, %v6146
    %v6233 = vpack.c.b16 %v6151, %v6149
    %v6234 = vpack.c.b16 %v6152, %v6150
    %v6235 = vpack.c.b16 %v6155, %v6153
    %v6236 = vpack.c.b16 %v6156, %v6154
    %v6237 = vpack.c.b16 %v6159, %v6157
    %v6238 = vpack.c.b16 %v6160, %v6158
    %v6239 = vpack.c.b16 %v6163, %v6161
    %v6240 = vpack.c.b16 %v6164, %v6162
    %v6241 = vpack.c.b16 %v6167, %v6165
    %v6242 = vpack.c.b16 %v6168, %v6166
    %v6243 = vpack.c.b16 %v6171, %v6169
    %v6244 = vpack.c.b16 %v6172, %v6170
    %v6245 = vpack.c.b16 %v6175, %v6173
    %v6246 = vpack.c.b16 %v6176, %v6174
    %v6247 = vpack.c.b16 %v6179, %v6177
    %v6248 = vpack.c.b16 %v6180, %v6178
    %v6249 = vpack.c.b16 %v6183, %v6181
    %v6250 = vpack.c.b16 %v6184, %v6182
    %v6251 = vpack.c.b16 %v6187, %v6185
    %v6252 = vpack.c.b16 %v6188, %v6186
    %6317 = vmatprep.subr.bf16.mxu0 %v6190
    %6318 = vmatpush1.bf16.msra.mxu0 %v6189
    %6319 = vmatprep.subr.bf16.mxu0 %v6192
    %6320 = vmatpush1.bf16.msra.mxu0 %v6191
    %6321 = vmatprep.subr.bf16.mxu0 %v6194
    %6322 = vmatpush1.bf16.msra.mxu0 %v6193
    %6323 = vmatprep.subr.bf16.mxu0 %v6196
    %6324 = vmatpush1.bf16.msra.mxu0 %v6195
    %6325 = vmatprep.subr.bf16.mxu0 %v6198
    %6326 = vmatpush1.bf16.msra.mxu0 %v6197
    %6327 = vmatprep.subr.bf16.mxu0 %v6200
    %6328 = vmatpush1.bf16.msra.mxu0 %v6199
    %6329 = vmatprep.subr.bf16.mxu0 %v6202
    %6330 = vmatpush1.bf16.msra.mxu0 %v6201
    %6331 = vmatprep.subr.bf16.mxu0 %v6204
    %6332 = vmatpush1.bf16.msra.mxu0 %v6203
    %6333 = vmatprep.subr.bf16.mxu0 %v6206
    %6334 = vmatpush1.bf16.msra.mxu0 %v6205
    %6335 = vmatprep.subr.bf16.mxu0 %v6208
    %6336 = vmatpush1.bf16.msra.mxu0 %v6207
    %6337 = vmatprep.subr.bf16.mxu0 %v6210
    %6338 = vmatpush1.bf16.msra.mxu0 %v6209
    %6339 = vmatprep.subr.bf16.mxu0 %v6212
    %6340 = vmatpush1.bf16.msra.mxu0 %v6211
    %6341 = vmatprep.subr.bf16.mxu0 %v6214
    %6342 = vmatpush1.bf16.msra.mxu0 %v6213
    %6343 = vmatprep.subr.bf16.mxu0 %v6216
    %6344 = vmatpush1.bf16.msra.mxu0 %v6215
    %6345 = vmatprep.subr.bf16.mxu0 %v6218
    %6346 = vmatpush1.bf16.msra.mxu0 %v6217
    %6347 = vmatprep.subr.bf16.mxu0 %v6220
    %6348 = vmatpush1.bf16.msra.mxu0 %v6219
    %6349 = vmatprep.mubr.bf16.mxu0 %v5918
    %6350 = vmatmul.mubr.bf16.gmra.mrb[0].mxu0 %v5917
    %v6351 = vpop.f32.mrb[0].mxu0
    %v6352 = vadd.f32 %v5990, %v6351
    %v6353 = vpop.f32.mrb[0].mxu0
    %v6354 = vadd.f32 %v5994, %v6353
    %v6355 = vpop.f32.mrb[0].mxu0
    %v6356 = vadd.f32 %v5990, %v6355
    %v6357 = vpop.f32.mrb[0].mxu0
    %v6358 = vadd.f32 %v5994, %v6357
    %6359 = vdwg.mxu0
    %6360 = vmatprep.subr.bf16.mxu0 %v6222
    %6361 = vmatpush1.bf16.msra.mxu0 %v6221
    %6362 = vmatprep.subr.bf16.mxu0 %v6224
    %6363 = vmatpush1.bf16.msra.mxu0 %v6223
    %6364 = vmatprep.subr.bf16.mxu0 %v6226
    %6365 = vmatpush1.bf16.msra.mxu0 %v6225
    %6366 = vmatprep.subr.bf16.mxu0 %v6228
    %6367 = vmatpush1.bf16.msra.mxu0 %v6227
    %6368 = vmatprep.subr.bf16.mxu0 %v6230
    %6369 = vmatpush1.bf16.msra.mxu0 %v6229
    %6370 = vmatprep.subr.bf16.mxu0 %v6232
    %6371 = vmatpush1.bf16.msra.mxu0 %v6231
    %6372 = vmatprep.subr.bf16.mxu0 %v6234
    %6373 = vmatpush1.bf16.msra.mxu0 %v6233
    %6374 = vmatprep.subr.bf16.mxu0 %v6236
    %6375 = vmatpush1.bf16.msra.mxu0 %v6235
    %6376 = vmatprep.subr.bf16.mxu0 %v6238
    %6377 = vmatpush1.bf16.msra.mxu0 %v6237
    %6378 = vmatprep.subr.bf16.mxu0 %v6240
    %6379 = vmatpush1.bf16.msra.mxu0 %v6239
    %6380 = vmatprep.subr.bf16.mxu0 %v6242
    %6381 = vmatpush1.bf16.msra.mxu0 %v6241
    %6382 = vmatprep.subr.bf16.mxu0 %v6244
    %6383 = vmatpush1.bf16.msra.mxu0 %v6243
    %6384 = vmatprep.subr.bf16.mxu0 %v6246
    %6385 = vmatpush1.bf16.msra.mxu0 %v6245
    %6386 = vmatprep.subr.bf16.mxu0 %v6248
    %6387 = vmatpush1.bf16.msra.mxu0 %v6247
    %6388 = vmatprep.subr.bf16.mxu0 %v6250
    %6389 = vmatpush1.bf16.msra.mxu0 %v6249
    %6390 = vmatprep.subr.bf16.mxu0 %v6252
    %6391 = vmatpush1.bf16.msra.mxu0 %v6251
    %6392 = vmatprep.mubr.bf16.mxu0 %v5920
    %6393 = vmatmul.mubr.bf16.gmra.mrb[0].mxu0 %v5919
    %v6394 = vpop.f32.mrb[0].mxu0
    %v6395 = vadd.f32 %v6352, %v6394
    %v6396 = vpop.f32.mrb[0].mxu0
    %v6397 = vadd.f32 %v6354, %v6396
    %v6398 = vpop.f32.mrb[0].mxu0
    %v6399 = vadd.f32 %v6356, %v6398
    %v6400 = vpop.f32.mrb[0].mxu0
    %v6401 = vadd.f32 %v6358, %v6400
    %6402 = vdwg.mxu0
    %v6403 = vmax.f32 %v6395, 0.0
    %v6404 = vmax.f32 %v6397, 0.0
    %v6405 = vmax.f32 %v6399, 0.0
    %v6406 = vmax.f32 %v6401, 0.0
    %v6407 = vld [vmem:[#allocation15] sm:$0x3]
    %v6409 = vlaneseq
    %v6410 = vshrl.u32 %v6409, 7
    %v6411 = vsub.s32 0, %v6410
    %v6412 = vrot.slane %v6407, %v6411
    %v6413 = vlaneseq
    %v6414 = vshrl.u32 %v6413, 7
    %v6415 = vsub.s32 1, %v6414
    %v6416 = vrot.slane %v6407, %v6415
    %v6419 = vmul.f32 %v6403, %v6412
    %v6420 = vmul.f32 %v6404, %v6416
    %v6421 = vmul.f32 %v6405, %v6412
    %v6422 = vmul.f32 %v6406, %v6416
    %v6423 = vadd.f32 %v6419, %v6420
    %6424 = vadd.xlane.f32.xlu0 %v6423
    %v6425 = vpop.xlane.xlu0 %6424
    %v6426 = vadd.f32 %v6421, %v6422
    %6427 = vadd.xlane.f32.xlu0 %v6426
    %v6428 = vpop.xlane.xlu0 %6427
    %v6429 = vld [vmem:[#allocation3] sm:$0x1]
    %v6431 = vlaneseq
    %v6432 = vshrl.u32 %v6431, 7
    %v6433 = vsub.s32 0, %v6432
    %v6434 = vrot.slane %v6429, %v6433
    %v6436 = vadd.f32 %v6425, %v6434
    %v6437 = vadd.f32 %v6428, %v6434
    %v6438 = vsub.f32 0.0, %v6436
    %v6439 = vsub.f32 0.0, %v6437
    %v6440 = vmul.f32 %v6438, 1.442695
    %v6441 = vpow.pop %v6440
    %v6442 = vmul.f32 %v6439, 1.442695
    %v6443 = vpow.pop %v6442
    %v6444 = vadd.f32 %v6441, 1.0
    %v6445 = vadd.f32 %v6443, 1.0
    %v6446 = vrcp.pop %v6444
    %v6447 = vrcp.pop %v6445
    %vm6448 = vcmask 7168
    %6449 = vst.msk [vmem:[%s9] sm:$0xff] %vm6448, %v6446
    %6450 = vst.msk [vmem:[%s9 + $0x8] sm:$0xff] %vm6448, %v6447
    // Predicated region
    $region70: #{tpu_custom_call.1} parent=1 // pred_check
      _
    $region71: #{tpu_custom_call.1} parent=1 // pred_check_branch
      %6452 = sbr.rel (0) target = $region73
    $region72: #{tpu_custom_call.1} parent=1 // pred_region
      _
    $region73: #{tpu_custom_call.1} parent=1 // pred_fallthru
      _
    // Predicated region
    $region74: #{tpu_custom_call.1} parent=1 // pred_check
      _
    $region75: #{tpu_custom_call.1} parent=1 // pred_check_branch
      %6454 = sbr.rel (0) target = $region77
    $region76: #{tpu_custom_call.1} parent=1 // pred_region
      _
    $region77: #{tpu_custom_call.1} parent=1 // pred_fallthru
      _
    %6455 = vsyncpa [#allocation5], 1
    %6456 = vsyncpa [#allocation7], 1
    %6457 = vsyncpa [#allocation10], 1
    %6458 = vsyncpa [#allocation13], 1
    %6459 = vsyncpa [#allocation16], 1

</llo_original>
